<compile_context>
chip_gen: v7x
topology: tpu7x:2x2x1
jax: 0.10.0
libtpu: 0.0.40
codegen_flags: <defaults>
</compile_context>

<pallas_src>
import functools

import jax
import jax.numpy as jnp
from jax.experimental import pallas as pl
from jax.experimental.pallas import tpu as pltpu

_BN_EPS = 1e-5
_VMEM_LIMIT = 32 * 1024 * 1024  # safe on v5e (16 MiB default) .. v7x (64 MiB phys)


# ----------------------------------------------------------------------------
# Kernel 1: tiled im2col-matmul conv (BN already folded into w, b) + ReLU
# ----------------------------------------------------------------------------
def _conv_relu_kernel(p_ref, w_ref, b_ref, o_ref):
    # MXU in bf16 (inputs pre-cast), accumulate + epilogue in f32.
    y = jnp.dot(p_ref[...], w_ref[...], preferred_element_type=jnp.float32)
    o_ref[...] = jnp.maximum(y + b_ref[...], 0.0).astype(o_ref.dtype)


def conv_relu(patches, w, b_row, out_dtype, *, tile_m=512):
    """patches: (M, K) bf16; w: (K, Cout) bf16 (BN-folded); b_row: (1, Cout) f32."""
    m, k = patches.shape
    cout = w.shape[1]
    tm = min(tile_m, m)                      # M here is always a multiple of 8
    grid = (pl.cdiv(m, tm),)
    return pl.pallas_call(
        _conv_relu_kernel,
        out_shape=jax.ShapeDtypeStruct((m, cout), out_dtype),
        grid_spec=pltpu.PrefetchScalarGridSpec(
            num_scalar_prefetch=0,
            grid=grid,
            in_specs=[pl.BlockSpec((tm, k), lambda i: (i, 0)),
                      pl.BlockSpec((k, cout), lambda i: (0, 0)),
                      pl.BlockSpec((1, cout), lambda i: (0, 0))],
            out_specs=pl.BlockSpec((tm, cout), lambda i: (i, 0))),
        compiler_params=pltpu.CompilerParams(
            dimension_semantics=("parallel",),
            vmem_limit_bytes=_VMEM_LIMIT),
    )(patches, w, b_row)


# ----------------------------------------------------------------------------
# Kernel 2: fused [input-projection -> LSTM recurrence -> fc+ReLU -> mu_head]
# ----------------------------------------------------------------------------
def _lstm_head_kernel(x_ref, wih_ref, whh_ref, b_ref,
                      wfc_ref, bfc_ref, wmu_ref, bmu_ref,
                      mu_ref, h_ref, c_ref,
                      h_all_sc,
                      *, batch, seq, hid):
    # (a) Input projection hoisted out of the recurrence: one (T*B, F)x(F, 4H)
    #     matmul instead of T tiny MXU-starved ones.
    gx = jnp.dot(x_ref[...], wih_ref[...],
                 preferred_element_type=jnp.float32) + b_ref[...]

    whh = whh_ref[...]
    h = jnp.zeros((batch, hid), jnp.float32)
    c = jnp.zeros((batch, hid), jnp.float32)

    # (b) Recurrence statically unrolled inside one kernel invocation: only
    #     the (B, H)x(H, 4H) recurrent matmul + EUP work per step, h/c stay
    #     on-chip, no per-step grid/pipeline overhead or HBM writebacks.
    for t in range(seq):
        g = gx[t * batch:(t + 1) * batch, :] + jnp.dot(
            h, whh, preferred_element_type=jnp.float32)
        i_g = jax.nn.sigmoid(g[:, 0:hid])            # gate order i, f, g, o
        f_g = jax.nn.sigmoid(g[:, hid:2 * hid])
        g_g = jnp.tanh(g[:, 2 * hid:3 * hid])
        o_g = jax.nn.sigmoid(g[:, 3 * hid:4 * hid])
        c = f_g * c + i_g * g_g
        h = o_g * jnp.tanh(c)
        h_all_sc[t * batch:(t + 1) * batch, :] = h

    h_ref[...] = h
    c_ref[...] = c

    # (c) Head fused as a post-loop epilogue over the whole sequence
    #     (better-shaped matmuls than per-step), single dense store of mu.
    # TODO(synk): nn.Dropout(p=0.1) is realized in inference mode (identity).
    hidden = jnp.maximum(
        jnp.dot(h_all_sc[...], wfc_ref[...],
                preferred_element_type=jnp.float32) + bfc_ref[...], 0.0)
    mu_ref[...] = jnp.dot(hidden, wmu_ref[...],
                          preferred_element_type=jnp.float32) + bmu_ref[...]


def lstm_head_forward(feats_tm, wih, whh, b_row, w_fc, b_fc_row, w_mu, b_mu_row,
                      *, batch, seq):
    """feats_tm: (T*B, F) f32, time-major rows (row = t*B + b)."""
    tb, feat = feats_tm.shape
    hid = whh.shape[0]
    dh = w_fc.shape[1]
    adim = w_mu.shape[1]
    kern = functools.partial(_lstm_head_kernel, batch=batch, seq=seq, hid=hid)
    full = lambda shape: pl.BlockSpec(shape, lambda t: (0, 0))
    return pl.pallas_call(
        kern,
        out_shape=(jax.ShapeDtypeStruct((tb, adim), jnp.float32),
                   jax.ShapeDtypeStruct((batch, hid), jnp.float32),
                   jax.ShapeDtypeStruct((batch, hid), jnp.float32)),
        grid_spec=pltpu.PrefetchScalarGridSpec(
            num_scalar_prefetch=0,
            grid=(1,),
            in_specs=[full((tb, feat)), full((feat, 4 * hid)),
                      full((hid, 4 * hid)), full((1, 4 * hid)),
                      full((hid, dh)), full((1, dh)),
                      full((dh, adim)), full((1, adim))],
            out_specs=[full((tb, adim)), full((batch, hid)),
                       full((batch, hid))],
            scratch_shapes=[pltpu.VMEM((tb, hid), jnp.float32)]),
        compiler_params=pltpu.CompilerParams(
            dimension_semantics=("arbitrary",),
            vmem_limit_bytes=_VMEM_LIMIT),
    )(feats_tm, wih, whh, b_row, w_fc, b_fc_row, w_mu, b_mu_row)


# ----------------------------------------------------------------------------
# Plain-JAX glue
# ----------------------------------------------------------------------------
def _im2col(x, kh, kw, stride, pad):
    """x: (N, H, W, C) -> (N*OH*OW, kh*kw*C); patch K-order = (kh, kw, cin)."""
    if pad:
        x = jnp.pad(x, ((0, 0), (pad, pad), (pad, pad), (0, 0)))
    n, hp, wp, c = x.shape
    oh = (hp - kh) // stride + 1
    ow = (wp - kw) // stride + 1
    cols = []
    for i in range(kh):
        for j in range(kw):
            cols.append(x[:, i:i + stride * (oh - 1) + 1:stride,
                          j:j + stride * (ow - 1) + 1:stride, :])
    p = jnp.concatenate(cols, axis=-1)            # (n, oh, ow, kh*kw*c)
    return p.reshape(n * oh * ow, kh * kw * c), oh, ow


def cnn_lstm_actor_forward(params, x):
    """x: (B, T, C, H, W) float32. Returns (mu, log_std, (h, c))."""
    B, T, C, H, W = x.shape
    # NCHW -> NHWC once (tiny), cast to bf16 for the conv MXU path.
    xr = x.reshape(B * T, C, H, W).transpose(0, 2, 3, 1).astype(jnp.bfloat16)

    # CNN block 1: Conv(C->32, k4, s2, p1) [+BN folded] + ReLU
    p, oh, ow = _im2col(xr, 4, 4, 2, 1)
    y = conv_relu(p, params['w1'], params['b1'], jnp.bfloat16)
    y = y.reshape(B * T, oh, ow, 32)

    # CNN block 2: Conv(32->64, k4, s2, p1) [+BN folded] + ReLU
    p, oh, ow = _im2col(y, 4, 4, 2, 1)
    y = conv_relu(p, params['w2'], params['b2'], jnp.bfloat16)
    y = y.reshape(B * T, oh, ow, 64)

    # CNN block 3: Conv(64->64, k3, s1, p0) [+BN folded] + ReLU, f32 out (LSTM)
    p, oh, ow = _im2col(y, 3, 3, 1, 0)
    y = conv_relu(p, params['w3'], params['b3'], jnp.float32)

    # NHWC flatten directly — the NCHW-flatten transpose is folded into the
    # W_ih row ordering. Only a tiny (B,T,F) -> time-major reorder remains.
    feats_tm = (y.reshape(B, T, oh * ow * 64)
                 .transpose(1, 0, 2)
                 .reshape(T * B, oh * ow * 64))

    # Fused LSTM (zero-init h/c, lstm_state=None path) + fc/ReLU/Dropout(eval)
    # + mu_head, all in one kernel.
    mu_flat, h, c = lstm_head_forward(
        feats_tm, params['wih'], params['whh'], params['b_lstm'],
        params['w_fc'], params['b_fc'], params['w_mu'], params['b_mu'],
        batch=B, seq=T)

    mu = mu_flat.reshape(T, B, -1).transpose(1, 0, 2)        # (B, T, A)
    log_std = jnp.broadcast_to(params['log_std'], mu.shape)
    return mu, log_std, (h[None], c[None])                    # (1, B, H) each


# ----------------------------------------------------------------------------
# Parameter init (matches shapes / init scheme of the module) + inference prep
# ----------------------------------------------------------------------------
def init_params(key, in_channels=3, action_dim=2, hidden_dim=64,
                lstm_hidden=32, feature_dim=256):
    ks = jax.random.split(key, 12)

    def kaiming(k, shape, fan_in):
        return (jax.random.normal(k, shape, jnp.float32)
                * jnp.sqrt(2.0 / fan_in))

    def bn(ch):
        return dict(g=jnp.ones((ch,), jnp.float32),
                    b=jnp.zeros((ch,), jnp.float32),
                    m=jnp.zeros((ch,), jnp.float32),
                    v=jnp.ones((ch,), jnp.float32))

    bn1, bn2, bn3 = bn(32), bn(64), bn(64)
    lk = 1.0 / jnp.sqrt(lstm_hidden)
    uni = lambda k, shape: jax.random.uniform(k, shape, jnp.float32, -lk, lk)

    return {
        # conv weights in im2col layout (kh*kw*cin, cout); K-order (kh,kw,cin)
        'w1': kaiming(ks[0], (4 * 4 * in_channels, 32), 4 * 4 * in_channels),
        'b1': jnp.zeros((32,), jnp.float32),
        'bn1': bn1,
        'w2': kaiming(ks[1], (4 * 4 * 32, 64), 4 * 4 * 32),
        'b2': jnp.zeros((64,), jnp.float32),
        'bn2': bn2,
        'w3': kaiming(ks[2], (3 * 3 * 64, 64), 3 * 3 * 64),
        'b3': jnp.zeros((64,), jnp.float32),
        'bn3': bn3,
        # LSTM (PyTorch default uniform(-1/sqrt(H), 1/sqrt(H))), gate order
        # i,f,g,o; W_ih rows stored in NHWC feature order.
        'wih': uni(ks[3], (feature_dim, 4 * lstm_hidden)),
        'whh': uni(ks[4], (lstm_hidden, 4 * lstm_hidden)),
        'b_lstm': uni(ks[5], (4 * lstm_hidden,)) + uni(ks[6], (4 * lstm_hidden,)),
        # fc + mu_head (kaiming, zero bias), stored pre-transposed (in, out)
        'w_fc': kaiming(ks[7], (lstm_hidden, hidden_dim), lstm_hidden),
        'b_fc': jnp.zeros((hidden_dim,), jnp.float32),
        'w_mu': kaiming(ks[8], (hidden_dim, action_dim), hidden_dim),
        'b_mu': jnp.zeros((action_dim,), jnp.float32),
        'log_std': jnp.zeros((action_dim,), jnp.float32),
    }


def prepare_inference_params(p):
    """One-time prep: fold BN(eval) into conv w/b, cast conv weights to bf16,
    reshape biases to (1, C) rows."""
    def fold(w, b, bnp):
        scale = bnp['g'] / jnp.sqrt(bnp['v'] + _BN_EPS)          # (Cout,)
        w_f = (w * scale[None, :]).astype(jnp.bfloat16)
        b_f = ((b - bnp['m']) * scale + bnp['b']).reshape(1, -1)
        return w_f, b_f

    w1, b1 = fold(p['w1'], p['b1'], p['bn1'])
    w2, b2 = fold(p['w2'], p['b2'], p['bn2'])
    w3, b3 = fold(p['w3'], p['b3'], p['bn3'])
    return {
        'w1': w1, 'b1': b1, 'w2': w2, 'b2': b2, 'w3': w3, 'b3': b3,
        'wih': p['wih'], 'whh': p['whh'],
        'b_lstm': p['b_lstm'].reshape(1, -1),
        'w_fc': p['w_fc'], 'b_fc': p['b_fc'].reshape(1, -1),
        'w_mu': p['w_mu'], 'b_mu': p['b_mu'].reshape(1, -1),
        'log_std': p['log_std'],
    }


if __name__ == "__main__":
    # Small config: B=2, T=8, C=3, H=W=16 -> conv stack gives 2x2x64 = 256 feats
    # (CNNLSTMActor(dummy_img_height=16, dummy_img_width=16, hidden_dim=64,
    #  lstm_hidden=32, action_dim=2) equivalent).
    B, T, C, H, W = 2, 8, 3, 16, 16
    action_dim, hidden_dim, lstm_hidden, feature_dim = 2, 64, 32, 256

    key = jax.random.PRNGKey(0)
    pkey, xkey = jax.random.split(key)
    raw = init_params(pkey, in_channels=C, action_dim=action_dim,
                      hidden_dim=hidden_dim, lstm_hidden=lstm_hidden,
                      feature_dim=feature_dim)
    params = prepare_inference_params(raw)
    x = jax.random.normal(xkey, (B, T, C, H, W), jnp.float32)

    fwd = jax.jit(functools.partial(cnn_lstm_actor_forward, params))
    mu, log_std, (h, c) = fwd(x)
    jax.block_until_ready((mu, log_std, h, c))

    assert mu.shape == (B, T, action_dim)
    assert log_std.shape == (B, T, action_dim)
    assert h.shape == (1, B, lstm_hidden) and c.shape == (1, B, lstm_hidden)
    assert bool(jnp.all(jnp.isfinite(mu))) and bool(jnp.all(jnp.isfinite(h)))
    print("KERNEL_OK")
</pallas_src>

<mosaic_0001>
module attributes {stable_mosaic.version = 11 : i64} {
  func.func @_conv_relu_kernel(%arg0: i32, %arg1: memref<512x48xbf16, #tpu.memory_space<vmem>>, %arg2: memref<48x32xbf16, #tpu.memory_space<vmem>>, %arg3: memref<1x32xf32, #tpu.memory_space<vmem>>, %arg4: memref<512x32xbf16, #tpu.memory_space<vmem>>) attributes {dimension_semantics = [#tpu.dimension_semantics<parallel>], iteration_bounds = array<i64: 2>, scalar_prefetch = 0 : i64, scratch_operands = 0 : i64, tpu.core_type = #tpu.core_type<tc>, window_params = [{transform_indices = @transform_0, window_bounds = array<i64: 512, 48>}, {pipeline_mode = #tpu.pipeline_mode<synchronous>, transform_indices = @transform_1, window_bounds = array<i64: 48, 32>}, {pipeline_mode = #tpu.pipeline_mode<synchronous>, transform_indices = @transform_2, window_bounds = array<i64: 1, 32>}, {transform_indices = @transform_3, window_bounds = array<i64: 512, 32>}]} {
    %c0 = arith.constant 0 : index
    %c0_0 = arith.constant 0 : index
    %0 = vector.load %arg1[%c0, %c0_0] : memref<512x48xbf16, #tpu.memory_space<vmem>>, vector<512x48xbf16>
    %c0_1 = arith.constant 0 : index
    %c0_2 = arith.constant 0 : index
    %1 = vector.load %arg2[%c0_1, %c0_2] : memref<48x32xbf16, #tpu.memory_space<vmem>>, vector<48x32xbf16>
    %cst = arith.constant dense<0.000000e+00> : vector<512x32xf32>
    %2 = tpu.matmul %0, %1, %cst {dimension_numbers = #tpu.dot_dimension_numbers<[1], [0], [0], [1], [0, 0, 1, 1], [], []>} : vector<512x48xbf16>, vector<48x32xbf16>, vector<512x32xf32> -> vector<512x32xf32>
    %c0_3 = arith.constant 0 : index
    %c0_4 = arith.constant 0 : index
    %3 = vector.load %arg3[%c0_3, %c0_4] : memref<1x32xf32, #tpu.memory_space<vmem>>, vector<1x32xf32>
    %4 = vector.broadcast %3 : vector<1x32xf32> to vector<512x32xf32>
    %5 = arith.addf %2, %4 : vector<512x32xf32>
    %cst_5 = arith.constant 0.000000e+00 : f32
    %6 = vector.broadcast %cst_5 : f32 to vector<512x32xf32>
    %7 = arith.maximumf %5, %6 : vector<512x32xf32>
    %8 = arith.truncf %7 : vector<512x32xf32> to vector<512x32xbf16>
    %c0_6 = arith.constant 0 : index
    %c0_7 = arith.constant 0 : index
    %9 = vector.load %arg4[%c0_6, %c0_7] : memref<512x32xbf16, #tpu.memory_space<vmem>>, vector<512x32xbf16>
    tpu.vector_store %arg4[%c0_6, %c0_7], %8 {strides = array<i32>} : memref<512x32xbf16, #tpu.memory_space<vmem>>, vector<512x32xbf16>,
    return
  }
  func.func @transform_0(%arg0: i32) -> (i32, i32) {
    %c0_i32 = arith.constant 0 : i32
    %c0_i32_0 = arith.constant 0 : i32
    return %arg0, %c0_i32 : i32, i32
  }
  func.func @transform_1(%arg0: i32) -> (i32, i32) {
    %c0_i32 = arith.constant 0 : i32
    %c0_i32_0 = arith.constant 0 : i32
    %c0_i32_1 = arith.constant 0 : i32
    return %c0_i32, %c0_i32_0 : i32, i32
  }
  func.func @transform_2(%arg0: i32) -> (i32, i32) {
    %c0_i32 = arith.constant 0 : i32
    %c0_i32_0 = arith.constant 0 : i32
    %c0_i32_1 = arith.constant 0 : i32
    return %c0_i32, %c0_i32_0 : i32, i32
  }
  func.func @transform_3(%arg0: i32) -> (i32, i32) {
    %c0_i32 = arith.constant 0 : i32
    %c0_i32_0 = arith.constant 0 : i32
    return %arg0, %c0_i32 : i32, i32
  }
}

module attributes {stable_mosaic.version = 11 : i64} {
  func.func @_conv_relu_kernel(%arg0: i32, %arg1: memref<256x512xbf16, #tpu.memory_space<vmem>>, %arg2: memref<512x64xbf16, #tpu.memory_space<vmem>>, %arg3: memref<1x64xf32, #tpu.memory_space<vmem>>, %arg4: memref<256x64xbf16, #tpu.memory_space<vmem>>) attributes {dimension_semantics = [#tpu.dimension_semantics<parallel>], iteration_bounds = array<i64: 1>, scalar_prefetch = 0 : i64, scratch_operands = 0 : i64, tpu.core_type = #tpu.core_type<tc>, window_params = [{transform_indices = @transform_0, window_bounds = array<i64: 256, 512>}, {pipeline_mode = #tpu.pipeline_mode<synchronous>, transform_indices = @transform_1, window_bounds = array<i64: 512, 64>}, {pipeline_mode = #tpu.pipeline_mode<synchronous>, transform_indices = @transform_2, window_bounds = array<i64: 1, 64>}, {transform_indices = @transform_3, window_bounds = array<i64: 256, 64>}]} {
    %c0 = arith.constant 0 : index
    %c0_0 = arith.constant 0 : index
    %0 = vector.load %arg1[%c0, %c0_0] : memref<256x512xbf16, #tpu.memory_space<vmem>>, vector<256x512xbf16>
    %c0_1 = arith.constant 0 : index
    %c0_2 = arith.constant 0 : index
    %1 = vector.load %arg2[%c0_1, %c0_2] : memref<512x64xbf16, #tpu.memory_space<vmem>>, vector<512x64xbf16>
    %cst = arith.constant dense<0.000000e+00> : vector<256x64xf32>
    %2 = tpu.matmul %0, %1, %cst {dimension_numbers = #tpu.dot_dimension_numbers<[1], [0], [0], [1], [0, 0, 1, 1], [], []>} : vector<256x512xbf16>, vector<512x64xbf16>, vector<256x64xf32> -> vector<256x64xf32>
    %c0_3 = arith.constant 0 : index
    %c0_4 = arith.constant 0 : index
    %3 = vector.load %arg3[%c0_3, %c0_4] : memref<1x64xf32, #tpu.memory_space<vmem>>, vector<1x64xf32>
    %4 = vector.broadcast %3 : vector<1x64xf32> to vector<256x64xf32>
    %5 = arith.addf %2, %4 : vector<256x64xf32>
    %cst_5 = arith.constant 0.000000e+00 : f32
    %6 = vector.broadcast %cst_5 : f32 to vector<256x64xf32>
    %7 = arith.maximumf %5, %6 : vector<256x64xf32>
    %8 = arith.truncf %7 : vector<256x64xf32> to vector<256x64xbf16>
    %c0_6 = arith.constant 0 : index
    %c0_7 = arith.constant 0 : index
    %9 = vector.load %arg4[%c0_6, %c0_7] : memref<256x64xbf16, #tpu.memory_space<vmem>>, vector<256x64xbf16>
    tpu.vector_store %arg4[%c0_6, %c0_7], %8 {strides = array<i32>} : memref<256x64xbf16, #tpu.memory_space<vmem>>, vector<256x64xbf16>,
    return
  }
  func.func @transform_0(%arg0: i32) -> (i32, i32) {
    %c0_i32 = arith.constant 0 : i32
    %c0_i32_0 = arith.constant 0 : i32
    return %arg0, %c0_i32 : i32, i32
  }
  func.func @transform_1(%arg0: i32) -> (i32, i32) {
    %c0_i32 = arith.constant 0 : i32
    %c0_i32_0 = arith.constant 0 : i32
    %c0_i32_1 = arith.constant 0 : i32
    return %c0_i32, %c0_i32_0 : i32, i32
  }
  func.func @transform_2(%arg0: i32) -> (i32, i32) {
    %c0_i32 = arith.constant 0 : i32
    %c0_i32_0 = arith.constant 0 : i32
    %c0_i32_1 = arith.constant 0 : i32
    return %c0_i32, %c0_i32_0 : i32, i32
  }
  func.func @transform_3(%arg0: i32) -> (i32, i32) {
    %c0_i32 = arith.constant 0 : i32
    %c0_i32_0 = arith.constant 0 : i32
    return %arg0, %c0_i32 : i32, i32
  }
}

module attributes {stable_mosaic.version = 11 : i64} {
  func.func @_conv_relu_kernel(%arg0: i32, %arg1: memref<64x576xbf16, #tpu.memory_space<vmem>>, %arg2: memref<576x64xbf16, #tpu.memory_space<vmem>>, %arg3: memref<1x64xf32, #tpu.memory_space<vmem>>, %arg4: memref<64x64xf32, #tpu.memory_space<vmem>>) attributes {dimension_semantics = [#tpu.dimension_semantics<parallel>], iteration_bounds = array<i64: 1>, scalar_prefetch = 0 : i64, scratch_operands = 0 : i64, tpu.core_type = #tpu.core_type<tc>, window_params = [{transform_indices = @transform_0, window_bounds = array<i64: 64, 576>}, {pipeline_mode = #tpu.pipeline_mode<synchronous>, transform_indices = @transform_1, window_bounds = array<i64: 576, 64>}, {pipeline_mode = #tpu.pipeline_mode<synchronous>, transform_indices = @transform_2, window_bounds = array<i64: 1, 64>}, {transform_indices = @transform_3, window_bounds = array<i64: 64, 64>}]} {
    %c0 = arith.constant 0 : index
    %c0_0 = arith.constant 0 : index
    %0 = vector.load %arg1[%c0, %c0_0] : memref<64x576xbf16, #tpu.memory_space<vmem>>, vector<64x576xbf16>
    %c0_1 = arith.constant 0 : index
    %c0_2 = arith.constant 0 : index
    %1 = vector.load %arg2[%c0_1, %c0_2] : memref<576x64xbf16, #tpu.memory_space<vmem>>, vector<576x64xbf16>
    %cst = arith.constant dense<0.000000e+00> : vector<64x64xf32>
    %2 = tpu.matmul %0, %1, %cst {dimension_numbers = #tpu.dot_dimension_numbers<[1], [0], [0], [1], [0, 0, 1, 1], [], []>} : vector<64x576xbf16>, vector<576x64xbf16>, vector<64x64xf32> -> vector<64x64xf32>
    %c0_3 = arith.constant 0 : index
    %c0_4 = arith.constant 0 : index
    %3 = vector.load %arg3[%c0_3, %c0_4] : memref<1x64xf32, #tpu.memory_space<vmem>>, vector<1x64xf32>
    %4 = vector.broadcast %3 : vector<1x64xf32> to vector<64x64xf32>
    %5 = arith.addf %2, %4 : vector<64x64xf32>
    %cst_5 = arith.constant 0.000000e+00 : f32
    %6 = vector.broadcast %cst_5 : f32 to vector<64x64xf32>
    %7 = arith.maximumf %5, %6 : vector<64x64xf32>
    %c0_6 = arith.constant 0 : index
    %c0_7 = arith.constant 0 : index
    %8 = vector.load %arg4[%c0_6, %c0_7] : memref<64x64xf32, #tpu.memory_space<vmem>>, vector<64x64xf32>
    tpu.vector_store %arg4[%c0_6, %c0_7], %7 {strides = array<i32>} : memref<64x64xf32, #tpu.memory_space<vmem>>, vector<64x64xf32>,
    return
  }
  func.func @transform_0(%arg0: i32) -> (i32, i32) {
    %c0_i32 = arith.constant 0 : i32
    %c0_i32_0 = arith.constant 0 : i32
    return %arg0, %c0_i32 : i32, i32
  }
  func.func @transform_1(%arg0: i32) -> (i32, i32) {
    %c0_i32 = arith.constant 0 : i32
    %c0_i32_0 = arith.constant 0 : i32
    %c0_i32_1 = arith.constant 0 : i32
    return %c0_i32, %c0_i32_0 : i32, i32
  }
  func.func @transform_2(%arg0: i32) -> (i32, i32) {
    %c0_i32 = arith.constant 0 : i32
    %c0_i32_0 = arith.constant 0 : i32
    %c0_i32_1 = arith.constant 0 : i32
    return %c0_i32, %c0_i32_0 : i32, i32
  }
  func.func @transform_3(%arg0: i32) -> (i32, i32) {
    %c0_i32 = arith.constant 0 : i32
    %c0_i32_0 = arith.constant 0 : i32
    return %arg0, %c0_i32 : i32, i32
  }
}

module attributes {stable_mosaic.version = 11 : i64} {
  func.func @_lstm_head_kernel(%arg0: i32, %arg1: memref<16x256xf32, #tpu.memory_space<vmem>>, %arg2: memref<256x128xf32, #tpu.memory_space<vmem>>, %arg3: memref<32x128xf32, #tpu.memory_space<vmem>>, %arg4: memref<1x128xf32, #tpu.memory_space<vmem>>, %arg5: memref<32x64xf32, #tpu.memory_space<vmem>>, %arg6: memref<1x64xf32, #tpu.memory_space<vmem>>, %arg7: memref<64x2xf32, #tpu.memory_space<vmem>>, %arg8: memref<1x2xf32, #tpu.memory_space<vmem>>, %arg9: memref<16x2xf32, #tpu.memory_space<vmem>>, %arg10: memref<2x32xf32, #tpu.memory_space<vmem>>, %arg11: memref<2x32xf32, #tpu.memory_space<vmem>>, %arg12: memref<16x32xf32, #tpu.memory_space<vmem>>) attributes {dimension_semantics = [#tpu.dimension_semantics<arbitrary>], iteration_bounds = array<i64: 1>, scalar_prefetch = 0 : i64, scratch_operands = 1 : i64, tpu.core_type = #tpu.core_type<tc>, window_params = [{pipeline_mode = #tpu.pipeline_mode<synchronous>, transform_indices = @transform_0, window_bounds = array<i64: 16, 256>}, {pipeline_mode = #tpu.pipeline_mode<synchronous>, transform_indices = @transform_1, window_bounds = array<i64: 256, 128>}, {pipeline_mode = #tpu.pipeline_mode<synchronous>, transform_indices = @transform_2, window_bounds = array<i64: 32, 128>}, {pipeline_mode = #tpu.pipeline_mode<synchronous>, transform_indices = @transform_3, window_bounds = array<i64: 1, 128>}, {pipeline_mode = #tpu.pipeline_mode<synchronous>, transform_indices = @transform_4, window_bounds = array<i64: 32, 64>}, {pipeline_mode = #tpu.pipeline_mode<synchronous>, transform_indices = @transform_5, window_bounds = array<i64: 1, 64>}, {pipeline_mode = #tpu.pipeline_mode<synchronous>, transform_indices = @transform_6, window_bounds = array<i64: 64, 2>}, {pipeline_mode = #tpu.pipeline_mode<synchronous>, transform_indices = @transform_7, window_bounds = array<i64: 1, 2>}, {pipeline_mode = #tpu.pipeline_mode<synchronous>, transform_indices = @transform_8, window_bounds = array<i64: 16, 2>}, {pipeline_mode = #tpu.pipeline_mode<synchronous>, transform_indices = @transform_9, window_bounds = array<i64: 2, 32>}, {pipeline_mode = #tpu.pipeline_mode<synchronous>, transform_indices = @transform_10, window_bounds = array<i64: 2, 32>}]} {
    %c0 = arith.constant 0 : index
    %c0_0 = arith.constant 0 : index
    %0 = vector.load %arg1[%c0, %c0_0] : memref<16x256xf32, #tpu.memory_space<vmem>>, vector<16x256xf32>
    %c0_1 = arith.constant 0 : index
    %c0_2 = arith.constant 0 : index
    %1 = vector.load %arg2[%c0_1, %c0_2] : memref<256x128xf32, #tpu.memory_space<vmem>>, vector<256x128xf32>
    %cst = arith.constant dense<0.000000e+00> : vector<16x128xf32>
    %2 = tpu.matmul %0, %1, %cst {dimension_numbers = #tpu.dot_dimension_numbers<[1], [0], [0], [1], [0, 0, 1, 1], [], []>} : vector<16x256xf32>, vector<256x128xf32>, vector<16x128xf32> -> vector<16x128xf32>
    %c0_3 = arith.constant 0 : index
    %c0_4 = arith.constant 0 : index
    %3 = vector.load %arg4[%c0_3, %c0_4] : memref<1x128xf32, #tpu.memory_space<vmem>>, vector<1x128xf32>
    %4 = vector.broadcast %3 : vector<1x128xf32> to vector<16x128xf32>
    %5 = arith.addf %2, %4 : vector<16x128xf32>
    %c0_5 = arith.constant 0 : index
    %c0_6 = arith.constant 0 : index
    %6 = vector.load %arg3[%c0_5, %c0_6] : memref<32x128xf32, #tpu.memory_space<vmem>>, vector<32x128xf32>
    %cst_7 = arith.constant 0.000000e+00 : f32
    %7 = vector.broadcast %cst_7 : f32 to vector<2x32xf32>
    %cst_8 = arith.constant 0.000000e+00 : f32
    %8 = vector.broadcast %cst_8 : f32 to vector<2x32xf32>
    %9 = vector.extract_strided_slice %5 {offsets = [0, 0], sizes = [2, 128], strides = [1, 1]} : vector<16x128xf32> to vector<2x128xf32>
    %cst_9 = arith.constant dense<0.000000e+00> : vector<2x128xf32>
    %10 = tpu.matmul %7, %6, %cst_9 {dimension_numbers = #tpu.dot_dimension_numbers<[1], [0], [0], [1], [0, 0, 1, 1], [], []>} : vector<2x32xf32>, vector<32x128xf32>, vector<2x128xf32> -> vector<2x128xf32>
    %11 = arith.addf %9, %10 : vector<2x128xf32>
    %12 = vector.extract_strided_slice %11 {offsets = [0, 0], sizes = [2, 32], strides = [1, 1]} : vector<2x128xf32> to vector<2x32xf32>
    %13 = arith.negf %12 : vector<2x32xf32>
    %14 = math.exp %13 : vector<2x32xf32>
    %cst_10 = arith.constant 1.000000e+00 : f32
    %15 = vector.broadcast %cst_10 : f32 to vector<2x32xf32>
    %16 = arith.addf %15, %14 : vector<2x32xf32>
    %17 = arith.divf %15, %16 : vector<2x32xf32>
    %18 = vector.extract_strided_slice %11 {offsets = [0, 32], sizes = [2, 32], strides = [1, 1]} : vector<2x128xf32> to vector<2x32xf32>
    %19 = arith.negf %18 : vector<2x32xf32>
    %20 = math.exp %19 : vector<2x32xf32>
    %cst_11 = arith.constant 1.000000e+00 : f32
    %21 = vector.broadcast %cst_11 : f32 to vector<2x32xf32>
    %22 = arith.addf %21, %20 : vector<2x32xf32>
    %23 = arith.divf %21, %22 : vector<2x32xf32>
    %24 = vector.extract_strided_slice %11 {offsets = [0, 64], sizes = [2, 32], strides = [1, 1]} : vector<2x128xf32> to vector<2x32xf32>
    %25 = math.tanh %24 : vector<2x32xf32>
    %26 = vector.extract_strided_slice %11 {offsets = [0, 96], sizes = [2, 32], strides = [1, 1]} : vector<2x128xf32> to vector<2x32xf32>
    %27 = arith.negf %26 : vector<2x32xf32>
    %28 = math.exp %27 : vector<2x32xf32>
    %cst_12 = arith.constant 1.000000e+00 : f32
    %29 = vector.broadcast %cst_12 : f32 to vector<2x32xf32>
    %30 = arith.addf %29, %28 : vector<2x32xf32>
    %31 = arith.divf %29, %30 : vector<2x32xf32>
    %32 = arith.mulf %23, %8 : vector<2x32xf32>
    %33 = arith.mulf %17, %25 : vector<2x32xf32>
    %34 = arith.addf %32, %33 : vector<2x32xf32>
    %35 = math.tanh %34 : vector<2x32xf32>
    %36 = arith.mulf %31, %35 : vector<2x32xf32>
    %c0_13 = arith.constant 0 : index
    %c0_14 = arith.constant 0 : index
    %37 = vector.load %arg12[%c0_13, %c0_14] : memref<16x32xf32, #tpu.memory_space<vmem>>, vector<2x32xf32>
    tpu.vector_store %arg12[%c0_13, %c0_14], %36 {strides = array<i32>} : memref<16x32xf32, #tpu.memory_space<vmem>>, vector<2x32xf32>,
    %38 = vector.extract_strided_slice %5 {offsets = [2, 0], sizes = [2, 128], strides = [1, 1]} : vector<16x128xf32> to vector<2x128xf32>
    %cst_15 = arith.constant dense<0.000000e+00> : vector<2x128xf32>
    %39 = tpu.matmul %36, %6, %cst_15 {dimension_numbers = #tpu.dot_dimension_numbers<[1], [0], [0], [1], [0, 0, 1, 1], [], []>} : vector<2x32xf32>, vector<32x128xf32>, vector<2x128xf32> -> vector<2x128xf32>
    %40 = arith.addf %38, %39 : vector<2x128xf32>
    %41 = vector.extract_strided_slice %40 {offsets = [0, 0], sizes = [2, 32], strides = [1, 1]} : vector<2x128xf32> to vector<2x32xf32>
    %42 = arith.negf %41 : vector<2x32xf32>
    %43 = math.exp %42 : vector<2x32xf32>
    %cst_16 = arith.constant 1.000000e+00 : f32
    %44 = vector.broadcast %cst_16 : f32 to vector<2x32xf32>
    %45 = arith.addf %44, %43 : vector<2x32xf32>
    %46 = arith.divf %44, %45 : vector<2x32xf32>
    %47 = vector.extract_strided_slice %40 {offsets = [0, 32], sizes = [2, 32], strides = [1, 1]} : vector<2x128xf32> to vector<2x32xf32>
    %48 = arith.negf %47 : vector<2x32xf32>
    %49 = math.exp %48 : vector<2x32xf32>
    %cst_17 = arith.constant 1.000000e+00 : f32
    %50 = vector.broadcast %cst_17 : f32 to vector<2x32xf32>
    %51 = arith.addf %50, %49 : vector<2x32xf32>
    %52 = arith.divf %50, %51 : vector<2x32xf32>
    %53 = vector.extract_strided_slice %40 {offsets = [0, 64], sizes = [2, 32], strides = [1, 1]} : vector<2x128xf32> to vector<2x32xf32>
    %54 = math.tanh %53 : vector<2x32xf32>
    %55 = vector.extract_strided_slice %40 {offsets = [0, 96], sizes = [2, 32], strides = [1, 1]} : vector<2x128xf32> to vector<2x32xf32>
    %56 = arith.negf %55 : vector<2x32xf32>
    %57 = math.exp %56 : vector<2x32xf32>
    %cst_18 = arith.constant 1.000000e+00 : f32
    %58 = vector.broadcast %cst_18 : f32 to vector<2x32xf32>
    %59 = arith.addf %58, %57 : vector<2x32xf32>
    %60 = arith.divf %58, %59 : vector<2x32xf32>
    %61 = arith.mulf %52, %34 : vector<2x32xf32>
    %62 = arith.mulf %46, %54 : vector<2x32xf32>
    %63 = arith.addf %61, %62 : vector<2x32xf32>
    %64 = math.tanh %63 : vector<2x32xf32>
    %65 = arith.mulf %60, %64 : vector<2x32xf32>
    %c2 = arith.constant 2 : index
    %c0_19 = arith.constant 0 : index
    %66 = vector.load %arg12[%c2, %c0_19] : memref<16x32xf32, #tpu.memory_space<vmem>>, vector<2x32xf32>
    tpu.vector_store %arg12[%c2, %c0_19], %65 {strides = array<i32>} : memref<16x32xf32, #tpu.memory_space<vmem>>, vector<2x32xf32>,
    %67 = vector.extract_strided_slice %5 {offsets = [4, 0], sizes = [2, 128], strides = [1, 1]} : vector<16x128xf32> to vector<2x128xf32>
    %cst_20 = arith.constant dense<0.000000e+00> : vector<2x128xf32>
    %68 = tpu.matmul %65, %6, %cst_20 {dimension_numbers = #tpu.dot_dimension_numbers<[1], [0], [0], [1], [0, 0, 1, 1], [], []>} : vector<2x32xf32>, vector<32x128xf32>, vector<2x128xf32> -> vector<2x128xf32>
    %69 = arith.addf %67, %68 : vector<2x128xf32>
    %70 = vector.extract_strided_slice %69 {offsets = [0, 0], sizes = [2, 32], strides = [1, 1]} : vector<2x128xf32> to vector<2x32xf32>
    %71 = arith.negf %70 : vector<2x32xf32>
    %72 = math.exp %71 : vector<2x32xf32>
    %cst_21 = arith.constant 1.000000e+00 : f32
    %73 = vector.broadcast %cst_21 : f32 to vector<2x32xf32>
    %74 = arith.addf %73, %72 : vector<2x32xf32>
    %75 = arith.divf %73, %74 : vector<2x32xf32>
    %76 = vector.extract_strided_slice %69 {offsets = [0, 32], sizes = [2, 32], strides = [1, 1]} : vector<2x128xf32> to vector<2x32xf32>
    %77 = arith.negf %76 : vector<2x32xf32>
    %78 = math.exp %77 : vector<2x32xf32>
    %cst_22 = arith.constant 1.000000e+00 : f32
    %79 = vector.broadcast %cst_22 : f32 to vector<2x32xf32>
    %80 = arith.addf %79, %78 : vector<2x32xf32>
    %81 = arith.divf %79, %80 : vector<2x32xf32>
    %82 = vector.extract_strided_slice %69 {offsets = [0, 64], sizes = [2, 32], strides = [1, 1]} : vector<2x128xf32> to vector<2x32xf32>
    %83 = math.tanh %82 : vector<2x32xf32>
    %84 = vector.extract_strided_slice %69 {offsets = [0, 96], sizes = [2, 32], strides = [1, 1]} : vector<2x128xf32> to vector<2x32xf32>
    %85 = arith.negf %84 : vector<2x32xf32>
    %86 = math.exp %85 : vector<2x32xf32>
    %cst_23 = arith.constant 1.000000e+00 : f32
    %87 = vector.broadcast %cst_23 : f32 to vector<2x32xf32>
    %88 = arith.addf %87, %86 : vector<2x32xf32>
    %89 = arith.divf %87, %88 : vector<2x32xf32>
    %90 = arith.mulf %81, %63 : vector<2x32xf32>
    %91 = arith.mulf %75, %83 : vector<2x32xf32>
    %92 = arith.addf %90, %91 : vector<2x32xf32>
    %93 = math.tanh %92 : vector<2x32xf32>
    %94 = arith.mulf %89, %93 : vector<2x32xf32>
    %c4 = arith.constant 4 : index
    %c0_24 = arith.constant 0 : index
    %95 = vector.load %arg12[%c4, %c0_24] : memref<16x32xf32, #tpu.memory_space<vmem>>, vector<2x32xf32>
    tpu.vector_store %arg12[%c4, %c0_24], %94 {strides = array<i32>} : memref<16x32xf32, #tpu.memory_space<vmem>>, vector<2x32xf32>,
    %96 = vector.extract_strided_slice %5 {offsets = [6, 0], sizes = [2, 128], strides = [1, 1]} : vector<16x128xf32> to vector<2x128xf32>
    %cst_25 = arith.constant dense<0.000000e+00> : vector<2x128xf32>
    %97 = tpu.matmul %94, %6, %cst_25 {dimension_numbers = #tpu.dot_dimension_numbers<[1], [0], [0], [1], [0, 0, 1, 1], [], []>} : vector<2x32xf32>, vector<32x128xf32>, vector<2x128xf32> -> vector<2x128xf32>
    %98 = arith.addf %96, %97 : vector<2x128xf32>
    %99 = vector.extract_strided_slice %98 {offsets = [0, 0], sizes = [2, 32], strides = [1, 1]} : vector<2x128xf32> to vector<2x32xf32>
    %100 = arith.negf %99 : vector<2x32xf32>
    %101 = math.exp %100 : vector<2x32xf32>
    %cst_26 = arith.constant 1.000000e+00 : f32
    %102 = vector.broadcast %cst_26 : f32 to vector<2x32xf32>
    %103 = arith.addf %102, %101 : vector<2x32xf32>
    %104 = arith.divf %102, %103 : vector<2x32xf32>
    %105 = vector.extract_strided_slice %98 {offsets = [0, 32], sizes = [2, 32], strides = [1, 1]} : vector<2x128xf32> to vector<2x32xf32>
    %106 = arith.negf %105 : vector<2x32xf32>
    %107 = math.exp %106 : vector<2x32xf32>
    %cst_27 = arith.constant 1.000000e+00 : f32
    %108 = vector.broadcast %cst_27 : f32 to vector<2x32xf32>
    %109 = arith.addf %108, %107 : vector<2x32xf32>
    %110 = arith.divf %108, %109 : vector<2x32xf32>
    %111 = vector.extract_strided_slice %98 {offsets = [0, 64], sizes = [2, 32], strides = [1, 1]} : vector<2x128xf32> to vector<2x32xf32>
    %112 = math.tanh %111 : vector<2x32xf32>
    %113 = vector.extract_strided_slice %98 {offsets = [0, 96], sizes = [2, 32], strides = [1, 1]} : vector<2x128xf32> to vector<2x32xf32>
    %114 = arith.negf %113 : vector<2x32xf32>
    %115 = math.exp %114 : vector<2x32xf32>
    %cst_28 = arith.constant 1.000000e+00 : f32
    %116 = vector.broadcast %cst_28 : f32 to vector<2x32xf32>
    %117 = arith.addf %116, %115 : vector<2x32xf32>
    %118 = arith.divf %116, %117 : vector<2x32xf32>
    %119 = arith.mulf %110, %92 : vector<2x32xf32>
    %120 = arith.mulf %104, %112 : vector<2x32xf32>
    %121 = arith.addf %119, %120 : vector<2x32xf32>
    %122 = math.tanh %121 : vector<2x32xf32>
    %123 = arith.mulf %118, %122 : vector<2x32xf32>
    %c6 = arith.constant 6 : index
    %c0_29 = arith.constant 0 : index
    %124 = vector.load %arg12[%c6, %c0_29] : memref<16x32xf32, #tpu.memory_space<vmem>>, vector<2x32xf32>
    tpu.vector_store %arg12[%c6, %c0_29], %123 {strides = array<i32>} : memref<16x32xf32, #tpu.memory_space<vmem>>, vector<2x32xf32>,
    %125 = vector.extract_strided_slice %5 {offsets = [8, 0], sizes = [2, 128], strides = [1, 1]} : vector<16x128xf32> to vector<2x128xf32>
    %cst_30 = arith.constant dense<0.000000e+00> : vector<2x128xf32>
    %126 = tpu.matmul %123, %6, %cst_30 {dimension_numbers = #tpu.dot_dimension_numbers<[1], [0], [0], [1], [0, 0, 1, 1], [], []>} : vector<2x32xf32>, vector<32x128xf32>, vector<2x128xf32> -> vector<2x128xf32>
    %127 = arith.addf %125, %126 : vector<2x128xf32>
    %128 = vector.extract_strided_slice %127 {offsets = [0, 0], sizes = [2, 32], strides = [1, 1]} : vector<2x128xf32> to vector<2x32xf32>
    %129 = arith.negf %128 : vector<2x32xf32>
    %130 = math.exp %129 : vector<2x32xf32>
    %cst_31 = arith.constant 1.000000e+00 : f32
    %131 = vector.broadcast %cst_31 : f32 to vector<2x32xf32>
    %132 = arith.addf %131, %130 : vector<2x32xf32>
    %133 = arith.divf %131, %132 : vector<2x32xf32>
    %134 = vector.extract_strided_slice %127 {offsets = [0, 32], sizes = [2, 32], strides = [1, 1]} : vector<2x128xf32> to vector<2x32xf32>
    %135 = arith.negf %134 : vector<2x32xf32>
    %136 = math.exp %135 : vector<2x32xf32>
    %cst_32 = arith.constant 1.000000e+00 : f32
    %137 = vector.broadcast %cst_32 : f32 to vector<2x32xf32>
    %138 = arith.addf %137, %136 : vector<2x32xf32>
    %139 = arith.divf %137, %138 : vector<2x32xf32>
    %140 = vector.extract_strided_slice %127 {offsets = [0, 64], sizes = [2, 32], strides = [1, 1]} : vector<2x128xf32> to vector<2x32xf32>
    %141 = math.tanh %140 : vector<2x32xf32>
    %142 = vector.extract_strided_slice %127 {offsets = [0, 96], sizes = [2, 32], strides = [1, 1]} : vector<2x128xf32> to vector<2x32xf32>
    %143 = arith.negf %142 : vector<2x32xf32>
    %144 = math.exp %143 : vector<2x32xf32>
    %cst_33 = arith.constant 1.000000e+00 : f32
    %145 = vector.broadcast %cst_33 : f32 to vector<2x32xf32>
    %146 = arith.addf %145, %144 : vector<2x32xf32>
    %147 = arith.divf %145, %146 : vector<2x32xf32>
    %148 = arith.mulf %139, %121 : vector<2x32xf32>
    %149 = arith.mulf %133, %141 : vector<2x32xf32>
    %150 = arith.addf %148, %149 : vector<2x32xf32>
    %151 = math.tanh %150 : vector<2x32xf32>
    %152 = arith.mulf %147, %151 : vector<2x32xf32>
    %c8 = arith.constant 8 : index
    %c0_34 = arith.constant 0 : index
    %153 = vector.load %arg12[%c8, %c0_34] : memref<16x32xf32, #tpu.memory_space<vmem>>, vector<2x32xf32>
    tpu.vector_store %arg12[%c8, %c0_34], %152 {strides = array<i32>} : memref<16x32xf32, #tpu.memory_space<vmem>>, vector<2x32xf32>,
    %154 = vector.extract_strided_slice %5 {offsets = [10, 0], sizes = [2, 128], strides = [1, 1]} : vector<16x128xf32> to vector<2x128xf32>
    %cst_35 = arith.constant dense<0.000000e+00> : vector<2x128xf32>
    %155 = tpu.matmul %152, %6, %cst_35 {dimension_numbers = #tpu.dot_dimension_numbers<[1], [0], [0], [1], [0, 0, 1, 1], [], []>} : vector<2x32xf32>, vector<32x128xf32>, vector<2x128xf32> -> vector<2x128xf32>
    %156 = arith.addf %154, %155 : vector<2x128xf32>
    %157 = vector.extract_strided_slice %156 {offsets = [0, 0], sizes = [2, 32], strides = [1, 1]} : vector<2x128xf32> to vector<2x32xf32>
    %158 = arith.negf %157 : vector<2x32xf32>
    %159 = math.exp %158 : vector<2x32xf32>
    %cst_36 = arith.constant 1.000000e+00 : f32
    %160 = vector.broadcast %cst_36 : f32 to vector<2x32xf32>
    %161 = arith.addf %160, %159 : vector<2x32xf32>
    %162 = arith.divf %160, %161 : vector<2x32xf32>
    %163 = vector.extract_strided_slice %156 {offsets = [0, 32], sizes = [2, 32], strides = [1, 1]} : vector<2x128xf32> to vector<2x32xf32>
    %164 = arith.negf %163 : vector<2x32xf32>
    %165 = math.exp %164 : vector<2x32xf32>
    %cst_37 = arith.constant 1.000000e+00 : f32
    %166 = vector.broadcast %cst_37 : f32 to vector<2x32xf32>
    %167 = arith.addf %166, %165 : vector<2x32xf32>
    %168 = arith.divf %166, %167 : vector<2x32xf32>
    %169 = vector.extract_strided_slice %156 {offsets = [0, 64], sizes = [2, 32], strides = [1, 1]} : vector<2x128xf32> to vector<2x32xf32>
    %170 = math.tanh %169 : vector<2x32xf32>
    %171 = vector.extract_strided_slice %156 {offsets = [0, 96], sizes = [2, 32], strides = [1, 1]} : vector<2x128xf32> to vector<2x32xf32>
    %172 = arith.negf %171 : vector<2x32xf32>
    %173 = math.exp %172 : vector<2x32xf32>
    %cst_38 = arith.constant 1.000000e+00 : f32
    %174 = vector.broadcast %cst_38 : f32 to vector<2x32xf32>
    %175 = arith.addf %174, %173 : vector<2x32xf32>
    %176 = arith.divf %174, %175 : vector<2x32xf32>
    %177 = arith.mulf %168, %150 : vector<2x32xf32>
    %178 = arith.mulf %162, %170 : vector<2x32xf32>
    %179 = arith.addf %177, %178 : vector<2x32xf32>
    %180 = math.tanh %179 : vector<2x32xf32>
    %181 = arith.mulf %176, %180 : vector<2x32xf32>
    %c10 = arith.constant 10 : index
    %c0_39 = arith.constant 0 : index
    %182 = vector.load %arg12[%c10, %c0_39] : memref<16x32xf32, #tpu.memory_space<vmem>>, vector<2x32xf32>
    tpu.vector_store %arg12[%c10, %c0_39], %181 {strides = array<i32>} : memref<16x32xf32, #tpu.memory_space<vmem>>, vector<2x32xf32>,
    %183 = vector.extract_strided_slice %5 {offsets = [12, 0], sizes = [2, 128], strides = [1, 1]} : vector<16x128xf32> to vector<2x128xf32>
    %cst_40 = arith.constant dense<0.000000e+00> : vector<2x128xf32>
    %184 = tpu.matmul %181, %6, %cst_40 {dimension_numbers = #tpu.dot_dimension_numbers<[1], [0], [0], [1], [0, 0, 1, 1], [], []>} : vector<2x32xf32>, vector<32x128xf32>, vector<2x128xf32> -> vector<2x128xf32>
    %185 = arith.addf %183, %184 : vector<2x128xf32>
    %186 = vector.extract_strided_slice %185 {offsets = [0, 0], sizes = [2, 32], strides = [1, 1]} : vector<2x128xf32> to vector<2x32xf32>
    %187 = arith.negf %186 : vector<2x32xf32>
    %188 = math.exp %187 : vector<2x32xf32>
    %cst_41 = arith.constant 1.000000e+00 : f32
    %189 = vector.broadcast %cst_41 : f32 to vector<2x32xf32>
    %190 = arith.addf %189, %188 : vector<2x32xf32>
    %191 = arith.divf %189, %190 : vector<2x32xf32>
    %192 = vector.extract_strided_slice %185 {offsets = [0, 32], sizes = [2, 32], strides = [1, 1]} : vector<2x128xf32> to vector<2x32xf32>
    %193 = arith.negf %192 : vector<2x32xf32>
    %194 = math.exp %193 : vector<2x32xf32>
    %cst_42 = arith.constant 1.000000e+00 : f32
    %195 = vector.broadcast %cst_42 : f32 to vector<2x32xf32>
    %196 = arith.addf %195, %194 : vector<2x32xf32>
    %197 = arith.divf %195, %196 : vector<2x32xf32>
    %198 = vector.extract_strided_slice %185 {offsets = [0, 64], sizes = [2, 32], strides = [1, 1]} : vector<2x128xf32> to vector<2x32xf32>
    %199 = math.tanh %198 : vector<2x32xf32>
    %200 = vector.extract_strided_slice %185 {offsets = [0, 96], sizes = [2, 32], strides = [1, 1]} : vector<2x128xf32> to vector<2x32xf32>
    %201 = arith.negf %200 : vector<2x32xf32>
    %202 = math.exp %201 : vector<2x32xf32>
    %cst_43 = arith.constant 1.000000e+00 : f32
    %203 = vector.broadcast %cst_43 : f32 to vector<2x32xf32>
    %204 = arith.addf %203, %202 : vector<2x32xf32>
    %205 = arith.divf %203, %204 : vector<2x32xf32>
    %206 = arith.mulf %197, %179 : vector<2x32xf32>
    %207 = arith.mulf %191, %199 : vector<2x32xf32>
    %208 = arith.addf %206, %207 : vector<2x32xf32>
    %209 = math.tanh %208 : vector<2x32xf32>
    %210 = arith.mulf %205, %209 : vector<2x32xf32>
    %c12 = arith.constant 12 : index
    %c0_44 = arith.constant 0 : index
    %211 = vector.load %arg12[%c12, %c0_44] : memref<16x32xf32, #tpu.memory_space<vmem>>, vector<2x32xf32>
    tpu.vector_store %arg12[%c12, %c0_44], %210 {strides = array<i32>} : memref<16x32xf32, #tpu.memory_space<vmem>>, vector<2x32xf32>,
    %212 = vector.extract_strided_slice %5 {offsets = [14, 0], sizes = [2, 128], strides = [1, 1]} : vector<16x128xf32> to vector<2x128xf32>
    %cst_45 = arith.constant dense<0.000000e+00> : vector<2x128xf32>
    %213 = tpu.matmul %210, %6, %cst_45 {dimension_numbers = #tpu.dot_dimension_numbers<[1], [0], [0], [1], [0, 0, 1, 1], [], []>} : vector<2x32xf32>, vector<32x128xf32>, vector<2x128xf32> -> vector<2x128xf32>
    %214 = arith.addf %212, %213 : vector<2x128xf32>
    %215 = vector.extract_strided_slice %214 {offsets = [0, 0], sizes = [2, 32], strides = [1, 1]} : vector<2x128xf32> to vector<2x32xf32>
    %216 = arith.negf %215 : vector<2x32xf32>
    %217 = math.exp %216 : vector<2x32xf32>
    %cst_46 = arith.constant 1.000000e+00 : f32
    %218 = vector.broadcast %cst_46 : f32 to vector<2x32xf32>
    %219 = arith.addf %218, %217 : vector<2x32xf32>
    %220 = arith.divf %218, %219 : vector<2x32xf32>
    %221 = vector.extract_strided_slice %214 {offsets = [0, 32], sizes = [2, 32], strides = [1, 1]} : vector<2x128xf32> to vector<2x32xf32>
    %222 = arith.negf %221 : vector<2x32xf32>
    %223 = math.exp %222 : vector<2x32xf32>
    %cst_47 = arith.constant 1.000000e+00 : f32
    %224 = vector.broadcast %cst_47 : f32 to vector<2x32xf32>
    %225 = arith.addf %224, %223 : vector<2x32xf32>
    %226 = arith.divf %224, %225 : vector<2x32xf32>
    %227 = vector.extract_strided_slice %214 {offsets = [0, 64], sizes = [2, 32], strides = [1, 1]} : vector<2x128xf32> to vector<2x32xf32>
    %228 = math.tanh %227 : vector<2x32xf32>
    %229 = vector.extract_strided_slice %214 {offsets = [0, 96], sizes = [2, 32], strides = [1, 1]} : vector<2x128xf32> to vector<2x32xf32>
    %230 = arith.negf %229 : vector<2x32xf32>
    %231 = math.exp %230 : vector<2x32xf32>
    %cst_48 = arith.constant 1.000000e+00 : f32
    %232 = vector.broadcast %cst_48 : f32 to vector<2x32xf32>
    %233 = arith.addf %232, %231 : vector<2x32xf32>
    %234 = arith.divf %232, %233 : vector<2x32xf32>
    %235 = arith.mulf %226, %208 : vector<2x32xf32>
    %236 = arith.mulf %220, %228 : vector<2x32xf32>
    %237 = arith.addf %235, %236 : vector<2x32xf32>
    %238 = math.tanh %237 : vector<2x32xf32>
    %239 = arith.mulf %234, %238 : vector<2x32xf32>
    %c14 = arith.constant 14 : index
    %c0_49 = arith.constant 0 : index
    %240 = vector.load %arg12[%c14, %c0_49] : memref<16x32xf32, #tpu.memory_space<vmem>>, vector<2x32xf32>
    tpu.vector_store %arg12[%c14, %c0_49], %239 {strides = array<i32>} : memref<16x32xf32, #tpu.memory_space<vmem>>, vector<2x32xf32>,
    %c0_50 = arith.constant 0 : index
    %c0_51 = arith.constant 0 : index
    %241 = vector.load %arg10[%c0_50, %c0_51] : memref<2x32xf32, #tpu.memory_space<vmem>>, vector<2x32xf32>
    tpu.vector_store %arg10[%c0_50, %c0_51], %239 {strides = array<i32>} : memref<2x32xf32, #tpu.memory_space<vmem>>, vector<2x32xf32>,
    %c0_52 = arith.constant 0 : index
    %c0_53 = arith.constant 0 : index
    %242 = vector.load %arg11[%c0_52, %c0_53] : memref<2x32xf32, #tpu.memory_space<vmem>>, vector<2x32xf32>
    tpu.vector_store %arg11[%c0_52, %c0_53], %237 {strides = array<i32>} : memref<2x32xf32, #tpu.memory_space<vmem>>, vector<2x32xf32>,
    %c0_54 = arith.constant 0 : index
    %c0_55 = arith.constant 0 : index
    %243 = vector.load %arg12[%c0_54, %c0_55] : memref<16x32xf32, #tpu.memory_space<vmem>>, vector<16x32xf32>
    %c0_56 = arith.constant 0 : index
    %c0_57 = arith.constant 0 : index
    %244 = vector.load %arg5[%c0_56, %c0_57] : memref<32x64xf32, #tpu.memory_space<vmem>>, vector<32x64xf32>
    %cst_58 = arith.constant dense<0.000000e+00> : vector<16x64xf32>
    %245 = tpu.matmul %243, %244, %cst_58 {dimension_numbers = #tpu.dot_dimension_numbers<[1], [0], [0], [1], [0, 0, 1, 1], [], []>} : vector<16x32xf32>, vector<32x64xf32>, vector<16x64xf32> -> vector<16x64xf32>
    %c0_59 = arith.constant 0 : index
    %c0_60 = arith.constant 0 : index
    %246 = vector.load %arg6[%c0_59, %c0_60] : memref<1x64xf32, #tpu.memory_space<vmem>>, vector<1x64xf32>
    %247 = vector.broadcast %246 : vector<1x64xf32> to vector<16x64xf32>
    %248 = arith.addf %245, %247 : vector<16x64xf32>
    %cst_61 = arith.constant 0.000000e+00 : f32
    %249 = vector.broadcast %cst_61 : f32 to vector<16x64xf32>
    %250 = arith.maximumf %248, %249 : vector<16x64xf32>
    %c0_62 = arith.constant 0 : index
    %c0_63 = arith.constant 0 : index
    %251 = vector.load %arg7[%c0_62, %c0_63] : memref<64x2xf32, #tpu.memory_space<vmem>>, vector<64x2xf32>
    %cst_64 = arith.constant dense<0.000000e+00> : vector<16x2xf32>
    %252 = tpu.matmul %250, %251, %cst_64 {dimension_numbers = #tpu.dot_dimension_numbers<[1], [0], [0], [1], [0, 0, 1, 1], [], []>} : vector<16x64xf32>, vector<64x2xf32>, vector<16x2xf32> -> vector<16x2xf32>
    %c0_65 = arith.constant 0 : index
    %c0_66 = arith.constant 0 : index
    %253 = vector.load %arg8[%c0_65, %c0_66] : memref<1x2xf32, #tpu.memory_space<vmem>>, vector<1x2xf32>
    %254 = vector.broadcast %253 : vector<1x2xf32> to vector<16x2xf32>
    %255 = arith.addf %252, %254 : vector<16x2xf32>
    %c0_67 = arith.constant 0 : index
    %c0_68 = arith.constant 0 : index
    %256 = vector.load %arg9[%c0_67, %c0_68] : memref<16x2xf32, #tpu.memory_space<vmem>>, vector<16x2xf32>
    tpu.vector_store %arg9[%c0_67, %c0_68], %255 {strides = array<i32>} : memref<16x2xf32, #tpu.memory_space<vmem>>, vector<16x2xf32>,
    return
  }
  func.func @transform_0(%arg0: i32) -> (i32, i32) {
    %c0_i32 = arith.constant 0 : i32
    %c0_i32_0 = arith.constant 0 : i32
    %c0_i32_1 = arith.constant 0 : i32
    return %c0_i32, %c0_i32_0 : i32, i32
  }
  func.func @transform_1(%arg0: i32) -> (i32, i32) {
    %c0_i32 = arith.constant 0 : i32
    %c0_i32_0 = arith.constant 0 : i32
    %c0_i32_1 = arith.constant 0 : i32
    return %c0_i32, %c0_i32_0 : i32, i32
  }
  func.func @transform_2(%arg0: i32) -> (i32, i32) {
    %c0_i32 = arith.constant 0 : i32
    %c0_i32_0 = arith.constant 0 : i32
    %c0_i32_1 = arith.constant 0 : i32
    return %c0_i32, %c0_i32_0 : i32, i32
  }
  func.func @transform_3(%arg0: i32) -> (i32, i32) {
    %c0_i32 = arith.constant 0 : i32
    %c0_i32_0 = arith.constant 0 : i32
    %c0_i32_1 = arith.constant 0 : i32
    return %c0_i32, %c0_i32_0 : i32, i32
  }
  func.func @transform_4(%arg0: i32) -> (i32, i32) {
    %c0_i32 = arith.constant 0 : i32
    %c0_i32_0 = arith.constant 0 : i32
    %c0_i32_1 = arith.constant 0 : i32
    return %c0_i32, %c0_i32_0 : i32, i32
  }
  func.func @transform_5(%arg0: i32) -> (i32, i32) {
    %c0_i32 = arith.constant 0 : i32
    %c0_i32_0 = arith.constant 0 : i32
    %c0_i32_1 = arith.constant 0 : i32
    return %c0_i32, %c0_i32_0 : i32, i32
  }
  func.func @transform_6(%arg0: i32) -> (i32, i32) {
    %c0_i32 = arith.constant 0 : i32
    %c0_i32_0 = arith.constant 0 : i32
    %c0_i32_1 = arith.constant 0 : i32
    return %c0_i32, %c0_i32_0 : i32, i32
  }
  func.func @transform_7(%arg0: i32) -> (i32, i32) {
    %c0_i32 = arith.constant 0 : i32
    %c0_i32_0 = arith.constant 0 : i32
    %c0_i32_1 = arith.constant 0 : i32
    return %c0_i32, %c0_i32_0 : i32, i32
  }
  func.func @transform_8(%arg0: i32) -> (i32, i32) {
    %c0_i32 = arith.constant 0 : i32
    %c0_i32_0 = arith.constant 0 : i32
    %c0_i32_1 = arith.constant 0 : i32
    return %c0_i32, %c0_i32_0 : i32, i32
  }
  func.func @transform_9(%arg0: i32) -> (i32, i32) {
    %c0_i32 = arith.constant 0 : i32
    %c0_i32_0 = arith.constant 0 : i32
    %c0_i32_1 = arith.constant 0 : i32
    return %c0_i32, %c0_i32_0 : i32, i32
  }
  func.func @transform_10(%arg0: i32) -> (i32, i32) {
    %c0_i32 = arith.constant 0 : i32
    %c0_i32_0 = arith.constant 0 : i32
    %c0_i32_1 = arith.constant 0 : i32
    return %c0_i32, %c0_i32_0 : i32, i32
  }
}

</mosaic_0001>

<llo_original>
// kernel: cnn_lstm_actor_forward.4
$region0: #{cnn_lstm_actor_forward.4}
  #allocation0 [shape = 'u32[]', space=smem, size = 0x4, offset = 0x4, fixed_abs, tag = 'smem constant byte address 0x4 - core index']
  #allocation1 [shape = 'u32[144,128]{1,0:T(1,128)}', space=vmem, size = 0x12000, scoped, tag = 'internal scratch']
  %s0 = inlined_call_operand.vmem [shape: bf16[1024,48], index: 0, kind: input, shape index: {}]
  %s1 = inlined_call_operand.vmem [shape: bf16[48,32], index: 1, kind: input, shape index: {}]
  %s2 = inlined_call_operand.vmem [shape: f32[1,32], index: 2, kind: input, shape index: {}]
  %s3 = inlined_call_operand.vmem [shape: bf16[1024,32], index: 3, kind: output, shape index: {}]
  %s4 = sld [smem:[#allocation0]]
  $region45: #{cnn_lstm_actor_forward.4} parent=0
    _
  %s6 = ssub.s32 1, %s4
  %s7 = scalar_select 0, %s6, %s4
  loop: start=0, step=1, limit=4
  $region2: #{cnn_lstm_actor_forward.4} parent=0 // loop_pre_header
    _
  $region3: #{cnn_lstm_actor_forward.4} parent=0 // loop_header
    %s9 = sphi 0, %s13
    %p10 = scmp.ge.s32.totalorder %s9, 4
    %s19 = sphi 0, %s21
    %s22 = sphi 0, %s19
    %s23 = sphi 0, %s22
    %s39 = sphi 0, %s23
    %s43 = sphi 0, %s43
    %s45 = sphi 0, %s43
    %s46 = sphi 0, %s45
    %s60 = sphi 0, %s46
    %s64 = sphi 0, %s64
    %s66 = sphi 0, %s64
    %s67 = sphi 0, %s66
    %s81 = sphi 0, %s67
    %s87 = sphi 0, %s89
    %s90 = sphi 0, %s87
    %s91 = sphi 0, %s90
    %s107 = sphi 0, %s91
  $region4: #{cnn_lstm_actor_forward.4} parent=0 // loop_header_branch
    %12 = sbr.rel (%p10) target = $region8
  $region5: #{cnn_lstm_actor_forward.4} parent=0 // loop_body
    %s14 = ssub.s32 %s9, 1
    %s15 = ssub.s32 %s9, 2
    %s16 = sadd.s32 %s9, 1
    %s17 = ssub.s32 %s9, %s16
    %p18 = scmp.eq.s32.totalorder %s17, 0
    %s20 = sadd.s32 %s19, 1
    %s21 = scalar_select %p18, %s19, %s20
    %p24 = pneg %p18
    %p25 = scmp.eq.s32.totalorder %s9, 1
    %p26 = por %p24, %p25
    %p27 = scmp.ne.s32.totalorder %s19, %s22
    %p28 = scmp.eq.s32.totalorder %s9, 0
    %p29 = por %p27, %p28
    %p30 = scmp.ne.s32.totalorder %s19, %s22
    %p31 = scmp.eq.s32.totalorder %s14, 1
    %p32 = por %p30, %p31
    %p33 = scmp.ne.s32.totalorder %s22, %s23
    %p34 = scmp.eq.s32.totalorder %s14, 0
    %p35 = por %p33, %p34
    %p36 = scmp.ne.s32.totalorder %s22, %s23
    %p37 = scmp.eq.s32.totalorder %s15, 1
    %p38 = por %p36, %p37
    %p40 = scmp.ne.s32.totalorder %s23, %s39
    %p41 = scmp.eq.s32.totalorder %s15, 0
    %p42 = por %p40, %p41
    %s44 = sadd.s32 %s43, 1
    %p47 = scmp.eq.s32.totalorder %s9, 1
    %p48 = scmp.ne.s32.totalorder %s43, %s45
    %p49 = scmp.eq.s32.totalorder %s9, 0
    %p50 = por %p48, %p49
    %p51 = scmp.ne.s32.totalorder %s43, %s45
    %p52 = scmp.eq.s32.totalorder %s14, 1
    %p53 = por %p51, %p52
    %p54 = scmp.ne.s32.totalorder %s45, %s46
    %p55 = scmp.eq.s32.totalorder %s14, 0
    %p56 = por %p54, %p55
    %p57 = scmp.ne.s32.totalorder %s45, %s46
    %p58 = scmp.eq.s32.totalorder %s15, 1
    %p59 = por %p57, %p58
    %p61 = scmp.ne.s32.totalorder %s46, %s60
    %p62 = scmp.eq.s32.totalorder %s15, 0
    %p63 = por %p61, %p62
    %s65 = sadd.s32 %s64, 1
    %p68 = scmp.eq.s32.totalorder %s9, 1
    %p69 = scmp.ne.s32.totalorder %s64, %s66
    %p70 = scmp.eq.s32.totalorder %s9, 0
    %p71 = por %p69, %p70
    %p72 = scmp.ne.s32.totalorder %s64, %s66
    %p73 = scmp.eq.s32.totalorder %s14, 1
    %p74 = por %p72, %p73
    %p75 = scmp.ne.s32.totalorder %s66, %s67
    %p76 = scmp.eq.s32.totalorder %s14, 0
    %p77 = por %p75, %p76
    %p78 = scmp.ne.s32.totalorder %s66, %s67
    %p79 = scmp.eq.s32.totalorder %s15, 1
    %p80 = por %p78, %p79
    %p82 = scmp.ne.s32.totalorder %s67, %s81
    %p83 = scmp.eq.s32.totalorder %s15, 0
    %p84 = por %p82, %p83
    %s85 = ssub.s32 %s9, %s16
    %p86 = scmp.eq.s32.totalorder %s85, 0
    %s88 = sadd.s32 %s87, 1
    %s89 = scalar_select %p86, %s87, %s88
    %p92 = pneg %p86
    %p93 = scmp.eq.s32.totalorder %s9, 1
    %p94 = por %p92, %p93
    %p95 = scmp.ne.s32.totalorder %s87, %s90
    %p96 = scmp.eq.s32.totalorder %s9, 0
    %p97 = por %p95, %p96
    %p98 = scmp.ne.s32.totalorder %s87, %s90
    %p99 = scmp.eq.s32.totalorder %s14, 1
    %p100 = por %p98, %p99
    %p101 = scmp.ne.s32.totalorder %s90, %s91
    %p102 = scmp.eq.s32.totalorder %s14, 0
    %p103 = por %p101, %p102
    %p104 = scmp.ne.s32.totalorder %s90, %s91
    %p105 = scmp.eq.s32.totalorder %s15, 1
    %p106 = por %p104, %p105
    %p108 = scmp.ne.s32.totalorder %s91, %s107
    %p109 = scmp.eq.s32.totalorder %s15, 0
    %p110 = por %p108, %p109
    %p111 = scmp.le.s32.totalorder 1, %s9
    %p112 = scmp.lt.s32.totalorder %s9, 3
    %p113 = pnand %p111, %p112
    %p114 = pneg %p113
    // Predicated region
    $region9: #{cnn_lstm_actor_forward.4} parent=5 // pred_check
      _
    $region10: #{cnn_lstm_actor_forward.4} parent=5 // pred_check_branch
      %116 = sbr.rel (%p113) target = $region12
    $region11: #{cnn_lstm_actor_forward.4} parent=5 // pred_region
      %s117 = ssub.s32 %s9, 1
      // Predicated region
      $region13: #{cnn_lstm_actor_forward.4} parent=11 // pred_check
        %p118 = pneg %p56
      $region14: #{cnn_lstm_actor_forward.4} parent=11 // pred_check_branch
        %120 = sbr.rel (%p118) target = $region16
      $region15: #{cnn_lstm_actor_forward.4} parent=11 // pred_region
        _
      $region16: #{cnn_lstm_actor_forward.4} parent=11 // pred_fallthru
        _
      // Predicated region
      $region17: #{cnn_lstm_actor_forward.4} parent=11 // pred_check
        %p121 = pneg %p77
      $region18: #{cnn_lstm_actor_forward.4} parent=11 // pred_check_branch
        %123 = sbr.rel (%p121) target = $region20
      $region19: #{cnn_lstm_actor_forward.4} parent=11 // pred_region
        _
      $region20: #{cnn_lstm_actor_forward.4} parent=11 // pred_fallthru
        _
    $region12: #{cnn_lstm_actor_forward.4} parent=5 // pred_fallthru
      _
    %p124 = scmp.lt.s32.totalorder %s9, 2
    // Predicated region
    $region21: #{cnn_lstm_actor_forward.4} parent=5 // pred_check
      %p125 = pneg %p124
    $region22: #{cnn_lstm_actor_forward.4} parent=5 // pred_check_branch
      %127 = sbr.rel (%p125) target = $region24
    $region23: #{cnn_lstm_actor_forward.4} parent=5 // pred_region
      // Predicated region
      $region25: #{cnn_lstm_actor_forward.4} parent=23 // pred_check
        %p128 = pneg %p29
      $region26: #{cnn_lstm_actor_forward.4} parent=23 // pred_check_branch
        %130 = sbr.rel (%p128) target = $region28
      $region27: #{cnn_lstm_actor_forward.4} parent=23 // pred_region
        %s131 = smul.u32 64, %s9
        %p132 = scmp.lt.s32.totalorder %s131, 127
        %s133 = scalar_select %p132, %s131, 127
        %s134 = smul.addr %s133, 4
        %s135 = scalar_lea.vmem %s0, %s134
        %s136 = smul.u32 64, %s9
      $region28: #{cnn_lstm_actor_forward.4} parent=23 // pred_fallthru
        _
    $region24: #{cnn_lstm_actor_forward.4} parent=5 // pred_fallthru
      _
    %p137 = scmp.le.s32.totalorder 1, %s9
    %p138 = scmp.lt.s32.totalorder %s9, 3
    %p139 = pnand %p137, %p138
    %p140 = pneg %p139
    // Predicated region
    $region29: #{cnn_lstm_actor_forward.4} parent=5 // pred_check
      _
    $region30: #{cnn_lstm_actor_forward.4} parent=5 // pred_check_branch
      %142 = sbr.rel (%p139) target = $region32
    $region31: #{cnn_lstm_actor_forward.4} parent=5 // pred_region
      %s143 = ssub.s32 %s9, 1
      %s144 = smul.u32 64, %s14
      %p145 = scmp.lt.s32.totalorder %s144, 127
      %s146 = scalar_select %p145, %s144, 127
      %s147 = smul.addr %s146, 4
      %s148 = scalar_lea.vmem %s0, %s147
      %p149 = pneg %p35
      %p150 = pneg %p32
      %p151 = pneg %p56
      %p152 = pneg %p53
      %p153 = pneg %p77
      %p154 = pneg %p74
      %p155 = pneg %p103
      %p156 = pneg %p100
      %s157 = smul.u32 64, %s14
      %p158 = scmp.lt.s32.totalorder %s157, 127
      %s159 = scalar_select %p158, %s157, 127
      %s160 = smul.addr %s159, 4
      %s161 = scalar_lea.vmem %s3, %s160
      %s162 = smul.u32 64, %s14
      %p163 = scmp.lt.s32.totalorder %s162, 127
      %s164 = scalar_select %p163, %s162, 127
      %s165 = smul.addr %s164, 4
      %s166 = scalar_lea.vmem %s0, %s165
      %s167 = smul.u32 64, %s14
      %s168 = smul.u32 64, %s14
      %p169 = scmp.lt.s32.totalorder %s168, 127
      %s170 = scalar_select %p169, %s168, 127
      %s171 = smul.addr %s170, 4
      %s172 = scalar_lea.vmem %s3, %s171
      %s173 = smul.u32 64, %s14
      %v175 = vld [vmem:[%s166] sm:$0xf]
      %v176 = vld [vmem:[%s166 + $0x4] sm:$0xf]
      %v177 = vld [vmem:[%s166 + $0x8] sm:$0xf]
      %v178 = vld [vmem:[%s166 + $0xc] sm:$0xf]
      %v179 = vld [vmem:[%s166 + $0x10] sm:$0xf]
      %v180 = vld [vmem:[%s166 + $0x14] sm:$0xf]
      %v181 = vld [vmem:[%s166 + $0x18] sm:$0xf]
      %v182 = vld [vmem:[%s166 + $0x1c] sm:$0xf]
      %v183 = vld [vmem:[%s166 + $0x20] sm:$0xf]
      %v184 = vld [vmem:[%s166 + $0x24] sm:$0xf]
      %v185 = vld [vmem:[%s166 + $0x28] sm:$0xf]
      %v186 = vld [vmem:[%s166 + $0x2c] sm:$0xf]
      %v187 = vld [vmem:[%s166 + $0x30] sm:$0xf]
      %v188 = vld [vmem:[%s166 + $0x34] sm:$0xf]
      %v189 = vld [vmem:[%s166 + $0x38] sm:$0xf]
      %v190 = vld [vmem:[%s166 + $0x3c] sm:$0xf]
      %v191 = vld [vmem:[%s166 + $0x40] sm:$0xf]
      %v192 = vld [vmem:[%s166 + $0x44] sm:$0xf]
      %v193 = vld [vmem:[%s166 + $0x48] sm:$0xf]
      %v194 = vld [vmem:[%s166 + $0x4c] sm:$0xf]
      %v195 = vld [vmem:[%s166 + $0x50] sm:$0xf]
      %v196 = vld [vmem:[%s166 + $0x54] sm:$0xf]
      %v197 = vld [vmem:[%s166 + $0x58] sm:$0xf]
      %v198 = vld [vmem:[%s166 + $0x5c] sm:$0xf]
      %v199 = vld [vmem:[%s166 + $0x60] sm:$0xf]
      %v200 = vld [vmem:[%s166 + $0x64] sm:$0xf]
      %v201 = vld [vmem:[%s166 + $0x68] sm:$0xf]
      %v202 = vld [vmem:[%s166 + $0x6c] sm:$0xf]
      %v203 = vld [vmem:[%s166 + $0x70] sm:$0xf]
      %v204 = vld [vmem:[%s166 + $0x74] sm:$0xf]
      %v205 = vld [vmem:[%s166 + $0x78] sm:$0xf]
      %v206 = vld [vmem:[%s166 + $0x7c] sm:$0xf]
      %v207 = vld [vmem:[%s166 + $0x80] sm:$0xf]
      %v208 = vld [vmem:[%s166 + $0x84] sm:$0xf]
      %v209 = vld [vmem:[%s166 + $0x88] sm:$0xf]
      %v210 = vld [vmem:[%s166 + $0x8c] sm:$0xf]
      %v211 = vld [vmem:[%s166 + $0x90] sm:$0xf]
      %v212 = vld [vmem:[%s166 + $0x94] sm:$0xf]
      %v213 = vld [vmem:[%s166 + $0x98] sm:$0xf]
      %v214 = vld [vmem:[%s166 + $0x9c] sm:$0xf]
      %v215 = vld [vmem:[%s166 + $0xa0] sm:$0xf]
      %v216 = vld [vmem:[%s166 + $0xa4] sm:$0xf]
      %v217 = vld [vmem:[%s166 + $0xa8] sm:$0xf]
      %v218 = vld [vmem:[%s166 + $0xac] sm:$0xf]
      %v219 = vld [vmem:[%s166 + $0xb0] sm:$0xf]
      %v220 = vld [vmem:[%s166 + $0xb4] sm:$0xf]
      %v221 = vld [vmem:[%s166 + $0xb8] sm:$0xf]
      %v222 = vld [vmem:[%s166 + $0xbc] sm:$0xf]
      %v223 = vld [vmem:[%s166 + $0xc0] sm:$0xf]
      %v224 = vld [vmem:[%s166 + $0xc4] sm:$0xf]
      %v225 = vld [vmem:[%s166 + $0xc8] sm:$0xf]
      %v226 = vld [vmem:[%s166 + $0xcc] sm:$0xf]
      %v227 = vld [vmem:[%s166 + $0xd0] sm:$0xf]
      %v228 = vld [vmem:[%s166 + $0xd4] sm:$0xf]
      %v229 = vld [vmem:[%s166 + $0xd8] sm:$0xf]
      %v230 = vld [vmem:[%s166 + $0xdc] sm:$0xf]
      %v231 = vld [vmem:[%s166 + $0xe0] sm:$0xf]
      %v232 = vld [vmem:[%s166 + $0xe4] sm:$0xf]
      %v233 = vld [vmem:[%s166 + $0xe8] sm:$0xf]
      %v234 = vld [vmem:[%s166 + $0xec] sm:$0xf]
      %v235 = vld [vmem:[%s166 + $0xf0] sm:$0xf]
      %v236 = vld [vmem:[%s166 + $0xf4] sm:$0xf]
      %v237 = vld [vmem:[%s166 + $0xf8] sm:$0xf]
      %v238 = vld [vmem:[%s166 + $0xfc] sm:$0xf]
      %v239 = vld [vmem:[%s1] sm:$0xf]
      %v240 = vld [vmem:[%s1 + $0x4] sm:$0xf]
      %v241 = vld [vmem:[%s1 + $0x8] sm:$0xf]
      %v242 = vld [vmem:[%s1 + $0xc] sm:$0xf]
      %v243 = vld [vmem:[%s1 + $0x10] sm:$0xf]
      %v244 = vld [vmem:[%s1 + $0x14] sm:$0xf]
      %v245 = vld [vmem:[%s2] sm:$0x1]
      %v247 = vlaneseq
      %v248 = vshrl.u32 %v247, 7
      %v249 = vsub.s32 0, %v248
      %v250 = vrot.slane %v245, %v249
      %v316 = vunpack.c.l.b16 %v175
      %v317 = vunpack.c.l.b16 %v176
      %v318 = vunpack.c.l.b16 %v177
      %v319 = vunpack.c.l.b16 %v178
      %v320 = vunpack.c.l.b16 %v179
      %v321 = vunpack.c.l.b16 %v180
      %v322 = vunpack.c.l.b16 %v181
      %v323 = vunpack.c.l.b16 %v182
      %v324 = vunpack.c.l.b16 %v183
      %v325 = vunpack.c.l.b16 %v184
      %v326 = vunpack.c.l.b16 %v185
      %v327 = vunpack.c.l.b16 %v186
      %v328 = vunpack.c.l.b16 %v187
      %v329 = vunpack.c.l.b16 %v188
      %v330 = vunpack.c.l.b16 %v189
      %v331 = vunpack.c.l.b16 %v190
      %v332 = vunpack.c.l.b16 %v191
      %v333 = vunpack.c.l.b16 %v192
      %v334 = vunpack.c.l.b16 %v193
      %v335 = vunpack.c.l.b16 %v194
      %v336 = vunpack.c.l.b16 %v195
      %v337 = vunpack.c.l.b16 %v196
      %v338 = vunpack.c.l.b16 %v197
      %v339 = vunpack.c.l.b16 %v198
      %v340 = vunpack.c.l.b16 %v199
      %v341 = vunpack.c.l.b16 %v200
      %v342 = vunpack.c.l.b16 %v201
      %v343 = vunpack.c.l.b16 %v202
      %v344 = vunpack.c.l.b16 %v203
      %v345 = vunpack.c.l.b16 %v204
      %v346 = vunpack.c.l.b16 %v205
      %v347 = vunpack.c.l.b16 %v206
      %v348 = vunpack.c.l.b16 %v207
      %v349 = vunpack.c.l.b16 %v208
      %v350 = vunpack.c.l.b16 %v209
      %v351 = vunpack.c.l.b16 %v210
      %v352 = vunpack.c.l.b16 %v211
      %v353 = vunpack.c.l.b16 %v212
      %v354 = vunpack.c.l.b16 %v213
      %v355 = vunpack.c.l.b16 %v214
      %v356 = vunpack.c.l.b16 %v215
      %v357 = vunpack.c.l.b16 %v216
      %v358 = vunpack.c.l.b16 %v217
      %v359 = vunpack.c.l.b16 %v218
      %v360 = vunpack.c.l.b16 %v219
      %v361 = vunpack.c.l.b16 %v220
      %v362 = vunpack.c.l.b16 %v221
      %v363 = vunpack.c.l.b16 %v222
      %v364 = vunpack.c.l.b16 %v223
      %v365 = vunpack.c.l.b16 %v224
      %v366 = vunpack.c.l.b16 %v225
      %v367 = vunpack.c.l.b16 %v226
      %v368 = vunpack.c.l.b16 %v227
      %v369 = vunpack.c.l.b16 %v228
      %v370 = vunpack.c.l.b16 %v229
      %v371 = vunpack.c.l.b16 %v230
      %v372 = vunpack.c.l.b16 %v231
      %v373 = vunpack.c.l.b16 %v232
      %v374 = vunpack.c.l.b16 %v233
      %v375 = vunpack.c.l.b16 %v234
      %v376 = vunpack.c.l.b16 %v235
      %v377 = vunpack.c.l.b16 %v236
      %v378 = vunpack.c.l.b16 %v237
      %v379 = vunpack.c.l.b16 %v238
      %v380 = vpack.c.b16 %v317, %v316
      %v381 = vpack.c.b16 %v319, %v318
      %v382 = vpack.c.b16 %v321, %v320
      %v383 = vpack.c.b16 %v323, %v322
      %v384 = vpack.c.b16 %v325, %v324
      %v385 = vpack.c.b16 %v327, %v326
      %v386 = vpack.c.b16 %v329, %v328
      %v387 = vpack.c.b16 %v331, %v330
      %v388 = vpack.c.b16 %v333, %v332
      %v389 = vpack.c.b16 %v335, %v334
      %v390 = vpack.c.b16 %v337, %v336
      %v391 = vpack.c.b16 %v339, %v338
      %v392 = vpack.c.b16 %v341, %v340
      %v393 = vpack.c.b16 %v343, %v342
      %v394 = vpack.c.b16 %v345, %v344
      %v395 = vpack.c.b16 %v347, %v346
      %v396 = vpack.c.b16 %v349, %v348
      %v397 = vpack.c.b16 %v351, %v350
      %v398 = vpack.c.b16 %v353, %v352
      %v399 = vpack.c.b16 %v355, %v354
      %v400 = vpack.c.b16 %v357, %v356
      %v401 = vpack.c.b16 %v359, %v358
      %v402 = vpack.c.b16 %v361, %v360
      %v403 = vpack.c.b16 %v363, %v362
      %v404 = vpack.c.b16 %v365, %v364
      %v405 = vpack.c.b16 %v367, %v366
      %v406 = vpack.c.b16 %v369, %v368
      %v407 = vpack.c.b16 %v371, %v370
      %v408 = vpack.c.b16 %v373, %v372
      %v409 = vpack.c.b16 %v375, %v374
      %v410 = vpack.c.b16 %v377, %v376
      %v411 = vpack.c.b16 %v379, %v378
      %v418 = vunpack.c.l.b16 %v239
      %v419 = vunpack.c.l.b16 %v240
      %v420 = vunpack.c.l.b16 %v241
      %v421 = vunpack.c.l.b16 %v242
      %v422 = vunpack.c.l.b16 %v243
      %v423 = vunpack.c.l.b16 %v244
      %v424 = vpack.c.b16 %v419, %v418
      %v425 = vpack.c.b16 %v421, %v420
      %v426 = vpack.c.b16 %v423, %v422
      %vm430 = vcmask 392192
      %v432 = vsel %vm430, %v380, 0
      %v435 = vsel %vm430, %v381, 0
      %v438 = vsel %vm430, %v382, 0
      %v441 = vsel %vm430, %v383, 0
      %v444 = vsel %vm430, %v384, 0
      %v447 = vsel %vm430, %v385, 0
      %v450 = vsel %vm430, %v386, 0
      %v453 = vsel %vm430, %v387, 0
      %v456 = vsel %vm430, %v388, 0
      %v459 = vsel %vm430, %v389, 0
      %v462 = vsel %vm430, %v390, 0
      %v465 = vsel %vm430, %v391, 0
      %v468 = vsel %vm430, %v392, 0
      %v471 = vsel %vm430, %v393, 0
      %v474 = vsel %vm430, %v394, 0
      %v477 = vsel %vm430, %v395, 0
      %v480 = vsel %vm430, %v396, 0
      %v483 = vsel %vm430, %v397, 0
      %v486 = vsel %vm430, %v398, 0
      %v489 = vsel %vm430, %v399, 0
      %v492 = vsel %vm430, %v400, 0
      %v495 = vsel %vm430, %v401, 0
      %v498 = vsel %vm430, %v402, 0
      %v501 = vsel %vm430, %v403, 0
      %v504 = vsel %vm430, %v404, 0
      %v507 = vsel %vm430, %v405, 0
      %v510 = vsel %vm430, %v406, 0
      %v513 = vsel %vm430, %v407, 0
      %v516 = vsel %vm430, %v408, 0
      %v519 = vsel %vm430, %v409, 0
      %v522 = vsel %vm430, %v410, 0
      %v525 = vsel %vm430, %v411, 0
      %527 = vmatprep.subr.bf16.mxu0 0
      %528 = vmatpush1.bf16.msra.mxu0 %v424
      %529 = vmatprep.subr.bf16.mxu0 0
      %530 = vmatpush1.bf16.msra.mxu0 %v425
      %531 = vmatprep.subr.bf16.mxu0 0
      %532 = vmatpush1.bf16.msra.mxu0 %v426
      %533 = vmatprep.subr.bf16.mxu0 0
      %534 = vmatpush1.bf16.msra.mxu0 0
      %535 = vmatprep.subr.bf16.mxu0 0
      %536 = vmatpush1.bf16.msra.mxu0 0
      %537 = vmatprep.subr.bf16.mxu0 0
      %538 = vmatpush1.bf16.msra.mxu0 0
      %539 = vmatprep.subr.bf16.mxu0 0
      %540 = vmatpush1.bf16.msra.mxu0 0
      %541 = vmatprep.subr.bf16.mxu0 0
      %542 = vmatpush1.bf16.msra.mxu0 0
      %543 = vmatprep.subr.bf16.mxu0 0
      %544 = vmatpush1.bf16.msra.mxu0 0
      %545 = vmatprep.subr.bf16.mxu0 0
      %546 = vmatpush1.bf16.msra.mxu0 0
      %547 = vmatprep.subr.bf16.mxu0 0
      %548 = vmatpush1.bf16.msra.mxu0 0
      %549 = vmatprep.subr.bf16.mxu0 0
      %550 = vmatpush1.bf16.msra.mxu0 0
      %551 = vmatprep.subr.bf16.mxu0 0
      %552 = vmatpush1.bf16.msra.mxu0 0
      %553 = vmatprep.subr.bf16.mxu0 0
      %554 = vmatpush1.bf16.msra.mxu0 0
      %555 = vmatprep.subr.bf16.mxu0 0
      %556 = vmatpush1.bf16.msra.mxu0 0
      %557 = vmatprep.subr.bf16.mxu0 0
      %558 = vmatpush1.bf16.msra.mxu0 0
      %559 = vmatprep.mubr.bf16.mxu0 0
      %560 = vmatmul.mubr.bf16.gmra.mrb[0].mxu0 %v432
      %v561 = vpop.f32.mrb[0].mxu0
      %v562 = vadd.f32 %v250, %v561
      %v563 = vpop.f32.mrb[0].mxu0
      %v564 = vpop.f32.mrb[0].mxu0
      %v565 = vadd.f32 %v250, %v564
      %v566 = vpop.f32.mrb[0].mxu0
      %567 = vmatprep.mubr.bf16.mxu0 0
      %568 = vmatmul.mubr.bf16.gmra.mrb[0].mxu0 %v435
      %v569 = vpop.f32.mrb[0].mxu0
      %v570 = vadd.f32 %v250, %v569
      %v571 = vpop.f32.mrb[0].mxu0
      %v572 = vpop.f32.mrb[0].mxu0
      %v573 = vadd.f32 %v250, %v572
      %v574 = vpop.f32.mrb[0].mxu0
      %575 = vmatprep.mubr.bf16.mxu0 0
      %576 = vmatmul.mubr.bf16.gmra.mrb[0].mxu0 %v438
      %v577 = vpop.f32.mrb[0].mxu0
      %v578 = vadd.f32 %v250, %v577
      %v579 = vpop.f32.mrb[0].mxu0
      %v580 = vpop.f32.mrb[0].mxu0
      %v581 = vadd.f32 %v250, %v580
      %v582 = vpop.f32.mrb[0].mxu0
      %583 = vmatprep.mubr.bf16.mxu0 0
      %584 = vmatmul.mubr.bf16.gmra.mrb[0].mxu0 %v441
      %v585 = vpop.f32.mrb[0].mxu0
      %v586 = vadd.f32 %v250, %v585
      %v587 = vpop.f32.mrb[0].mxu0
      %v588 = vpop.f32.mrb[0].mxu0
      %v589 = vadd.f32 %v250, %v588
      %v590 = vpop.f32.mrb[0].mxu0
      %591 = vmatprep.mubr.bf16.mxu0 0
      %592 = vmatmul.mubr.bf16.gmra.mrb[0].mxu0 %v444
      %v593 = vpop.f32.mrb[0].mxu0
      %v594 = vadd.f32 %v250, %v593
      %v595 = vpop.f32.mrb[0].mxu0
      %v596 = vpop.f32.mrb[0].mxu0
      %v597 = vadd.f32 %v250, %v596
      %v598 = vpop.f32.mrb[0].mxu0
      %599 = vmatprep.mubr.bf16.mxu0 0
      %600 = vmatmul.mubr.bf16.gmra.mrb[0].mxu0 %v447
      %v601 = vpop.f32.mrb[0].mxu0
      %v602 = vadd.f32 %v250, %v601
      %v603 = vpop.f32.mrb[0].mxu0
      %v604 = vpop.f32.mrb[0].mxu0
      %v605 = vadd.f32 %v250, %v604
      %v606 = vpop.f32.mrb[0].mxu0
      %607 = vmatprep.mubr.bf16.mxu0 0
      %608 = vmatmul.mubr.bf16.gmra.mrb[0].mxu0 %v450
      %v609 = vpop.f32.mrb[0].mxu0
      %v610 = vadd.f32 %v250, %v609
      %v611 = vpop.f32.mrb[0].mxu0
      %v612 = vpop.f32.mrb[0].mxu0
      %v613 = vadd.f32 %v250, %v612
      %v614 = vpop.f32.mrb[0].mxu0
      %615 = vmatprep.mubr.bf16.mxu0 0
      %616 = vmatmul.mubr.bf16.gmra.mrb[0].mxu0 %v453
      %v617 = vpop.f32.mrb[0].mxu0
      %v618 = vadd.f32 %v250, %v617
      %v619 = vpop.f32.mrb[0].mxu0
      %v620 = vpop.f32.mrb[0].mxu0
      %v621 = vadd.f32 %v250, %v620
      %v622 = vpop.f32.mrb[0].mxu0
      %623 = vmatprep.mubr.bf16.mxu0 0
      %624 = vmatmul.mubr.bf16.gmra.mrb[0].mxu0 %v456
      %v625 = vpop.f32.mrb[0].mxu0
      %v626 = vadd.f32 %v250, %v625
      %v627 = vpop.f32.mrb[0].mxu0
      %v628 = vpop.f32.mrb[0].mxu0
      %v629 = vadd.f32 %v250, %v628
      %v630 = vpop.f32.mrb[0].mxu0
      %631 = vmatprep.mubr.bf16.mxu0 0
      %632 = vmatmul.mubr.bf16.gmra.mrb[0].mxu0 %v459
      %v633 = vpop.f32.mrb[0].mxu0
      %v634 = vadd.f32 %v250, %v633
      %v635 = vpop.f32.mrb[0].mxu0
      %v636 = vpop.f32.mrb[0].mxu0
      %v637 = vadd.f32 %v250, %v636
      %v638 = vpop.f32.mrb[0].mxu0
      %639 = vmatprep.mubr.bf16.mxu0 0
      %640 = vmatmul.mubr.bf16.gmra.mrb[0].mxu0 %v462
      %v641 = vpop.f32.mrb[0].mxu0
      %v642 = vadd.f32 %v250, %v641
      %v643 = vpop.f32.mrb[0].mxu0
      %v644 = vpop.f32.mrb[0].mxu0
      %v645 = vadd.f32 %v250, %v644
      %v646 = vpop.f32.mrb[0].mxu0
      %647 = vmatprep.mubr.bf16.mxu0 0
      %648 = vmatmul.mubr.bf16.gmra.mrb[0].mxu0 %v465
      %v649 = vpop.f32.mrb[0].mxu0
      %v650 = vadd.f32 %v250, %v649
      %v651 = vpop.f32.mrb[0].mxu0
      %v652 = vpop.f32.mrb[0].mxu0
      %v653 = vadd.f32 %v250, %v652
      %v654 = vpop.f32.mrb[0].mxu0
      %655 = vmatprep.mubr.bf16.mxu0 0
      %656 = vmatmul.mubr.bf16.gmra.mrb[0].mxu0 %v468
      %v657 = vpop.f32.mrb[0].mxu0
      %v658 = vadd.f32 %v250, %v657
      %v659 = vpop.f32.mrb[0].mxu0
      %v660 = vpop.f32.mrb[0].mxu0
      %v661 = vadd.f32 %v250, %v660
      %v662 = vpop.f32.mrb[0].mxu0
      %663 = vmatprep.mubr.bf16.mxu0 0
      %664 = vmatmul.mubr.bf16.gmra.mrb[0].mxu0 %v471
      %v665 = vpop.f32.mrb[0].mxu0
      %v666 = vadd.f32 %v250, %v665
      %v667 = vpop.f32.mrb[0].mxu0
      %v668 = vpop.f32.mrb[0].mxu0
      %v669 = vadd.f32 %v250, %v668
      %v670 = vpop.f32.mrb[0].mxu0
      %671 = vmatprep.mubr.bf16.mxu0 0
      %672 = vmatmul.mubr.bf16.gmra.mrb[0].mxu0 %v474
      %v673 = vpop.f32.mrb[0].mxu0
      %v674 = vadd.f32 %v250, %v673
      %v675 = vpop.f32.mrb[0].mxu0
      %v676 = vpop.f32.mrb[0].mxu0
      %v677 = vadd.f32 %v250, %v676
      %v678 = vpop.f32.mrb[0].mxu0
      %679 = vmatprep.mubr.bf16.mxu0 0
      %680 = vmatmul.mubr.bf16.gmra.mrb[0].mxu0 %v477
      %v681 = vpop.f32.mrb[0].mxu0
      %v682 = vadd.f32 %v250, %v681
      %v683 = vpop.f32.mrb[0].mxu0
      %v684 = vpop.f32.mrb[0].mxu0
      %v685 = vadd.f32 %v250, %v684
      %v686 = vpop.f32.mrb[0].mxu0
      %687 = vmatprep.mubr.bf16.mxu0 0
      %688 = vmatmul.mubr.bf16.gmra.mrb[0].mxu0 %v480
      %v689 = vpop.f32.mrb[0].mxu0
      %v690 = vadd.f32 %v250, %v689
      %v691 = vpop.f32.mrb[0].mxu0
      %v692 = vpop.f32.mrb[0].mxu0
      %v693 = vadd.f32 %v250, %v692
      %v694 = vpop.f32.mrb[0].mxu0
      %695 = vmatprep.mubr.bf16.mxu0 0
      %696 = vmatmul.mubr.bf16.gmra.mrb[0].mxu0 %v483
      %v697 = vpop.f32.mrb[0].mxu0
      %v698 = vadd.f32 %v250, %v697
      %v699 = vpop.f32.mrb[0].mxu0
      %v700 = vpop.f32.mrb[0].mxu0
      %v701 = vadd.f32 %v250, %v700
      %v702 = vpop.f32.mrb[0].mxu0
      %703 = vmatprep.mubr.bf16.mxu0 0
      %704 = vmatmul.mubr.bf16.gmra.mrb[0].mxu0 %v486
      %v705 = vpop.f32.mrb[0].mxu0
      %v706 = vadd.f32 %v250, %v705
      %v707 = vpop.f32.mrb[0].mxu0
      %v708 = vpop.f32.mrb[0].mxu0
      %v709 = vadd.f32 %v250, %v708
      %v710 = vpop.f32.mrb[0].mxu0
      %711 = vmatprep.mubr.bf16.mxu0 0
      %712 = vmatmul.mubr.bf16.gmra.mrb[0].mxu0 %v489
      %v713 = vpop.f32.mrb[0].mxu0
      %v714 = vadd.f32 %v250, %v713
      %v715 = vpop.f32.mrb[0].mxu0
      %v716 = vpop.f32.mrb[0].mxu0
      %v717 = vadd.f32 %v250, %v716
      %v718 = vpop.f32.mrb[0].mxu0
      %719 = vmatprep.mubr.bf16.mxu0 0
      %720 = vmatmul.mubr.bf16.gmra.mrb[0].mxu0 %v492
      %v721 = vpop.f32.mrb[0].mxu0
      %v722 = vadd.f32 %v250, %v721
      %v723 = vpop.f32.mrb[0].mxu0
      %v724 = vpop.f32.mrb[0].mxu0
      %v725 = vadd.f32 %v250, %v724
      %v726 = vpop.f32.mrb[0].mxu0
      %727 = vmatprep.mubr.bf16.mxu0 0
      %728 = vmatmul.mubr.bf16.gmra.mrb[0].mxu0 %v495
      %v729 = vpop.f32.mrb[0].mxu0
      %v730 = vadd.f32 %v250, %v729
      %v731 = vpop.f32.mrb[0].mxu0
      %v732 = vpop.f32.mrb[0].mxu0
      %v733 = vadd.f32 %v250, %v732
      %v734 = vpop.f32.mrb[0].mxu0
      %735 = vmatprep.mubr.bf16.mxu0 0
      %736 = vmatmul.mubr.bf16.gmra.mrb[0].mxu0 %v498
      %v737 = vpop.f32.mrb[0].mxu0
      %v738 = vadd.f32 %v250, %v737
      %v739 = vpop.f32.mrb[0].mxu0
      %v740 = vpop.f32.mrb[0].mxu0
      %v741 = vadd.f32 %v250, %v740
      %v742 = vpop.f32.mrb[0].mxu0
      %743 = vmatprep.mubr.bf16.mxu0 0
      %744 = vmatmul.mubr.bf16.gmra.mrb[0].mxu0 %v501
      %v745 = vpop.f32.mrb[0].mxu0
      %v746 = vadd.f32 %v250, %v745
      %v747 = vpop.f32.mrb[0].mxu0
      %v748 = vpop.f32.mrb[0].mxu0
      %v749 = vadd.f32 %v250, %v748
      %v750 = vpop.f32.mrb[0].mxu0
      %751 = vmatprep.mubr.bf16.mxu0 0
      %752 = vmatmul.mubr.bf16.gmra.mrb[0].mxu0 %v504
      %v753 = vpop.f32.mrb[0].mxu0
      %v754 = vadd.f32 %v250, %v753
      %v755 = vpop.f32.mrb[0].mxu0
      %v756 = vpop.f32.mrb[0].mxu0
      %v757 = vadd.f32 %v250, %v756
      %v758 = vpop.f32.mrb[0].mxu0
      %759 = vmatprep.mubr.bf16.mxu0 0
      %760 = vmatmul.mubr.bf16.gmra.mrb[0].mxu0 %v507
      %v761 = vpop.f32.mrb[0].mxu0
      %v762 = vadd.f32 %v250, %v761
      %v763 = vpop.f32.mrb[0].mxu0
      %v764 = vpop.f32.mrb[0].mxu0
      %v765 = vadd.f32 %v250, %v764
      %v766 = vpop.f32.mrb[0].mxu0
      %767 = vmatprep.mubr.bf16.mxu0 0
      %768 = vmatmul.mubr.bf16.gmra.mrb[0].mxu0 %v510
      %v769 = vpop.f32.mrb[0].mxu0
      %v770 = vadd.f32 %v250, %v769
      %v771 = vpop.f32.mrb[0].mxu0
      %v772 = vpop.f32.mrb[0].mxu0
      %v773 = vadd.f32 %v250, %v772
      %v774 = vpop.f32.mrb[0].mxu0
      %775 = vmatprep.mubr.bf16.mxu0 0
      %776 = vmatmul.mubr.bf16.gmra.mrb[0].mxu0 %v513
      %v777 = vpop.f32.mrb[0].mxu0
      %v778 = vadd.f32 %v250, %v777
      %v779 = vpop.f32.mrb[0].mxu0
      %v780 = vpop.f32.mrb[0].mxu0
      %v781 = vadd.f32 %v250, %v780
      %v782 = vpop.f32.mrb[0].mxu0
      %783 = vmatprep.mubr.bf16.mxu0 0
      %784 = vmatmul.mubr.bf16.gmra.mrb[0].mxu0 %v516
      %v785 = vpop.f32.mrb[0].mxu0
      %v786 = vadd.f32 %v250, %v785
      %v787 = vpop.f32.mrb[0].mxu0
      %v788 = vpop.f32.mrb[0].mxu0
      %v789 = vadd.f32 %v250, %v788
      %v790 = vpop.f32.mrb[0].mxu0
      %791 = vmatprep.mubr.bf16.mxu0 0
      %792 = vmatmul.mubr.bf16.gmra.mrb[0].mxu0 %v519
      %v793 = vpop.f32.mrb[0].mxu0
      %v794 = vadd.f32 %v250, %v793
      %v795 = vpop.f32.mrb[0].mxu0
      %v796 = vpop.f32.mrb[0].mxu0
      %v797 = vadd.f32 %v250, %v796
      %v798 = vpop.f32.mrb[0].mxu0
      %799 = vmatprep.mubr.bf16.mxu0 0
      %800 = vmatmul.mubr.bf16.gmra.mrb[0].mxu0 %v522
      %v801 = vpop.f32.mrb[0].mxu0
      %v802 = vadd.f32 %v250, %v801
      %v803 = vpop.f32.mrb[0].mxu0
      %v804 = vpop.f32.mrb[0].mxu0
      %v805 = vadd.f32 %v250, %v804
      %v806 = vpop.f32.mrb[0].mxu0
      %807 = vmatprep.mubr.bf16.mxu0 0
      %808 = vmatmul.mubr.bf16.gmra.mrb[0].mxu0 %v525
      %v809 = vpop.f32.mrb[0].mxu0
      %v810 = vadd.f32 %v250, %v809
      %v811 = vpop.f32.mrb[0].mxu0
      %v812 = vpop.f32.mrb[0].mxu0
      %v813 = vadd.f32 %v250, %v812
      %v814 = vpop.f32.mrb[0].mxu0
      %815 = vdwg.mxu0
      %v816 = vmax.f32 %v562, 0.0
      %v817 = vmax.f32 %v565, 0.0
      %v818 = vmax.f32 %v570, 0.0
      %v819 = vmax.f32 %v573, 0.0
      %v820 = vmax.f32 %v578, 0.0
      %v821 = vmax.f32 %v581, 0.0
      %v822 = vmax.f32 %v586, 0.0
      %v823 = vmax.f32 %v589, 0.0
      %v824 = vmax.f32 %v594, 0.0
      %v825 = vmax.f32 %v597, 0.0
      %v826 = vmax.f32 %v602, 0.0
      %v827 = vmax.f32 %v605, 0.0
      %v828 = vmax.f32 %v610, 0.0
      %v829 = vmax.f32 %v613, 0.0
      %v830 = vmax.f32 %v618, 0.0
      %v831 = vmax.f32 %v621, 0.0
      %v832 = vmax.f32 %v626, 0.0
      %v833 = vmax.f32 %v629, 0.0
      %v834 = vmax.f32 %v634, 0.0
      %v835 = vmax.f32 %v637, 0.0
      %v836 = vmax.f32 %v642, 0.0
      %v837 = vmax.f32 %v645, 0.0
      %v838 = vmax.f32 %v650, 0.0
      %v839 = vmax.f32 %v653, 0.0
      %v840 = vmax.f32 %v658, 0.0
      %v841 = vmax.f32 %v661, 0.0
      %v842 = vmax.f32 %v666, 0.0
      %v843 = vmax.f32 %v669, 0.0
      %v844 = vmax.f32 %v674, 0.0
      %v845 = vmax.f32 %v677, 0.0
      %v846 = vmax.f32 %v682, 0.0
      %v847 = vmax.f32 %v685, 0.0
      %v848 = vmax.f32 %v690, 0.0
      %v849 = vmax.f32 %v693, 0.0
      %v850 = vmax.f32 %v698, 0.0
      %v851 = vmax.f32 %v701, 0.0
      %v852 = vmax.f32 %v706, 0.0
      %v853 = vmax.f32 %v709, 0.0
      %v854 = vmax.f32 %v714, 0.0
      %v855 = vmax.f32 %v717, 0.0
      %v856 = vmax.f32 %v722, 0.0
      %v857 = vmax.f32 %v725, 0.0
      %v858 = vmax.f32 %v730, 0.0
      %v859 = vmax.f32 %v733, 0.0
      %v860 = vmax.f32 %v738, 0.0
      %v861 = vmax.f32 %v741, 0.0
      %v862 = vmax.f32 %v746, 0.0
      %v863 = vmax.f32 %v749, 0.0
      %v864 = vmax.f32 %v754, 0.0
      %v865 = vmax.f32 %v757, 0.0
      %v866 = vmax.f32 %v762, 0.0
      %v867 = vmax.f32 %v765, 0.0
      %v868 = vmax.f32 %v770, 0.0
      %v869 = vmax.f32 %v773, 0.0
      %v870 = vmax.f32 %v778, 0.0
      %v871 = vmax.f32 %v781, 0.0
      %v872 = vmax.f32 %v786, 0.0
      %v873 = vmax.f32 %v789, 0.0
      %v874 = vmax.f32 %v794, 0.0
      %v875 = vmax.f32 %v797, 0.0
      %v876 = vmax.f32 %v802, 0.0
      %v877 = vmax.f32 %v805, 0.0
      %v878 = vmax.f32 %v810, 0.0
      %v879 = vmax.f32 %v813, 0.0
      %v880 = vpack.c.bf16 %v817, %v816
      %v881 = vpack.c.bf16 %v819, %v818
      %v882 = vpack.c.bf16 %v821, %v820
      %v883 = vpack.c.bf16 %v823, %v822
      %v884 = vpack.c.bf16 %v825, %v824
      %v885 = vpack.c.bf16 %v827, %v826
      %v886 = vpack.c.bf16 %v829, %v828
      %v887 = vpack.c.bf16 %v831, %v830
      %v888 = vpack.c.bf16 %v833, %v832
      %v889 = vpack.c.bf16 %v835, %v834
      %v890 = vpack.c.bf16 %v837, %v836
      %v891 = vpack.c.bf16 %v839, %v838
      %v892 = vpack.c.bf16 %v841, %v840
      %v893 = vpack.c.bf16 %v843, %v842
      %v894 = vpack.c.bf16 %v845, %v844
      %v895 = vpack.c.bf16 %v847, %v846
      %v896 = vpack.c.bf16 %v849, %v848
      %v897 = vpack.c.bf16 %v851, %v850
      %v898 = vpack.c.bf16 %v853, %v852
      %v899 = vpack.c.bf16 %v855, %v854
      %v900 = vpack.c.bf16 %v857, %v856
      %v901 = vpack.c.bf16 %v859, %v858
      %v902 = vpack.c.bf16 %v861, %v860
      %v903 = vpack.c.bf16 %v863, %v862
      %v904 = vpack.c.bf16 %v865, %v864
      %v905 = vpack.c.bf16 %v867, %v866
      %v906 = vpack.c.bf16 %v869, %v868
      %v907 = vpack.c.bf16 %v871, %v870
      %v908 = vpack.c.bf16 %v873, %v872
      %v909 = vpack.c.bf16 %v875, %v874
      %v910 = vpack.c.bf16 %v877, %v876
      %v911 = vpack.c.bf16 %v879, %v878
      %v944 = vunpack.c.l.b16 %v880
      %v945 = vunpack.c.h.b16 %v880
      %v946 = vunpack.c.l.b16 %v881
      %v947 = vunpack.c.h.b16 %v881
      %v948 = vunpack.c.l.b16 %v882
      %v949 = vunpack.c.h.b16 %v882
      %v950 = vunpack.c.l.b16 %v883
      %v951 = vunpack.c.h.b16 %v883
      %v952 = vunpack.c.l.b16 %v884
      %v953 = vunpack.c.h.b16 %v884
      %v954 = vunpack.c.l.b16 %v885
      %v955 = vunpack.c.h.b16 %v885
      %v956 = vunpack.c.l.b16 %v886
      %v957 = vunpack.c.h.b16 %v886
      %v958 = vunpack.c.l.b16 %v887
      %v959 = vunpack.c.h.b16 %v887
      %v960 = vunpack.c.l.b16 %v888
      %v961 = vunpack.c.h.b16 %v888
      %v962 = vunpack.c.l.b16 %v889
      %v963 = vunpack.c.h.b16 %v889
      %v964 = vunpack.c.l.b16 %v890
      %v965 = vunpack.c.h.b16 %v890
      %v966 = vunpack.c.l.b16 %v891
      %v967 = vunpack.c.h.b16 %v891
      %v968 = vunpack.c.l.b16 %v892
      %v969 = vunpack.c.h.b16 %v892
      %v970 = vunpack.c.l.b16 %v893
      %v971 = vunpack.c.h.b16 %v893
      %v972 = vunpack.c.l.b16 %v894
      %v973 = vunpack.c.h.b16 %v894
      %v974 = vunpack.c.l.b16 %v895
      %v975 = vunpack.c.h.b16 %v895
      %v976 = vunpack.c.l.b16 %v896
      %v977 = vunpack.c.h.b16 %v896
      %v978 = vunpack.c.l.b16 %v897
      %v979 = vunpack.c.h.b16 %v897
      %v980 = vunpack.c.l.b16 %v898
      %v981 = vunpack.c.h.b16 %v898
      %v982 = vunpack.c.l.b16 %v899
      %v983 = vunpack.c.h.b16 %v899
      %v984 = vunpack.c.l.b16 %v900
      %v985 = vunpack.c.h.b16 %v900
      %v986 = vunpack.c.l.b16 %v901
      %v987 = vunpack.c.h.b16 %v901
      %v988 = vunpack.c.l.b16 %v902
      %v989 = vunpack.c.h.b16 %v902
      %v990 = vunpack.c.l.b16 %v903
      %v991 = vunpack.c.h.b16 %v903
      %v992 = vunpack.c.l.b16 %v904
      %v993 = vunpack.c.h.b16 %v904
      %v994 = vunpack.c.l.b16 %v905
      %v995 = vunpack.c.h.b16 %v905
      %v996 = vunpack.c.l.b16 %v906
      %v997 = vunpack.c.h.b16 %v906
      %v998 = vunpack.c.l.b16 %v907
      %v999 = vunpack.c.h.b16 %v907
      %v1000 = vunpack.c.l.b16 %v908
      %v1001 = vunpack.c.h.b16 %v908
      %v1002 = vunpack.c.l.b16 %v909
      %v1003 = vunpack.c.h.b16 %v909
      %v1004 = vunpack.c.l.b16 %v910
      %v1005 = vunpack.c.h.b16 %v910
      %v1006 = vunpack.c.l.b16 %v911
      %v1007 = vunpack.c.h.b16 %v911
      %v1008 = vpack.c.b16 %v944, %v944
      %v1009 = vpack.c.b16 %v945, %v945
      %v1010 = vpack.c.b16 %v946, %v946
      %v1011 = vpack.c.b16 %v947, %v947
      %v1012 = vpack.c.b16 %v948, %v948
      %v1013 = vpack.c.b16 %v949, %v949
      %v1014 = vpack.c.b16 %v950, %v950
      %v1015 = vpack.c.b16 %v951, %v951
      %v1016 = vpack.c.b16 %v952, %v952
      %v1017 = vpack.c.b16 %v953, %v953
      %v1018 = vpack.c.b16 %v954, %v954
      %v1019 = vpack.c.b16 %v955, %v955
      %v1020 = vpack.c.b16 %v956, %v956
      %v1021 = vpack.c.b16 %v957, %v957
      %v1022 = vpack.c.b16 %v958, %v958
      %v1023 = vpack.c.b16 %v959, %v959
      %v1024 = vpack.c.b16 %v960, %v960
      %v1025 = vpack.c.b16 %v961, %v961
      %v1026 = vpack.c.b16 %v962, %v962
      %v1027 = vpack.c.b16 %v963, %v963
      %v1028 = vpack.c.b16 %v964, %v964
      %v1029 = vpack.c.b16 %v965, %v965
      %v1030 = vpack.c.b16 %v966, %v966
      %v1031 = vpack.c.b16 %v967, %v967
      %v1032 = vpack.c.b16 %v968, %v968
      %v1033 = vpack.c.b16 %v969, %v969
      %v1034 = vpack.c.b16 %v970, %v970
      %v1035 = vpack.c.b16 %v971, %v971
      %v1036 = vpack.c.b16 %v972, %v972
      %v1037 = vpack.c.b16 %v973, %v973
      %v1038 = vpack.c.b16 %v974, %v974
      %v1039 = vpack.c.b16 %v975, %v975
      %v1040 = vpack.c.b16 %v976, %v976
      %v1041 = vpack.c.b16 %v977, %v977
      %v1042 = vpack.c.b16 %v978, %v978
      %v1043 = vpack.c.b16 %v979, %v979
      %v1044 = vpack.c.b16 %v980, %v980
      %v1045 = vpack.c.b16 %v981, %v981
      %v1046 = vpack.c.b16 %v982, %v982
      %v1047 = vpack.c.b16 %v983, %v983
      %v1048 = vpack.c.b16 %v984, %v984
      %v1049 = vpack.c.b16 %v985, %v985
      %v1050 = vpack.c.b16 %v986, %v986
      %v1051 = vpack.c.b16 %v987, %v987
      %v1052 = vpack.c.b16 %v988, %v988
      %v1053 = vpack.c.b16 %v989, %v989
      %v1054 = vpack.c.b16 %v990, %v990
      %v1055 = vpack.c.b16 %v991, %v991
      %v1056 = vpack.c.b16 %v992, %v992
      %v1057 = vpack.c.b16 %v993, %v993
      %v1058 = vpack.c.b16 %v994, %v994
      %v1059 = vpack.c.b16 %v995, %v995
      %v1060 = vpack.c.b16 %v996, %v996
      %v1061 = vpack.c.b16 %v997, %v997
      %v1062 = vpack.c.b16 %v998, %v998
      %v1063 = vpack.c.b16 %v999, %v999
      %v1064 = vpack.c.b16 %v1000, %v1000
      %v1065 = vpack.c.b16 %v1001, %v1001
      %v1066 = vpack.c.b16 %v1002, %v1002
      %v1067 = vpack.c.b16 %v1003, %v1003
      %v1068 = vpack.c.b16 %v1004, %v1004
      %v1069 = vpack.c.b16 %v1005, %v1005
      %v1070 = vpack.c.b16 %v1006, %v1006
      %v1071 = vpack.c.b16 %v1007, %v1007
      %vm1136 = vcmask 257024
      %1137 = vst.msk [vmem:[%s172] sm:$0xf] %vm1136, %v1008
      %1138 = vst.msk [vmem:[%s172 + $0x4] sm:$0xf] %vm1136, %v1009
      %1139 = vst.msk [vmem:[%s172 + $0x8] sm:$0xf] %vm1136, %v1010
      %1140 = vst.msk [vmem:[%s172 + $0xc] sm:$0xf] %vm1136, %v1011
      %1141 = vst.msk [vmem:[%s172 + $0x10] sm:$0xf] %vm1136, %v1012
      %1142 = vst.msk [vmem:[%s172 + $0x14] sm:$0xf] %vm1136, %v1013
      %1143 = vst.msk [vmem:[%s172 + $0x18] sm:$0xf] %vm1136, %v1014
      %1144 = vst.msk [vmem:[%s172 + $0x1c] sm:$0xf] %vm1136, %v1015
      %1145 = vst.msk [vmem:[%s172 + $0x20] sm:$0xf] %vm1136, %v1016
      %1146 = vst.msk [vmem:[%s172 + $0x24] sm:$0xf] %vm1136, %v1017
      %1147 = vst.msk [vmem:[%s172 + $0x28] sm:$0xf] %vm1136, %v1018
      %1148 = vst.msk [vmem:[%s172 + $0x2c] sm:$0xf] %vm1136, %v1019
      %1149 = vst.msk [vmem:[%s172 + $0x30] sm:$0xf] %vm1136, %v1020
      %1150 = vst.msk [vmem:[%s172 + $0x34] sm:$0xf] %vm1136, %v1021
      %1151 = vst.msk [vmem:[%s172 + $0x38] sm:$0xf] %vm1136, %v1022
      %1152 = vst.msk [vmem:[%s172 + $0x3c] sm:$0xf] %vm1136, %v1023
      %1153 = vst.msk [vmem:[%s172 + $0x40] sm:$0xf] %vm1136, %v1024
      %1154 = vst.msk [vmem:[%s172 + $0x44] sm:$0xf] %vm1136, %v1025
      %1155 = vst.msk [vmem:[%s172 + $0x48] sm:$0xf] %vm1136, %v1026
      %1156 = vst.msk [vmem:[%s172 + $0x4c] sm:$0xf] %vm1136, %v1027
      %1157 = vst.msk [vmem:[%s172 + $0x50] sm:$0xf] %vm1136, %v1028
      %1158 = vst.msk [vmem:[%s172 + $0x54] sm:$0xf] %vm1136, %v1029
      %1159 = vst.msk [vmem:[%s172 + $0x58] sm:$0xf] %vm1136, %v1030
      %1160 = vst.msk [vmem:[%s172 + $0x5c] sm:$0xf] %vm1136, %v1031
      %1161 = vst.msk [vmem:[%s172 + $0x60] sm:$0xf] %vm1136, %v1032
      %1162 = vst.msk [vmem:[%s172 + $0x64] sm:$0xf] %vm1136, %v1033
      %1163 = vst.msk [vmem:[%s172 + $0x68] sm:$0xf] %vm1136, %v1034
      %1164 = vst.msk [vmem:[%s172 + $0x6c] sm:$0xf] %vm1136, %v1035
      %1165 = vst.msk [vmem:[%s172 + $0x70] sm:$0xf] %vm1136, %v1036
      %1166 = vst.msk [vmem:[%s172 + $0x74] sm:$0xf] %vm1136, %v1037
      %1167 = vst.msk [vmem:[%s172 + $0x78] sm:$0xf] %vm1136, %v1038
      %1168 = vst.msk [vmem:[%s172 + $0x7c] sm:$0xf] %vm1136, %v1039
      %1169 = vst.msk [vmem:[%s172 + $0x80] sm:$0xf] %vm1136, %v1040
      %1170 = vst.msk [vmem:[%s172 + $0x84] sm:$0xf] %vm1136, %v1041
      %1171 = vst.msk [vmem:[%s172 + $0x88] sm:$0xf] %vm1136, %v1042
      %1172 = vst.msk [vmem:[%s172 + $0x8c] sm:$0xf] %vm1136, %v1043
      %1173 = vst.msk [vmem:[%s172 + $0x90] sm:$0xf] %vm1136, %v1044
      %1174 = vst.msk [vmem:[%s172 + $0x94] sm:$0xf] %vm1136, %v1045
      %1175 = vst.msk [vmem:[%s172 + $0x98] sm:$0xf] %vm1136, %v1046
      %1176 = vst.msk [vmem:[%s172 + $0x9c] sm:$0xf] %vm1136, %v1047
      %1177 = vst.msk [vmem:[%s172 + $0xa0] sm:$0xf] %vm1136, %v1048
      %1178 = vst.msk [vmem:[%s172 + $0xa4] sm:$0xf] %vm1136, %v1049
      %1179 = vst.msk [vmem:[%s172 + $0xa8] sm:$0xf] %vm1136, %v1050
      %1180 = vst.msk [vmem:[%s172 + $0xac] sm:$0xf] %vm1136, %v1051
      %1181 = vst.msk [vmem:[%s172 + $0xb0] sm:$0xf] %vm1136, %v1052
      %1182 = vst.msk [vmem:[%s172 + $0xb4] sm:$0xf] %vm1136, %v1053
      %1183 = vst.msk [vmem:[%s172 + $0xb8] sm:$0xf] %vm1136, %v1054
      %1184 = vst.msk [vmem:[%s172 + $0xbc] sm:$0xf] %vm1136, %v1055
      %1185 = vst.msk [vmem:[%s172 + $0xc0] sm:$0xf] %vm1136, %v1056
      %1186 = vst.msk [vmem:[%s172 + $0xc4] sm:$0xf] %vm1136, %v1057
      %1187 = vst.msk [vmem:[%s172 + $0xc8] sm:$0xf] %vm1136, %v1058
      %1188 = vst.msk [vmem:[%s172 + $0xcc] sm:$0xf] %vm1136, %v1059
      %1189 = vst.msk [vmem:[%s172 + $0xd0] sm:$0xf] %vm1136, %v1060
      %1190 = vst.msk [vmem:[%s172 + $0xd4] sm:$0xf] %vm1136, %v1061
      %1191 = vst.msk [vmem:[%s172 + $0xd8] sm:$0xf] %vm1136, %v1062
      %1192 = vst.msk [vmem:[%s172 + $0xdc] sm:$0xf] %vm1136, %v1063
      %1193 = vst.msk [vmem:[%s172 + $0xe0] sm:$0xf] %vm1136, %v1064
      %1194 = vst.msk [vmem:[%s172 + $0xe4] sm:$0xf] %vm1136, %v1065
      %1195 = vst.msk [vmem:[%s172 + $0xe8] sm:$0xf] %vm1136, %v1066
      %1196 = vst.msk [vmem:[%s172 + $0xec] sm:$0xf] %vm1136, %v1067
      %1197 = vst.msk [vmem:[%s172 + $0xf0] sm:$0xf] %vm1136, %v1068
      %1198 = vst.msk [vmem:[%s172 + $0xf4] sm:$0xf] %vm1136, %v1069
      %1199 = vst.msk [vmem:[%s172 + $0xf8] sm:$0xf] %vm1136, %v1070
      %1200 = vst.msk [vmem:[%s172 + $0xfc] sm:$0xf] %vm1136, %v1071
      %s1201 = smul.u32 64, %s14
      %p1202 = scmp.lt.s32.totalorder %s1201, 127
      %s1203 = scalar_select %p1202, %s1201, 127
      %s1204 = smul.addr %s1203, 4
      %s1205 = scalar_lea.vmem %s3, %s1204
      // Predicated region
      $region33: #{cnn_lstm_actor_forward.4} parent=31 // pred_check
        %p1206 = pneg %p100
      $region34: #{cnn_lstm_actor_forward.4} parent=31 // pred_check_branch
        %1208 = sbr.rel (%p1206) target = $region36
      $region35: #{cnn_lstm_actor_forward.4} parent=31 // pred_region
        %s1209 = smul.u32 64, %s14
      $region36: #{cnn_lstm_actor_forward.4} parent=31 // pred_fallthru
        _
    $region32: #{cnn_lstm_actor_forward.4} parent=5 // pred_fallthru
      _
    %p1210 = scmp.le.s32.totalorder 2, %s9
    // Predicated region
    $region37: #{cnn_lstm_actor_forward.4} parent=5 // pred_check
      %p1211 = pneg %p1210
    $region38: #{cnn_lstm_actor_forward.4} parent=5 // pred_check_branch
      %1213 = sbr.rel (%p1211) target = $region40
    $region39: #{cnn_lstm_actor_forward.4} parent=5 // pred_region
      %s1214 = ssub.s32 %s9, 2
      // Predicated region
      $region41: #{cnn_lstm_actor_forward.4} parent=39 // pred_check
        %p1215 = pneg %p106
      $region42: #{cnn_lstm_actor_forward.4} parent=39 // pred_check_branch
        %1217 = sbr.rel (%p1215) target = $region44
      $region43: #{cnn_lstm_actor_forward.4} parent=39 // pred_region
        %s1218 = smul.u32 64, %s15
        %p1219 = scmp.lt.s32.totalorder %s1218, 127
        %s1220 = scalar_select %p1219, %s1218, 127
        %s1221 = smul.addr %s1220, 4
        %s1222 = scalar_lea.vmem %s3, %s1221
      $region44: #{cnn_lstm_actor_forward.4} parent=39 // pred_fallthru
        _
    $region40: #{cnn_lstm_actor_forward.4} parent=5 // pred_fallthru
      _
  $region6: #{cnn_lstm_actor_forward.4} parent=0 // loop_footer
    %s13 = sadd.s32 1, %s9
  $region7: #{cnn_lstm_actor_forward.4} parent=0 // loop_footer_branch
    %8 = sbr.rel target = $region3
  $region8: #{cnn_lstm_actor_forward.4} parent=0 // loop_exit
    _

// kernel: cnn_lstm_actor_forward.5
$region0: #{cnn_lstm_actor_forward.5}
  #allocation0 [shape = 'u32[]', space=smem, size = 0x4, offset = 0x4, fixed_abs, tag = 'smem constant byte address 0x4 - core index']
  #allocation1 [shape = 'u32[144,128]{1,0:T(1,128)}', space=vmem, size = 0x12000, scoped, tag = 'internal scratch']
  %s0 = inlined_call_operand.vmem [shape: bf16[256,512], index: 0, kind: input, shape index: {}]
  %s1 = inlined_call_operand.vmem [shape: bf16[512,64], index: 1, kind: input, shape index: {}]
  %s2 = inlined_call_operand.vmem [shape: f32[1,64], index: 2, kind: input, shape index: {}]
  %s3 = inlined_call_operand.vmem [shape: bf16[256,64], index: 3, kind: output, shape index: {}]
  %s4 = sld [smem:[#allocation0]]
  $region22: #{cnn_lstm_actor_forward.5} parent=0
    _
  %s6 = ssub.s32 1, %s4
  %s7 = scalar_select 0, %s6, %s4
  // Predicated region
  $region2: #{cnn_lstm_actor_forward.5} parent=0 // pred_check
    _
  $region3: #{cnn_lstm_actor_forward.5} parent=0 // pred_check_branch
    %9 = sbr.rel (0) target = $region5
  $region4: #{cnn_lstm_actor_forward.5} parent=0 // pred_region
    _
  $region5: #{cnn_lstm_actor_forward.5} parent=0 // pred_fallthru
    _
  // Predicated region
  $region6: #{cnn_lstm_actor_forward.5} parent=0 // pred_check
    _
  $region7: #{cnn_lstm_actor_forward.5} parent=0 // pred_check_branch
    %11 = sbr.rel (0) target = $region9
  $region8: #{cnn_lstm_actor_forward.5} parent=0 // pred_region
    _
  $region9: #{cnn_lstm_actor_forward.5} parent=0 // pred_fallthru
    _
  // Predicated region
  $region10: #{cnn_lstm_actor_forward.5} parent=0 // pred_check
    _
  $region11: #{cnn_lstm_actor_forward.5} parent=0 // pred_check_branch
    %13 = sbr.rel (0) target = $region13
  $region12: #{cnn_lstm_actor_forward.5} parent=0 // pred_region
    _
  $region13: #{cnn_lstm_actor_forward.5} parent=0 // pred_fallthru
    _
  %v15 = vld [vmem:[%s0] sm:$0xff]
  %v16 = vld [vmem:[%s0 + $0x8] sm:$0xff]
  %v17 = vld [vmem:[%s0 + $0x10] sm:$0xff]
  %v18 = vld [vmem:[%s0 + $0x18] sm:$0xff]
  %v19 = vld [vmem:[%s0 + $0x20] sm:$0xff]
  %v20 = vld [vmem:[%s0 + $0x28] sm:$0xff]
  %v21 = vld [vmem:[%s0 + $0x30] sm:$0xff]
  %v22 = vld [vmem:[%s0 + $0x38] sm:$0xff]
  %v23 = vld [vmem:[%s0 + $0x40] sm:$0xff]
  %v24 = vld [vmem:[%s0 + $0x48] sm:$0xff]
  %v25 = vld [vmem:[%s0 + $0x50] sm:$0xff]
  %v26 = vld [vmem:[%s0 + $0x58] sm:$0xff]
  %v27 = vld [vmem:[%s0 + $0x60] sm:$0xff]
  %v28 = vld [vmem:[%s0 + $0x68] sm:$0xff]
  %v29 = vld [vmem:[%s0 + $0x70] sm:$0xff]
  %v30 = vld [vmem:[%s0 + $0x78] sm:$0xff]
  %v31 = vld [vmem:[%s0 + $0x80] sm:$0xff]
  %v32 = vld [vmem:[%s0 + $0x88] sm:$0xff]
  %v33 = vld [vmem:[%s0 + $0x90] sm:$0xff]
  %v34 = vld [vmem:[%s0 + $0x98] sm:$0xff]
  %v35 = vld [vmem:[%s0 + $0xa0] sm:$0xff]
  %v36 = vld [vmem:[%s0 + $0xa8] sm:$0xff]
  %v37 = vld [vmem:[%s0 + $0xb0] sm:$0xff]
  %v38 = vld [vmem:[%s0 + $0xb8] sm:$0xff]
  %v39 = vld [vmem:[%s0 + $0xc0] sm:$0xff]
  %v40 = vld [vmem:[%s0 + $0xc8] sm:$0xff]
  %v41 = vld [vmem:[%s0 + $0xd0] sm:$0xff]
  %v42 = vld [vmem:[%s0 + $0xd8] sm:$0xff]
  %v43 = vld [vmem:[%s0 + $0xe0] sm:$0xff]
  %v44 = vld [vmem:[%s0 + $0xe8] sm:$0xff]
  %v45 = vld [vmem:[%s0 + $0xf0] sm:$0xff]
  %v46 = vld [vmem:[%s0 + $0xf8] sm:$0xff]
  %v47 = vld [vmem:[%s0 + $0x100] sm:$0xff]
  %v48 = vld [vmem:[%s0 + $0x108] sm:$0xff]
  %v49 = vld [vmem:[%s0 + $0x110] sm:$0xff]
  %v50 = vld [vmem:[%s0 + $0x118] sm:$0xff]
  %v51 = vld [vmem:[%s0 + $0x120] sm:$0xff]
  %v52 = vld [vmem:[%s0 + $0x128] sm:$0xff]
  %v53 = vld [vmem:[%s0 + $0x130] sm:$0xff]
  %v54 = vld [vmem:[%s0 + $0x138] sm:$0xff]
  %v55 = vld [vmem:[%s0 + $0x140] sm:$0xff]
  %v56 = vld [vmem:[%s0 + $0x148] sm:$0xff]
  %v57 = vld [vmem:[%s0 + $0x150] sm:$0xff]
  %v58 = vld [vmem:[%s0 + $0x158] sm:$0xff]
  %v59 = vld [vmem:[%s0 + $0x160] sm:$0xff]
  %v60 = vld [vmem:[%s0 + $0x168] sm:$0xff]
  %v61 = vld [vmem:[%s0 + $0x170] sm:$0xff]
  %v62 = vld [vmem:[%s0 + $0x178] sm:$0xff]
  %v63 = vld [vmem:[%s0 + $0x180] sm:$0xff]
  %v64 = vld [vmem:[%s0 + $0x188] sm:$0xff]
  %v65 = vld [vmem:[%s0 + $0x190] sm:$0xff]
  %v66 = vld [vmem:[%s0 + $0x198] sm:$0xff]
  %v67 = vld [vmem:[%s0 + $0x1a0] sm:$0xff]
  %v68 = vld [vmem:[%s0 + $0x1a8] sm:$0xff]
  %v69 = vld [vmem:[%s0 + $0x1b0] sm:$0xff]
  %v70 = vld [vmem:[%s0 + $0x1b8] sm:$0xff]
  %v71 = vld [vmem:[%s0 + $0x1c0] sm:$0xff]
  %v72 = vld [vmem:[%s0 + $0x1c8] sm:$0xff]
  %v73 = vld [vmem:[%s0 + $0x1d0] sm:$0xff]
  %v74 = vld [vmem:[%s0 + $0x1d8] sm:$0xff]
  %v75 = vld [vmem:[%s0 + $0x1e0] sm:$0xff]
  %v76 = vld [vmem:[%s0 + $0x1e8] sm:$0xff]
  %v77 = vld [vmem:[%s0 + $0x1f0] sm:$0xff]
  %v78 = vld [vmem:[%s0 + $0x1f8] sm:$0xff]
  %v79 = vld [vmem:[%s1] sm:$0xf]
  %v80 = vld [vmem:[%s1 + $0x4] sm:$0xf]
  %v81 = vld [vmem:[%s1 + $0x8] sm:$0xf]
  %v82 = vld [vmem:[%s1 + $0xc] sm:$0xf]
  %v83 = vld [vmem:[%s1 + $0x10] sm:$0xf]
  %v84 = vld [vmem:[%s1 + $0x14] sm:$0xf]
  %v85 = vld [vmem:[%s1 + $0x18] sm:$0xf]
  %v86 = vld [vmem:[%s1 + $0x1c] sm:$0xf]
  %v87 = vld [vmem:[%s1 + $0x20] sm:$0xf]
  %v88 = vld [vmem:[%s1 + $0x24] sm:$0xf]
  %v89 = vld [vmem:[%s1 + $0x28] sm:$0xf]
  %v90 = vld [vmem:[%s1 + $0x2c] sm:$0xf]
  %v91 = vld [vmem:[%s1 + $0x30] sm:$0xf]
  %v92 = vld [vmem:[%s1 + $0x34] sm:$0xf]
  %v93 = vld [vmem:[%s1 + $0x38] sm:$0xf]
  %v94 = vld [vmem:[%s1 + $0x3c] sm:$0xf]
  %v95 = vld [vmem:[%s1 + $0x40] sm:$0xf]
  %v96 = vld [vmem:[%s1 + $0x44] sm:$0xf]
  %v97 = vld [vmem:[%s1 + $0x48] sm:$0xf]
  %v98 = vld [vmem:[%s1 + $0x4c] sm:$0xf]
  %v99 = vld [vmem:[%s1 + $0x50] sm:$0xf]
  %v100 = vld [vmem:[%s1 + $0x54] sm:$0xf]
  %v101 = vld [vmem:[%s1 + $0x58] sm:$0xf]
  %v102 = vld [vmem:[%s1 + $0x5c] sm:$0xf]
  %v103 = vld [vmem:[%s1 + $0x60] sm:$0xf]
  %v104 = vld [vmem:[%s1 + $0x64] sm:$0xf]
  %v105 = vld [vmem:[%s1 + $0x68] sm:$0xf]
  %v106 = vld [vmem:[%s1 + $0x6c] sm:$0xf]
  %v107 = vld [vmem:[%s1 + $0x70] sm:$0xf]
  %v108 = vld [vmem:[%s1 + $0x74] sm:$0xf]
  %v109 = vld [vmem:[%s1 + $0x78] sm:$0xf]
  %v110 = vld [vmem:[%s1 + $0x7c] sm:$0xf]
  %v111 = vld [vmem:[%s1 + $0x80] sm:$0xf]
  %v112 = vld [vmem:[%s1 + $0x84] sm:$0xf]
  %v113 = vld [vmem:[%s1 + $0x88] sm:$0xf]
  %v114 = vld [vmem:[%s1 + $0x8c] sm:$0xf]
  %v115 = vld [vmem:[%s1 + $0x90] sm:$0xf]
  %v116 = vld [vmem:[%s1 + $0x94] sm:$0xf]
  %v117 = vld [vmem:[%s1 + $0x98] sm:$0xf]
  %v118 = vld [vmem:[%s1 + $0x9c] sm:$0xf]
  %v119 = vld [vmem:[%s1 + $0xa0] sm:$0xf]
  %v120 = vld [vmem:[%s1 + $0xa4] sm:$0xf]
  %v121 = vld [vmem:[%s1 + $0xa8] sm:$0xf]
  %v122 = vld [vmem:[%s1 + $0xac] sm:$0xf]
  %v123 = vld [vmem:[%s1 + $0xb0] sm:$0xf]
  %v124 = vld [vmem:[%s1 + $0xb4] sm:$0xf]
  %v125 = vld [vmem:[%s1 + $0xb8] sm:$0xf]
  %v126 = vld [vmem:[%s1 + $0xbc] sm:$0xf]
  %v127 = vld [vmem:[%s1 + $0xc0] sm:$0xf]
  %v128 = vld [vmem:[%s1 + $0xc4] sm:$0xf]
  %v129 = vld [vmem:[%s1 + $0xc8] sm:$0xf]
  %v130 = vld [vmem:[%s1 + $0xcc] sm:$0xf]
  %v131 = vld [vmem:[%s1 + $0xd0] sm:$0xf]
  %v132 = vld [vmem:[%s1 + $0xd4] sm:$0xf]
  %v133 = vld [vmem:[%s1 + $0xd8] sm:$0xf]
  %v134 = vld [vmem:[%s1 + $0xdc] sm:$0xf]
  %v135 = vld [vmem:[%s1 + $0xe0] sm:$0xf]
  %v136 = vld [vmem:[%s1 + $0xe4] sm:$0xf]
  %v137 = vld [vmem:[%s1 + $0xe8] sm:$0xf]
  %v138 = vld [vmem:[%s1 + $0xec] sm:$0xf]
  %v139 = vld [vmem:[%s1 + $0xf0] sm:$0xf]
  %v140 = vld [vmem:[%s1 + $0xf4] sm:$0xf]
  %v141 = vld [vmem:[%s1 + $0xf8] sm:$0xf]
  %v142 = vld [vmem:[%s1 + $0xfc] sm:$0xf]
  %v143 = vld [vmem:[%s2] sm:$0x1]
  %v145 = vlaneseq
  %v146 = vshrl.u32 %v145, 7
  %v147 = vsub.s32 0, %v146
  %v148 = vrot.slane %v143, %v147
  %v214 = vunpack.c.l.b16 %v15
  %v215 = vunpack.c.h.b16 %v15
  %v216 = vunpack.c.l.b16 %v16
  %v217 = vunpack.c.h.b16 %v16
  %v218 = vunpack.c.l.b16 %v17
  %v219 = vunpack.c.h.b16 %v17
  %v220 = vunpack.c.l.b16 %v18
  %v221 = vunpack.c.h.b16 %v18
  %v222 = vunpack.c.l.b16 %v19
  %v223 = vunpack.c.h.b16 %v19
  %v224 = vunpack.c.l.b16 %v20
  %v225 = vunpack.c.h.b16 %v20
  %v226 = vunpack.c.l.b16 %v21
  %v227 = vunpack.c.h.b16 %v21
  %v228 = vunpack.c.l.b16 %v22
  %v229 = vunpack.c.h.b16 %v22
  %v230 = vunpack.c.l.b16 %v23
  %v231 = vunpack.c.h.b16 %v23
  %v232 = vunpack.c.l.b16 %v24
  %v233 = vunpack.c.h.b16 %v24
  %v234 = vunpack.c.l.b16 %v25
  %v235 = vunpack.c.h.b16 %v25
  %v236 = vunpack.c.l.b16 %v26
  %v237 = vunpack.c.h.b16 %v26
  %v238 = vunpack.c.l.b16 %v27
  %v239 = vunpack.c.h.b16 %v27
  %v240 = vunpack.c.l.b16 %v28
  %v241 = vunpack.c.h.b16 %v28
  %v242 = vunpack.c.l.b16 %v29
  %v243 = vunpack.c.h.b16 %v29
  %v244 = vunpack.c.l.b16 %v30
  %v245 = vunpack.c.h.b16 %v30
  %v246 = vunpack.c.l.b16 %v31
  %v247 = vunpack.c.h.b16 %v31
  %v248 = vunpack.c.l.b16 %v32
  %v249 = vunpack.c.h.b16 %v32
  %v250 = vunpack.c.l.b16 %v33
  %v251 = vunpack.c.h.b16 %v33
  %v252 = vunpack.c.l.b16 %v34
  %v253 = vunpack.c.h.b16 %v34
  %v254 = vunpack.c.l.b16 %v35
  %v255 = vunpack.c.h.b16 %v35
  %v256 = vunpack.c.l.b16 %v36
  %v257 = vunpack.c.h.b16 %v36
  %v258 = vunpack.c.l.b16 %v37
  %v259 = vunpack.c.h.b16 %v37
  %v260 = vunpack.c.l.b16 %v38
  %v261 = vunpack.c.h.b16 %v38
  %v262 = vunpack.c.l.b16 %v39
  %v263 = vunpack.c.h.b16 %v39
  %v264 = vunpack.c.l.b16 %v40
  %v265 = vunpack.c.h.b16 %v40
  %v266 = vunpack.c.l.b16 %v41
  %v267 = vunpack.c.h.b16 %v41
  %v268 = vunpack.c.l.b16 %v42
  %v269 = vunpack.c.h.b16 %v42
  %v270 = vunpack.c.l.b16 %v43
  %v271 = vunpack.c.h.b16 %v43
  %v272 = vunpack.c.l.b16 %v44
  %v273 = vunpack.c.h.b16 %v44
  %v274 = vunpack.c.l.b16 %v45
  %v275 = vunpack.c.h.b16 %v45
  %v276 = vunpack.c.l.b16 %v46
  %v277 = vunpack.c.h.b16 %v46
  %v278 = vunpack.c.l.b16 %v47
  %v279 = vunpack.c.h.b16 %v47
  %v280 = vunpack.c.l.b16 %v48
  %v281 = vunpack.c.h.b16 %v48
  %v282 = vunpack.c.l.b16 %v49
  %v283 = vunpack.c.h.b16 %v49
  %v284 = vunpack.c.l.b16 %v50
  %v285 = vunpack.c.h.b16 %v50
  %v286 = vunpack.c.l.b16 %v51
  %v287 = vunpack.c.h.b16 %v51
  %v288 = vunpack.c.l.b16 %v52
  %v289 = vunpack.c.h.b16 %v52
  %v290 = vunpack.c.l.b16 %v53
  %v291 = vunpack.c.h.b16 %v53
  %v292 = vunpack.c.l.b16 %v54
  %v293 = vunpack.c.h.b16 %v54
  %v294 = vunpack.c.l.b16 %v55
  %v295 = vunpack.c.h.b16 %v55
  %v296 = vunpack.c.l.b16 %v56
  %v297 = vunpack.c.h.b16 %v56
  %v298 = vunpack.c.l.b16 %v57
  %v299 = vunpack.c.h.b16 %v57
  %v300 = vunpack.c.l.b16 %v58
  %v301 = vunpack.c.h.b16 %v58
  %v302 = vunpack.c.l.b16 %v59
  %v303 = vunpack.c.h.b16 %v59
  %v304 = vunpack.c.l.b16 %v60
  %v305 = vunpack.c.h.b16 %v60
  %v306 = vunpack.c.l.b16 %v61
  %v307 = vunpack.c.h.b16 %v61
  %v308 = vunpack.c.l.b16 %v62
  %v309 = vunpack.c.h.b16 %v62
  %v310 = vunpack.c.l.b16 %v63
  %v311 = vunpack.c.h.b16 %v63
  %v312 = vunpack.c.l.b16 %v64
  %v313 = vunpack.c.h.b16 %v64
  %v314 = vunpack.c.l.b16 %v65
  %v315 = vunpack.c.h.b16 %v65
  %v316 = vunpack.c.l.b16 %v66
  %v317 = vunpack.c.h.b16 %v66
  %v318 = vunpack.c.l.b16 %v67
  %v319 = vunpack.c.h.b16 %v67
  %v320 = vunpack.c.l.b16 %v68
  %v321 = vunpack.c.h.b16 %v68
  %v322 = vunpack.c.l.b16 %v69
  %v323 = vunpack.c.h.b16 %v69
  %v324 = vunpack.c.l.b16 %v70
  %v325 = vunpack.c.h.b16 %v70
  %v326 = vunpack.c.l.b16 %v71
  %v327 = vunpack.c.h.b16 %v71
  %v328 = vunpack.c.l.b16 %v72
  %v329 = vunpack.c.h.b16 %v72
  %v330 = vunpack.c.l.b16 %v73
  %v331 = vunpack.c.h.b16 %v73
  %v332 = vunpack.c.l.b16 %v74
  %v333 = vunpack.c.h.b16 %v74
  %v334 = vunpack.c.l.b16 %v75
  %v335 = vunpack.c.h.b16 %v75
  %v336 = vunpack.c.l.b16 %v76
  %v337 = vunpack.c.h.b16 %v76
  %v338 = vunpack.c.l.b16 %v77
  %v339 = vunpack.c.h.b16 %v77
  %v340 = vunpack.c.l.b16 %v78
  %v341 = vunpack.c.h.b16 %v78
  %v342 = vpack.c.b16 %v218, %v214
  %v343 = vpack.c.b16 %v219, %v215
  %v344 = vpack.c.b16 %v220, %v216
  %v345 = vpack.c.b16 %v221, %v217
  %v346 = vpack.c.b16 %v226, %v222
  %v347 = vpack.c.b16 %v227, %v223
  %v348 = vpack.c.b16 %v228, %v224
  %v349 = vpack.c.b16 %v229, %v225
  %v350 = vpack.c.b16 %v234, %v230
  %v351 = vpack.c.b16 %v235, %v231
  %v352 = vpack.c.b16 %v236, %v232
  %v353 = vpack.c.b16 %v237, %v233
  %v354 = vpack.c.b16 %v242, %v238
  %v355 = vpack.c.b16 %v243, %v239
  %v356 = vpack.c.b16 %v244, %v240
  %v357 = vpack.c.b16 %v245, %v241
  %v358 = vpack.c.b16 %v250, %v246
  %v359 = vpack.c.b16 %v251, %v247
  %v360 = vpack.c.b16 %v252, %v248
  %v361 = vpack.c.b16 %v253, %v249
  %v362 = vpack.c.b16 %v258, %v254
  %v363 = vpack.c.b16 %v259, %v255
  %v364 = vpack.c.b16 %v260, %v256
  %v365 = vpack.c.b16 %v261, %v257
  %v366 = vpack.c.b16 %v266, %v262
  %v367 = vpack.c.b16 %v267, %v263
  %v368 = vpack.c.b16 %v268, %v264
  %v369 = vpack.c.b16 %v269, %v265
  %v370 = vpack.c.b16 %v274, %v270
  %v371 = vpack.c.b16 %v275, %v271
  %v372 = vpack.c.b16 %v276, %v272
  %v373 = vpack.c.b16 %v277, %v273
  %v374 = vpack.c.b16 %v282, %v278
  %v375 = vpack.c.b16 %v283, %v279
  %v376 = vpack.c.b16 %v284, %v280
  %v377 = vpack.c.b16 %v285, %v281
  %v378 = vpack.c.b16 %v290, %v286
  %v379 = vpack.c.b16 %v291, %v287
  %v380 = vpack.c.b16 %v292, %v288
  %v381 = vpack.c.b16 %v293, %v289
  %v382 = vpack.c.b16 %v298, %v294
  %v383 = vpack.c.b16 %v299, %v295
  %v384 = vpack.c.b16 %v300, %v296
  %v385 = vpack.c.b16 %v301, %v297
  %v386 = vpack.c.b16 %v306, %v302
  %v387 = vpack.c.b16 %v307, %v303
  %v388 = vpack.c.b16 %v308, %v304
  %v389 = vpack.c.b16 %v309, %v305
  %v390 = vpack.c.b16 %v314, %v310
  %v391 = vpack.c.b16 %v315, %v311
  %v392 = vpack.c.b16 %v316, %v312
  %v393 = vpack.c.b16 %v317, %v313
  %v394 = vpack.c.b16 %v322, %v318
  %v395 = vpack.c.b16 %v323, %v319
  %v396 = vpack.c.b16 %v324, %v320
  %v397 = vpack.c.b16 %v325, %v321
  %v398 = vpack.c.b16 %v330, %v326
  %v399 = vpack.c.b16 %v331, %v327
  %v400 = vpack.c.b16 %v332, %v328
  %v401 = vpack.c.b16 %v333, %v329
  %v402 = vpack.c.b16 %v338, %v334
  %v403 = vpack.c.b16 %v339, %v335
  %v404 = vpack.c.b16 %v340, %v336
  %v405 = vpack.c.b16 %v341, %v337
  %v534 = vunpack.c.l.b16 %v79
  %v535 = vunpack.c.l.b16 %v80
  %v536 = vunpack.c.l.b16 %v81
  %v537 = vunpack.c.l.b16 %v82
  %v538 = vunpack.c.l.b16 %v83
  %v539 = vunpack.c.l.b16 %v84
  %v540 = vunpack.c.l.b16 %v85
  %v541 = vunpack.c.l.b16 %v86
  %v542 = vunpack.c.l.b16 %v87
  %v543 = vunpack.c.l.b16 %v88
  %v544 = vunpack.c.l.b16 %v89
  %v545 = vunpack.c.l.b16 %v90
  %v546 = vunpack.c.l.b16 %v91
  %v547 = vunpack.c.l.b16 %v92
  %v548 = vunpack.c.l.b16 %v93
  %v549 = vunpack.c.l.b16 %v94
  %v550 = vunpack.c.l.b16 %v95
  %v551 = vunpack.c.l.b16 %v96
  %v552 = vunpack.c.l.b16 %v97
  %v553 = vunpack.c.l.b16 %v98
  %v554 = vunpack.c.l.b16 %v99
  %v555 = vunpack.c.l.b16 %v100
  %v556 = vunpack.c.l.b16 %v101
  %v557 = vunpack.c.l.b16 %v102
  %v558 = vunpack.c.l.b16 %v103
  %v559 = vunpack.c.l.b16 %v104
  %v560 = vunpack.c.l.b16 %v105
  %v561 = vunpack.c.l.b16 %v106
  %v562 = vunpack.c.l.b16 %v107
  %v563 = vunpack.c.l.b16 %v108
  %v564 = vunpack.c.l.b16 %v109
  %v565 = vunpack.c.l.b16 %v110
  %v566 = vunpack.c.l.b16 %v111
  %v567 = vunpack.c.l.b16 %v112
  %v568 = vunpack.c.l.b16 %v113
  %v569 = vunpack.c.l.b16 %v114
  %v570 = vunpack.c.l.b16 %v115
  %v571 = vunpack.c.l.b16 %v116
  %v572 = vunpack.c.l.b16 %v117
  %v573 = vunpack.c.l.b16 %v118
  %v574 = vunpack.c.l.b16 %v119
  %v575 = vunpack.c.l.b16 %v120
  %v576 = vunpack.c.l.b16 %v121
  %v577 = vunpack.c.l.b16 %v122
  %v578 = vunpack.c.l.b16 %v123
  %v579 = vunpack.c.l.b16 %v124
  %v580 = vunpack.c.l.b16 %v125
  %v581 = vunpack.c.l.b16 %v126
  %v582 = vunpack.c.l.b16 %v127
  %v583 = vunpack.c.l.b16 %v128
  %v584 = vunpack.c.l.b16 %v129
  %v585 = vunpack.c.l.b16 %v130
  %v586 = vunpack.c.l.b16 %v131
  %v587 = vunpack.c.l.b16 %v132
  %v588 = vunpack.c.l.b16 %v133
  %v589 = vunpack.c.l.b16 %v134
  %v590 = vunpack.c.l.b16 %v135
  %v591 = vunpack.c.l.b16 %v136
  %v592 = vunpack.c.l.b16 %v137
  %v593 = vunpack.c.l.b16 %v138
  %v594 = vunpack.c.l.b16 %v139
  %v595 = vunpack.c.l.b16 %v140
  %v596 = vunpack.c.l.b16 %v141
  %v597 = vunpack.c.l.b16 %v142
  %v598 = vpack.c.b16 %v535, %v534
  %v599 = vpack.c.b16 %v537, %v536
  %v600 = vpack.c.b16 %v539, %v538
  %v601 = vpack.c.b16 %v541, %v540
  %v602 = vpack.c.b16 %v543, %v542
  %v603 = vpack.c.b16 %v545, %v544
  %v604 = vpack.c.b16 %v547, %v546
  %v605 = vpack.c.b16 %v549, %v548
  %v606 = vpack.c.b16 %v551, %v550
  %v607 = vpack.c.b16 %v553, %v552
  %v608 = vpack.c.b16 %v555, %v554
  %v609 = vpack.c.b16 %v557, %v556
  %v610 = vpack.c.b16 %v559, %v558
  %v611 = vpack.c.b16 %v561, %v560
  %v612 = vpack.c.b16 %v563, %v562
  %v613 = vpack.c.b16 %v565, %v564
  %v614 = vpack.c.b16 %v567, %v566
  %v615 = vpack.c.b16 %v569, %v568
  %v616 = vpack.c.b16 %v571, %v570
  %v617 = vpack.c.b16 %v573, %v572
  %v618 = vpack.c.b16 %v575, %v574
  %v619 = vpack.c.b16 %v577, %v576
  %v620 = vpack.c.b16 %v579, %v578
  %v621 = vpack.c.b16 %v581, %v580
  %v622 = vpack.c.b16 %v583, %v582
  %v623 = vpack.c.b16 %v585, %v584
  %v624 = vpack.c.b16 %v587, %v586
  %v625 = vpack.c.b16 %v589, %v588
  %v626 = vpack.c.b16 %v591, %v590
  %v627 = vpack.c.b16 %v593, %v592
  %v628 = vpack.c.b16 %v595, %v594
  %v629 = vpack.c.b16 %v597, %v596
  %662 = vmatprep.subr.bf16.mxu0 0
  %663 = vmatpush1.bf16.msra.mxu0 %v598
  %664 = vmatprep.subr.bf16.mxu0 0
  %665 = vmatpush1.bf16.msra.mxu0 %v599
  %666 = vmatprep.subr.bf16.mxu0 0
  %667 = vmatpush1.bf16.msra.mxu0 %v600
  %668 = vmatprep.subr.bf16.mxu0 0
  %669 = vmatpush1.bf16.msra.mxu0 %v601
  %670 = vmatprep.subr.bf16.mxu0 0
  %671 = vmatpush1.bf16.msra.mxu0 %v602
  %672 = vmatprep.subr.bf16.mxu0 0
  %673 = vmatpush1.bf16.msra.mxu0 %v603
  %674 = vmatprep.subr.bf16.mxu0 0
  %675 = vmatpush1.bf16.msra.mxu0 %v604
  %676 = vmatprep.subr.bf16.mxu0 0
  %677 = vmatpush1.bf16.msra.mxu0 %v605
  %678 = vmatprep.subr.bf16.mxu0 0
  %679 = vmatpush1.bf16.msra.mxu0 %v606
  %680 = vmatprep.subr.bf16.mxu0 0
  %681 = vmatpush1.bf16.msra.mxu0 %v607
  %682 = vmatprep.subr.bf16.mxu0 0
  %683 = vmatpush1.bf16.msra.mxu0 %v608
  %684 = vmatprep.subr.bf16.mxu0 0
  %685 = vmatpush1.bf16.msra.mxu0 %v609
  %686 = vmatprep.subr.bf16.mxu0 0
  %687 = vmatpush1.bf16.msra.mxu0 %v610
  %688 = vmatprep.subr.bf16.mxu0 0
  %689 = vmatpush1.bf16.msra.mxu0 %v611
  %690 = vmatprep.subr.bf16.mxu0 0
  %691 = vmatpush1.bf16.msra.mxu0 %v612
  %692 = vmatprep.subr.bf16.mxu0 0
  %693 = vmatpush1.bf16.msra.mxu0 %v613
  %694 = vmatprep.mubr.bf16.mxu0 %v343
  %695 = vmatmul.mubr.bf16.gmra.mrb[0].mxu0 %v342
  %v696 = vpop.f32.mrb[0].mxu0
  %v697 = vadd.f32 %v148, %v696
  %v698 = vpop.f32.mrb[0].mxu0
  %v699 = vpop.f32.mrb[0].mxu0
  %v700 = vadd.f32 %v148, %v699
  %v701 = vpop.f32.mrb[0].mxu0
  %702 = vmatprep.mubr.bf16.mxu0 %v347
  %703 = vmatmul.mubr.bf16.gmra.mrb[0].mxu0 %v346
  %v704 = vpop.f32.mrb[0].mxu0
  %v705 = vadd.f32 %v148, %v704
  %v706 = vpop.f32.mrb[0].mxu0
  %v707 = vpop.f32.mrb[0].mxu0
  %v708 = vadd.f32 %v148, %v707
  %v709 = vpop.f32.mrb[0].mxu0
  %710 = vmatprep.mubr.bf16.mxu0 %v351
  %711 = vmatmul.mubr.bf16.gmra.mrb[0].mxu0 %v350
  %v712 = vpop.f32.mrb[0].mxu0
  %v713 = vadd.f32 %v148, %v712
  %v714 = vpop.f32.mrb[0].mxu0
  %v715 = vpop.f32.mrb[0].mxu0
  %v716 = vadd.f32 %v148, %v715
  %v717 = vpop.f32.mrb[0].mxu0
  %718 = vmatprep.mubr.bf16.mxu0 %v355
  %719 = vmatmul.mubr.bf16.gmra.mrb[0].mxu0 %v354
  %v720 = vpop.f32.mrb[0].mxu0
  %v721 = vadd.f32 %v148, %v720
  %v722 = vpop.f32.mrb[0].mxu0
  %v723 = vpop.f32.mrb[0].mxu0
  %v724 = vadd.f32 %v148, %v723
  %v725 = vpop.f32.mrb[0].mxu0
  %726 = vmatprep.mubr.bf16.mxu0 %v359
  %727 = vmatmul.mubr.bf16.gmra.mrb[0].mxu0 %v358
  %v728 = vpop.f32.mrb[0].mxu0
  %v729 = vadd.f32 %v148, %v728
  %v730 = vpop.f32.mrb[0].mxu0
  %v731 = vpop.f32.mrb[0].mxu0
  %v732 = vadd.f32 %v148, %v731
  %v733 = vpop.f32.mrb[0].mxu0
  %734 = vmatprep.mubr.bf16.mxu0 %v363
  %735 = vmatmul.mubr.bf16.gmra.mrb[0].mxu0 %v362
  %v736 = vpop.f32.mrb[0].mxu0
  %v737 = vadd.f32 %v148, %v736
  %v738 = vpop.f32.mrb[0].mxu0
  %v739 = vpop.f32.mrb[0].mxu0
  %v740 = vadd.f32 %v148, %v739
  %v741 = vpop.f32.mrb[0].mxu0
  %742 = vmatprep.mubr.bf16.mxu0 %v367
  %743 = vmatmul.mubr.bf16.gmra.mrb[0].mxu0 %v366
  %v744 = vpop.f32.mrb[0].mxu0
  %v745 = vadd.f32 %v148, %v744
  %v746 = vpop.f32.mrb[0].mxu0
  %v747 = vpop.f32.mrb[0].mxu0
  %v748 = vadd.f32 %v148, %v747
  %v749 = vpop.f32.mrb[0].mxu0
  %750 = vmatprep.mubr.bf16.mxu0 %v371
  %751 = vmatmul.mubr.bf16.gmra.mrb[0].mxu0 %v370
  %v752 = vpop.f32.mrb[0].mxu0
  %v753 = vadd.f32 %v148, %v752
  %v754 = vpop.f32.mrb[0].mxu0
  %v755 = vpop.f32.mrb[0].mxu0
  %v756 = vadd.f32 %v148, %v755
  %v757 = vpop.f32.mrb[0].mxu0
  %758 = vmatprep.mubr.bf16.mxu0 %v375
  %759 = vmatmul.mubr.bf16.gmra.mrb[0].mxu0 %v374
  %v760 = vpop.f32.mrb[0].mxu0
  %v761 = vadd.f32 %v148, %v760
  %v762 = vpop.f32.mrb[0].mxu0
  %v763 = vpop.f32.mrb[0].mxu0
  %v764 = vadd.f32 %v148, %v763
  %v765 = vpop.f32.mrb[0].mxu0
  %766 = vmatprep.mubr.bf16.mxu0 %v379
  %767 = vmatmul.mubr.bf16.gmra.mrb[0].mxu0 %v378
  %v768 = vpop.f32.mrb[0].mxu0
  %v769 = vadd.f32 %v148, %v768
  %v770 = vpop.f32.mrb[0].mxu0
  %v771 = vpop.f32.mrb[0].mxu0
  %v772 = vadd.f32 %v148, %v771
  %v773 = vpop.f32.mrb[0].mxu0
  %774 = vmatprep.mubr.bf16.mxu0 %v383
  %775 = vmatmul.mubr.bf16.gmra.mrb[0].mxu0 %v382
  %v776 = vpop.f32.mrb[0].mxu0
  %v777 = vadd.f32 %v148, %v776
  %v778 = vpop.f32.mrb[0].mxu0
  %v779 = vpop.f32.mrb[0].mxu0
  %v780 = vadd.f32 %v148, %v779
  %v781 = vpop.f32.mrb[0].mxu0
  %782 = vmatprep.mubr.bf16.mxu0 %v387
  %783 = vmatmul.mubr.bf16.gmra.mrb[0].mxu0 %v386
  %v784 = vpop.f32.mrb[0].mxu0
  %v785 = vadd.f32 %v148, %v784
  %v786 = vpop.f32.mrb[0].mxu0
  %v787 = vpop.f32.mrb[0].mxu0
  %v788 = vadd.f32 %v148, %v787
  %v789 = vpop.f32.mrb[0].mxu0
  %790 = vmatprep.mubr.bf16.mxu0 %v391
  %791 = vmatmul.mubr.bf16.gmra.mrb[0].mxu0 %v390
  %v792 = vpop.f32.mrb[0].mxu0
  %v793 = vadd.f32 %v148, %v792
  %v794 = vpop.f32.mrb[0].mxu0
  %v795 = vpop.f32.mrb[0].mxu0
  %v796 = vadd.f32 %v148, %v795
  %v797 = vpop.f32.mrb[0].mxu0
  %798 = vmatprep.mubr.bf16.mxu0 %v395
  %799 = vmatmul.mubr.bf16.gmra.mrb[0].mxu0 %v394
  %v800 = vpop.f32.mrb[0].mxu0
  %v801 = vadd.f32 %v148, %v800
  %v802 = vpop.f32.mrb[0].mxu0
  %v803 = vpop.f32.mrb[0].mxu0
  %v804 = vadd.f32 %v148, %v803
  %v805 = vpop.f32.mrb[0].mxu0
  %806 = vmatprep.mubr.bf16.mxu0 %v399
  %807 = vmatmul.mubr.bf16.gmra.mrb[0].mxu0 %v398
  %v808 = vpop.f32.mrb[0].mxu0
  %v809 = vadd.f32 %v148, %v808
  %v810 = vpop.f32.mrb[0].mxu0
  %v811 = vpop.f32.mrb[0].mxu0
  %v812 = vadd.f32 %v148, %v811
  %v813 = vpop.f32.mrb[0].mxu0
  %814 = vmatprep.mubr.bf16.mxu0 %v403
  %815 = vmatmul.mubr.bf16.gmra.mrb[0].mxu0 %v402
  %v816 = vpop.f32.mrb[0].mxu0
  %v817 = vadd.f32 %v148, %v816
  %v818 = vpop.f32.mrb[0].mxu0
  %v819 = vpop.f32.mrb[0].mxu0
  %v820 = vadd.f32 %v148, %v819
  %v821 = vpop.f32.mrb[0].mxu0
  %822 = vdwg.mxu0
  %823 = vmatprep.subr.bf16.mxu0 0
  %824 = vmatpush1.bf16.msra.mxu0 %v614
  %825 = vmatprep.subr.bf16.mxu0 0
  %826 = vmatpush1.bf16.msra.mxu0 %v615
  %827 = vmatprep.subr.bf16.mxu0 0
  %828 = vmatpush1.bf16.msra.mxu0 %v616
  %829 = vmatprep.subr.bf16.mxu0 0
  %830 = vmatpush1.bf16.msra.mxu0 %v617
  %831 = vmatprep.subr.bf16.mxu0 0
  %832 = vmatpush1.bf16.msra.mxu0 %v618
  %833 = vmatprep.subr.bf16.mxu0 0
  %834 = vmatpush1.bf16.msra.mxu0 %v619
  %835 = vmatprep.subr.bf16.mxu0 0
  %836 = vmatpush1.bf16.msra.mxu0 %v620
  %837 = vmatprep.subr.bf16.mxu0 0
  %838 = vmatpush1.bf16.msra.mxu0 %v621
  %839 = vmatprep.subr.bf16.mxu0 0
  %840 = vmatpush1.bf16.msra.mxu0 %v622
  %841 = vmatprep.subr.bf16.mxu0 0
  %842 = vmatpush1.bf16.msra.mxu0 %v623
  %843 = vmatprep.subr.bf16.mxu0 0
  %844 = vmatpush1.bf16.msra.mxu0 %v624
  %845 = vmatprep.subr.bf16.mxu0 0
  %846 = vmatpush1.bf16.msra.mxu0 %v625
  %847 = vmatprep.subr.bf16.mxu0 0
  %848 = vmatpush1.bf16.msra.mxu0 %v626
  %849 = vmatprep.subr.bf16.mxu0 0
  %850 = vmatpush1.bf16.msra.mxu0 %v627
  %851 = vmatprep.subr.bf16.mxu0 0
  %852 = vmatpush1.bf16.msra.mxu0 %v628
  %853 = vmatprep.subr.bf16.mxu0 0
  %854 = vmatpush1.bf16.msra.mxu0 %v629
  %855 = vmatprep.mubr.bf16.mxu0 %v345
  %856 = vmatmul.mubr.bf16.gmra.mrb[0].mxu0 %v344
  %v857 = vpop.f32.mrb[0].mxu0
  %v858 = vadd.f32 %v697, %v857
  %v859 = vpop.f32.mrb[0].mxu0
  %v860 = vpop.f32.mrb[0].mxu0
  %v861 = vadd.f32 %v700, %v860
  %v862 = vpop.f32.mrb[0].mxu0
  %863 = vmatprep.mubr.bf16.mxu0 %v349
  %864 = vmatmul.mubr.bf16.gmra.mrb[0].mxu0 %v348
  %v865 = vpop.f32.mrb[0].mxu0
  %v866 = vadd.f32 %v705, %v865
  %v867 = vpop.f32.mrb[0].mxu0
  %v868 = vpop.f32.mrb[0].mxu0
  %v869 = vadd.f32 %v708, %v868
  %v870 = vpop.f32.mrb[0].mxu0
  %871 = vmatprep.mubr.bf16.mxu0 %v353
  %872 = vmatmul.mubr.bf16.gmra.mrb[0].mxu0 %v352
  %v873 = vpop.f32.mrb[0].mxu0
  %v874 = vadd.f32 %v713, %v873
  %v875 = vpop.f32.mrb[0].mxu0
  %v876 = vpop.f32.mrb[0].mxu0
  %v877 = vadd.f32 %v716, %v876
  %v878 = vpop.f32.mrb[0].mxu0
  %879 = vmatprep.mubr.bf16.mxu0 %v357
  %880 = vmatmul.mubr.bf16.gmra.mrb[0].mxu0 %v356
  %v881 = vpop.f32.mrb[0].mxu0
  %v882 = vadd.f32 %v721, %v881
  %v883 = vpop.f32.mrb[0].mxu0
  %v884 = vpop.f32.mrb[0].mxu0
  %v885 = vadd.f32 %v724, %v884
  %v886 = vpop.f32.mrb[0].mxu0
  %887 = vmatprep.mubr.bf16.mxu0 %v361
  %888 = vmatmul.mubr.bf16.gmra.mrb[0].mxu0 %v360
  %v889 = vpop.f32.mrb[0].mxu0
  %v890 = vadd.f32 %v729, %v889
  %v891 = vpop.f32.mrb[0].mxu0
  %v892 = vpop.f32.mrb[0].mxu0
  %v893 = vadd.f32 %v732, %v892
  %v894 = vpop.f32.mrb[0].mxu0
  %895 = vmatprep.mubr.bf16.mxu0 %v365
  %896 = vmatmul.mubr.bf16.gmra.mrb[0].mxu0 %v364
  %v897 = vpop.f32.mrb[0].mxu0
  %v898 = vadd.f32 %v737, %v897
  %v899 = vpop.f32.mrb[0].mxu0
  %v900 = vpop.f32.mrb[0].mxu0
  %v901 = vadd.f32 %v740, %v900
  %v902 = vpop.f32.mrb[0].mxu0
  %903 = vmatprep.mubr.bf16.mxu0 %v369
  %904 = vmatmul.mubr.bf16.gmra.mrb[0].mxu0 %v368
  %v905 = vpop.f32.mrb[0].mxu0
  %v906 = vadd.f32 %v745, %v905
  %v907 = vpop.f32.mrb[0].mxu0
  %v908 = vpop.f32.mrb[0].mxu0
  %v909 = vadd.f32 %v748, %v908
  %v910 = vpop.f32.mrb[0].mxu0
  %911 = vmatprep.mubr.bf16.mxu0 %v373
  %912 = vmatmul.mubr.bf16.gmra.mrb[0].mxu0 %v372
  %v913 = vpop.f32.mrb[0].mxu0
  %v914 = vadd.f32 %v753, %v913
  %v915 = vpop.f32.mrb[0].mxu0
  %v916 = vpop.f32.mrb[0].mxu0
  %v917 = vadd.f32 %v756, %v916
  %v918 = vpop.f32.mrb[0].mxu0
  %919 = vmatprep.mubr.bf16.mxu0 %v377
  %920 = vmatmul.mubr.bf16.gmra.mrb[0].mxu0 %v376
  %v921 = vpop.f32.mrb[0].mxu0
  %v922 = vadd.f32 %v761, %v921
  %v923 = vpop.f32.mrb[0].mxu0
  %v924 = vpop.f32.mrb[0].mxu0
  %v925 = vadd.f32 %v764, %v924
  %v926 = vpop.f32.mrb[0].mxu0
  %927 = vmatprep.mubr.bf16.mxu0 %v381
  %928 = vmatmul.mubr.bf16.gmra.mrb[0].mxu0 %v380
  %v929 = vpop.f32.mrb[0].mxu0
  %v930 = vadd.f32 %v769, %v929
  %v931 = vpop.f32.mrb[0].mxu0
  %v932 = vpop.f32.mrb[0].mxu0
  %v933 = vadd.f32 %v772, %v932
  %v934 = vpop.f32.mrb[0].mxu0
  %935 = vmatprep.mubr.bf16.mxu0 %v385
  %936 = vmatmul.mubr.bf16.gmra.mrb[0].mxu0 %v384
  %v937 = vpop.f32.mrb[0].mxu0
  %v938 = vadd.f32 %v777, %v937
  %v939 = vpop.f32.mrb[0].mxu0
  %v940 = vpop.f32.mrb[0].mxu0
  %v941 = vadd.f32 %v780, %v940
  %v942 = vpop.f32.mrb[0].mxu0
  %943 = vmatprep.mubr.bf16.mxu0 %v389
  %944 = vmatmul.mubr.bf16.gmra.mrb[0].mxu0 %v388
  %v945 = vpop.f32.mrb[0].mxu0
  %v946 = vadd.f32 %v785, %v945
  %v947 = vpop.f32.mrb[0].mxu0
  %v948 = vpop.f32.mrb[0].mxu0
  %v949 = vadd.f32 %v788, %v948
  %v950 = vpop.f32.mrb[0].mxu0
  %951 = vmatprep.mubr.bf16.mxu0 %v393
  %952 = vmatmul.mubr.bf16.gmra.mrb[0].mxu0 %v392
  %v953 = vpop.f32.mrb[0].mxu0
  %v954 = vadd.f32 %v793, %v953
  %v955 = vpop.f32.mrb[0].mxu0
  %v956 = vpop.f32.mrb[0].mxu0
  %v957 = vadd.f32 %v796, %v956
  %v958 = vpop.f32.mrb[0].mxu0
  %959 = vmatprep.mubr.bf16.mxu0 %v397
  %960 = vmatmul.mubr.bf16.gmra.mrb[0].mxu0 %v396
  %v961 = vpop.f32.mrb[0].mxu0
  %v962 = vadd.f32 %v801, %v961
  %v963 = vpop.f32.mrb[0].mxu0
  %v964 = vpop.f32.mrb[0].mxu0
  %v965 = vadd.f32 %v804, %v964
  %v966 = vpop.f32.mrb[0].mxu0
  %967 = vmatprep.mubr.bf16.mxu0 %v401
  %968 = vmatmul.mubr.bf16.gmra.mrb[0].mxu0 %v400
  %v969 = vpop.f32.mrb[0].mxu0
  %v970 = vadd.f32 %v809, %v969
  %v971 = vpop.f32.mrb[0].mxu0
  %v972 = vpop.f32.mrb[0].mxu0
  %v973 = vadd.f32 %v812, %v972
  %v974 = vpop.f32.mrb[0].mxu0
  %975 = vmatprep.mubr.bf16.mxu0 %v405
  %976 = vmatmul.mubr.bf16.gmra.mrb[0].mxu0 %v404
  %v977 = vpop.f32.mrb[0].mxu0
  %v978 = vadd.f32 %v817, %v977
  %v979 = vpop.f32.mrb[0].mxu0
  %v980 = vpop.f32.mrb[0].mxu0
  %v981 = vadd.f32 %v820, %v980
  %v982 = vpop.f32.mrb[0].mxu0
  %983 = vdwg.mxu0
  %v984 = vmax.f32 %v858, 0.0
  %v985 = vmax.f32 %v861, 0.0
  %v986 = vmax.f32 %v866, 0.0
  %v987 = vmax.f32 %v869, 0.0
  %v988 = vmax.f32 %v874, 0.0
  %v989 = vmax.f32 %v877, 0.0
  %v990 = vmax.f32 %v882, 0.0
  %v991 = vmax.f32 %v885, 0.0
  %v992 = vmax.f32 %v890, 0.0
  %v993 = vmax.f32 %v893, 0.0
  %v994 = vmax.f32 %v898, 0.0
  %v995 = vmax.f32 %v901, 0.0
  %v996 = vmax.f32 %v906, 0.0
  %v997 = vmax.f32 %v909, 0.0
  %v998 = vmax.f32 %v914, 0.0
  %v999 = vmax.f32 %v917, 0.0
  %v1000 = vmax.f32 %v922, 0.0
  %v1001 = vmax.f32 %v925, 0.0
  %v1002 = vmax.f32 %v930, 0.0
  %v1003 = vmax.f32 %v933, 0.0
  %v1004 = vmax.f32 %v938, 0.0
  %v1005 = vmax.f32 %v941, 0.0
  %v1006 = vmax.f32 %v946, 0.0
  %v1007 = vmax.f32 %v949, 0.0
  %v1008 = vmax.f32 %v954, 0.0
  %v1009 = vmax.f32 %v957, 0.0
  %v1010 = vmax.f32 %v962, 0.0
  %v1011 = vmax.f32 %v965, 0.0
  %v1012 = vmax.f32 %v970, 0.0
  %v1013 = vmax.f32 %v973, 0.0
  %v1014 = vmax.f32 %v978, 0.0
  %v1015 = vmax.f32 %v981, 0.0
  %v1016 = vpack.c.bf16 %v985, %v984
  %v1017 = vpack.c.bf16 %v987, %v986
  %v1018 = vpack.c.bf16 %v989, %v988
  %v1019 = vpack.c.bf16 %v991, %v990
  %v1020 = vpack.c.bf16 %v993, %v992
  %v1021 = vpack.c.bf16 %v995, %v994
  %v1022 = vpack.c.bf16 %v997, %v996
  %v1023 = vpack.c.bf16 %v999, %v998
  %v1024 = vpack.c.bf16 %v1001, %v1000
  %v1025 = vpack.c.bf16 %v1003, %v1002
  %v1026 = vpack.c.bf16 %v1005, %v1004
  %v1027 = vpack.c.bf16 %v1007, %v1006
  %v1028 = vpack.c.bf16 %v1009, %v1008
  %v1029 = vpack.c.bf16 %v1011, %v1010
  %v1030 = vpack.c.bf16 %v1013, %v1012
  %v1031 = vpack.c.bf16 %v1015, %v1014
  %v1048 = vunpack.c.l.b16 %v1016
  %v1049 = vunpack.c.h.b16 %v1016
  %v1050 = vunpack.c.l.b16 %v1017
  %v1051 = vunpack.c.h.b16 %v1017
  %v1052 = vunpack.c.l.b16 %v1018
  %v1053 = vunpack.c.h.b16 %v1018
  %v1054 = vunpack.c.l.b16 %v1019
  %v1055 = vunpack.c.h.b16 %v1019
  %v1056 = vunpack.c.l.b16 %v1020
  %v1057 = vunpack.c.h.b16 %v1020
  %v1058 = vunpack.c.l.b16 %v1021
  %v1059 = vunpack.c.h.b16 %v1021
  %v1060 = vunpack.c.l.b16 %v1022
  %v1061 = vunpack.c.h.b16 %v1022
  %v1062 = vunpack.c.l.b16 %v1023
  %v1063 = vunpack.c.h.b16 %v1023
  %v1064 = vunpack.c.l.b16 %v1024
  %v1065 = vunpack.c.h.b16 %v1024
  %v1066 = vunpack.c.l.b16 %v1025
  %v1067 = vunpack.c.h.b16 %v1025
  %v1068 = vunpack.c.l.b16 %v1026
  %v1069 = vunpack.c.h.b16 %v1026
  %v1070 = vunpack.c.l.b16 %v1027
  %v1071 = vunpack.c.h.b16 %v1027
  %v1072 = vunpack.c.l.b16 %v1028
  %v1073 = vunpack.c.h.b16 %v1028
  %v1074 = vunpack.c.l.b16 %v1029
  %v1075 = vunpack.c.h.b16 %v1029
  %v1076 = vunpack.c.l.b16 %v1030
  %v1077 = vunpack.c.h.b16 %v1030
  %v1078 = vunpack.c.l.b16 %v1031
  %v1079 = vunpack.c.h.b16 %v1031
  %v1080 = vpack.c.b16 %v1048, %v1048
  %v1081 = vpack.c.b16 %v1049, %v1049
  %v1082 = vpack.c.b16 %v1050, %v1050
  %v1083 = vpack.c.b16 %v1051, %v1051
  %v1084 = vpack.c.b16 %v1052, %v1052
  %v1085 = vpack.c.b16 %v1053, %v1053
  %v1086 = vpack.c.b16 %v1054, %v1054
  %v1087 = vpack.c.b16 %v1055, %v1055
  %v1088 = vpack.c.b16 %v1056, %v1056
  %v1089 = vpack.c.b16 %v1057, %v1057
  %v1090 = vpack.c.b16 %v1058, %v1058
  %v1091 = vpack.c.b16 %v1059, %v1059
  %v1092 = vpack.c.b16 %v1060, %v1060
  %v1093 = vpack.c.b16 %v1061, %v1061
  %v1094 = vpack.c.b16 %v1062, %v1062
  %v1095 = vpack.c.b16 %v1063, %v1063
  %v1096 = vpack.c.b16 %v1064, %v1064
  %v1097 = vpack.c.b16 %v1065, %v1065
  %v1098 = vpack.c.b16 %v1066, %v1066
  %v1099 = vpack.c.b16 %v1067, %v1067
  %v1100 = vpack.c.b16 %v1068, %v1068
  %v1101 = vpack.c.b16 %v1069, %v1069
  %v1102 = vpack.c.b16 %v1070, %v1070
  %v1103 = vpack.c.b16 %v1071, %v1071
  %v1104 = vpack.c.b16 %v1072, %v1072
  %v1105 = vpack.c.b16 %v1073, %v1073
  %v1106 = vpack.c.b16 %v1074, %v1074
  %v1107 = vpack.c.b16 %v1075, %v1075
  %v1108 = vpack.c.b16 %v1076, %v1076
  %v1109 = vpack.c.b16 %v1077, %v1077
  %v1110 = vpack.c.b16 %v1078, %v1078
  %v1111 = vpack.c.b16 %v1079, %v1079
  %vm1144 = vcmask 519168
  %1145 = vst.msk [vmem:[%s3] sm:$0xf] %vm1144, %v1080
  %1146 = vst.msk [vmem:[%s3 + $0x4] sm:$0xf] %vm1144, %v1081
  %1147 = vst.msk [vmem:[%s3 + $0x8] sm:$0xf] %vm1144, %v1082
  %1148 = vst.msk [vmem:[%s3 + $0xc] sm:$0xf] %vm1144, %v1083
  %1149 = vst.msk [vmem:[%s3 + $0x10] sm:$0xf] %vm1144, %v1084
  %1150 = vst.msk [vmem:[%s3 + $0x14] sm:$0xf] %vm1144, %v1085
  %1151 = vst.msk [vmem:[%s3 + $0x18] sm:$0xf] %vm1144, %v1086
  %1152 = vst.msk [vmem:[%s3 + $0x1c] sm:$0xf] %vm1144, %v1087
  %1153 = vst.msk [vmem:[%s3 + $0x20] sm:$0xf] %vm1144, %v1088
  %1154 = vst.msk [vmem:[%s3 + $0x24] sm:$0xf] %vm1144, %v1089
  %1155 = vst.msk [vmem:[%s3 + $0x28] sm:$0xf] %vm1144, %v1090
  %1156 = vst.msk [vmem:[%s3 + $0x2c] sm:$0xf] %vm1144, %v1091
  %1157 = vst.msk [vmem:[%s3 + $0x30] sm:$0xf] %vm1144, %v1092
  %1158 = vst.msk [vmem:[%s3 + $0x34] sm:$0xf] %vm1144, %v1093
  %1159 = vst.msk [vmem:[%s3 + $0x38] sm:$0xf] %vm1144, %v1094
  %1160 = vst.msk [vmem:[%s3 + $0x3c] sm:$0xf] %vm1144, %v1095
  %1161 = vst.msk [vmem:[%s3 + $0x40] sm:$0xf] %vm1144, %v1096
  %1162 = vst.msk [vmem:[%s3 + $0x44] sm:$0xf] %vm1144, %v1097
  %1163 = vst.msk [vmem:[%s3 + $0x48] sm:$0xf] %vm1144, %v1098
  %1164 = vst.msk [vmem:[%s3 + $0x4c] sm:$0xf] %vm1144, %v1099
  %1165 = vst.msk [vmem:[%s3 + $0x50] sm:$0xf] %vm1144, %v1100
  %1166 = vst.msk [vmem:[%s3 + $0x54] sm:$0xf] %vm1144, %v1101
  %1167 = vst.msk [vmem:[%s3 + $0x58] sm:$0xf] %vm1144, %v1102
  %1168 = vst.msk [vmem:[%s3 + $0x5c] sm:$0xf] %vm1144, %v1103
  %1169 = vst.msk [vmem:[%s3 + $0x60] sm:$0xf] %vm1144, %v1104
  %1170 = vst.msk [vmem:[%s3 + $0x64] sm:$0xf] %vm1144, %v1105
  %1171 = vst.msk [vmem:[%s3 + $0x68] sm:$0xf] %vm1144, %v1106
  %1172 = vst.msk [vmem:[%s3 + $0x6c] sm:$0xf] %vm1144, %v1107
  %1173 = vst.msk [vmem:[%s3 + $0x70] sm:$0xf] %vm1144, %v1108
  %1174 = vst.msk [vmem:[%s3 + $0x74] sm:$0xf] %vm1144, %v1109
  %1175 = vst.msk [vmem:[%s3 + $0x78] sm:$0xf] %vm1144, %v1110
  %1176 = vst.msk [vmem:[%s3 + $0x7c] sm:$0xf] %vm1144, %v1111
  // Predicated region
  $region14: #{cnn_lstm_actor_forward.5} parent=0 // pred_check
    _
  $region15: #{cnn_lstm_actor_forward.5} parent=0 // pred_check_branch
    %1178 = sbr.rel (0) target = $region17
  $region16: #{cnn_lstm_actor_forward.5} parent=0 // pred_region
    _
  $region17: #{cnn_lstm_actor_forward.5} parent=0 // pred_fallthru
    _
  // Predicated region
  $region18: #{cnn_lstm_actor_forward.5} parent=0 // pred_check
    _
  $region19: #{cnn_lstm_actor_forward.5} parent=0 // pred_check_branch
    %1180 = sbr.rel (0) target = $region21
  $region20: #{cnn_lstm_actor_forward.5} parent=0 // pred_region
    _
  $region21: #{cnn_lstm_actor_forward.5} parent=0 // pred_fallthru
    _

// kernel: cnn_lstm_actor_forward.6
$region0: #{cnn_lstm_actor_forward.6}
  #allocation0 [shape = 'u32[]', space=smem, size = 0x4, offset = 0x4, fixed_abs, tag = 'smem constant byte address 0x4 - core index']
  #allocation1 [shape = 'u32[144,128]{1,0:T(1,128)}', space=vmem, size = 0x12000, scoped, tag = 'internal scratch']
  %s0 = inlined_call_operand.vmem [shape: bf16[64,576], index: 0, kind: input, shape index: {}]
  %s1 = inlined_call_operand.vmem [shape: bf16[576,64], index: 1, kind: input, shape index: {}]
  %s2 = inlined_call_operand.vmem [shape: f32[1,64], index: 2, kind: input, shape index: {}]
  %s3 = inlined_call_operand.vmem [shape: f32[64,64], index: 3, kind: output, shape index: {}]
  %s4 = sld [smem:[#allocation0]]
  $region22: #{cnn_lstm_actor_forward.6} parent=0
    _
  %s6 = ssub.s32 1, %s4
  %s7 = scalar_select 0, %s6, %s4
  // Predicated region
  $region2: #{cnn_lstm_actor_forward.6} parent=0 // pred_check
    _
  $region3: #{cnn_lstm_actor_forward.6} parent=0 // pred_check_branch
    %9 = sbr.rel (0) target = $region5
  $region4: #{cnn_lstm_actor_forward.6} parent=0 // pred_region
    _
  $region5: #{cnn_lstm_actor_forward.6} parent=0 // pred_fallthru
    _
  // Predicated region
  $region6: #{cnn_lstm_actor_forward.6} parent=0 // pred_check
    _
  $region7: #{cnn_lstm_actor_forward.6} parent=0 // pred_check_branch
    %11 = sbr.rel (0) target = $region9
  $region8: #{cnn_lstm_actor_forward.6} parent=0 // pred_region
    _
  $region9: #{cnn_lstm_actor_forward.6} parent=0 // pred_fallthru
    _
  // Predicated region
  $region10: #{cnn_lstm_actor_forward.6} parent=0 // pred_check
    _
  $region11: #{cnn_lstm_actor_forward.6} parent=0 // pred_check_branch
    %13 = sbr.rel (0) target = $region13
  $region12: #{cnn_lstm_actor_forward.6} parent=0 // pred_region
    _
  $region13: #{cnn_lstm_actor_forward.6} parent=0 // pred_fallthru
    _
  %v15 = vld [vmem:[%s0] sm:$0xff]
  %v16 = vld [vmem:[%s0 + $0x8] sm:$0xff]
  %v17 = vld [vmem:[%s0 + $0x10] sm:$0xf]
  %v18 = vld [vmem:[%s0 + $0x14] sm:$0xff]
  %v19 = vld [vmem:[%s0 + $0x1c] sm:$0xff]
  %v20 = vld [vmem:[%s0 + $0x24] sm:$0xf]
  %v21 = vld [vmem:[%s0 + $0x28] sm:$0xff]
  %v22 = vld [vmem:[%s0 + $0x30] sm:$0xff]
  %v23 = vld [vmem:[%s0 + $0x38] sm:$0xf]
  %v24 = vld [vmem:[%s0 + $0x3c] sm:$0xff]
  %v25 = vld [vmem:[%s0 + $0x44] sm:$0xff]
  %v26 = vld [vmem:[%s0 + $0x4c] sm:$0xf]
  %v27 = vld [vmem:[%s0 + $0x50] sm:$0xff]
  %v28 = vld [vmem:[%s0 + $0x58] sm:$0xff]
  %v29 = vld [vmem:[%s0 + $0x60] sm:$0xf]
  %v30 = vld [vmem:[%s0 + $0x64] sm:$0xff]
  %v31 = vld [vmem:[%s0 + $0x6c] sm:$0xff]
  %v32 = vld [vmem:[%s0 + $0x74] sm:$0xf]
  %v33 = vld [vmem:[%s0 + $0x78] sm:$0xff]
  %v34 = vld [vmem:[%s0 + $0x80] sm:$0xff]
  %v35 = vld [vmem:[%s0 + $0x88] sm:$0xf]
  %v36 = vld [vmem:[%s0 + $0x8c] sm:$0xff]
  %v37 = vld [vmem:[%s0 + $0x94] sm:$0xff]
  %v38 = vld [vmem:[%s0 + $0x9c] sm:$0xf]
  %v39 = vld [vmem:[%s1] sm:$0xf]
  %v40 = vld [vmem:[%s1 + $0x4] sm:$0xf]
  %v41 = vld [vmem:[%s1 + $0x8] sm:$0xf]
  %v42 = vld [vmem:[%s1 + $0xc] sm:$0xf]
  %v43 = vld [vmem:[%s1 + $0x10] sm:$0xf]
  %v44 = vld [vmem:[%s1 + $0x14] sm:$0xf]
  %v45 = vld [vmem:[%s1 + $0x18] sm:$0xf]
  %v46 = vld [vmem:[%s1 + $0x1c] sm:$0xf]
  %v47 = vld [vmem:[%s1 + $0x20] sm:$0xf]
  %v48 = vld [vmem:[%s1 + $0x24] sm:$0xf]
  %v49 = vld [vmem:[%s1 + $0x28] sm:$0xf]
  %v50 = vld [vmem:[%s1 + $0x2c] sm:$0xf]
  %v51 = vld [vmem:[%s1 + $0x30] sm:$0xf]
  %v52 = vld [vmem:[%s1 + $0x34] sm:$0xf]
  %v53 = vld [vmem:[%s1 + $0x38] sm:$0xf]
  %v54 = vld [vmem:[%s1 + $0x3c] sm:$0xf]
  %v55 = vld [vmem:[%s1 + $0x40] sm:$0xf]
  %v56 = vld [vmem:[%s1 + $0x44] sm:$0xf]
  %v57 = vld [vmem:[%s1 + $0x48] sm:$0xf]
  %v58 = vld [vmem:[%s1 + $0x4c] sm:$0xf]
  %v59 = vld [vmem:[%s1 + $0x50] sm:$0xf]
  %v60 = vld [vmem:[%s1 + $0x54] sm:$0xf]
  %v61 = vld [vmem:[%s1 + $0x58] sm:$0xf]
  %v62 = vld [vmem:[%s1 + $0x5c] sm:$0xf]
  %v63 = vld [vmem:[%s1 + $0x60] sm:$0xf]
  %v64 = vld [vmem:[%s1 + $0x64] sm:$0xf]
  %v65 = vld [vmem:[%s1 + $0x68] sm:$0xf]
  %v66 = vld [vmem:[%s1 + $0x6c] sm:$0xf]
  %v67 = vld [vmem:[%s1 + $0x70] sm:$0xf]
  %v68 = vld [vmem:[%s1 + $0x74] sm:$0xf]
  %v69 = vld [vmem:[%s1 + $0x78] sm:$0xf]
  %v70 = vld [vmem:[%s1 + $0x7c] sm:$0xf]
  %v71 = vld [vmem:[%s1 + $0x80] sm:$0xf]
  %v72 = vld [vmem:[%s1 + $0x84] sm:$0xf]
  %v73 = vld [vmem:[%s1 + $0x88] sm:$0xf]
  %v74 = vld [vmem:[%s1 + $0x8c] sm:$0xf]
  %v75 = vld [vmem:[%s1 + $0x90] sm:$0xf]
  %v76 = vld [vmem:[%s1 + $0x94] sm:$0xf]
  %v77 = vld [vmem:[%s1 + $0x98] sm:$0xf]
  %v78 = vld [vmem:[%s1 + $0x9c] sm:$0xf]
  %v79 = vld [vmem:[%s1 + $0xa0] sm:$0xf]
  %v80 = vld [vmem:[%s1 + $0xa4] sm:$0xf]
  %v81 = vld [vmem:[%s1 + $0xa8] sm:$0xf]
  %v82 = vld [vmem:[%s1 + $0xac] sm:$0xf]
  %v83 = vld [vmem:[%s1 + $0xb0] sm:$0xf]
  %v84 = vld [vmem:[%s1 + $0xb4] sm:$0xf]
  %v85 = vld [vmem:[%s1 + $0xb8] sm:$0xf]
  %v86 = vld [vmem:[%s1 + $0xbc] sm:$0xf]
  %v87 = vld [vmem:[%s1 + $0xc0] sm:$0xf]
  %v88 = vld [vmem:[%s1 + $0xc4] sm:$0xf]
  %v89 = vld [vmem:[%s1 + $0xc8] sm:$0xf]
  %v90 = vld [vmem:[%s1 + $0xcc] sm:$0xf]
  %v91 = vld [vmem:[%s1 + $0xd0] sm:$0xf]
  %v92 = vld [vmem:[%s1 + $0xd4] sm:$0xf]
  %v93 = vld [vmem:[%s1 + $0xd8] sm:$0xf]
  %v94 = vld [vmem:[%s1 + $0xdc] sm:$0xf]
  %v95 = vld [vmem:[%s1 + $0xe0] sm:$0xf]
  %v96 = vld [vmem:[%s1 + $0xe4] sm:$0xf]
  %v97 = vld [vmem:[%s1 + $0xe8] sm:$0xf]
  %v98 = vld [vmem:[%s1 + $0xec] sm:$0xf]
  %v99 = vld [vmem:[%s1 + $0xf0] sm:$0xf]
  %v100 = vld [vmem:[%s1 + $0xf4] sm:$0xf]
  %v101 = vld [vmem:[%s1 + $0xf8] sm:$0xf]
  %v102 = vld [vmem:[%s1 + $0xfc] sm:$0xf]
  %v103 = vld [vmem:[%s1 + $0x100] sm:$0xf]
  %v104 = vld [vmem:[%s1 + $0x104] sm:$0xf]
  %v105 = vld [vmem:[%s1 + $0x108] sm:$0xf]
  %v106 = vld [vmem:[%s1 + $0x10c] sm:$0xf]
  %v107 = vld [vmem:[%s1 + $0x110] sm:$0xf]
  %v108 = vld [vmem:[%s1 + $0x114] sm:$0xf]
  %v109 = vld [vmem:[%s1 + $0x118] sm:$0xf]
  %v110 = vld [vmem:[%s1 + $0x11c] sm:$0xf]
  %v111 = vld [vmem:[%s2] sm:$0x1]
  %v113 = vlaneseq
  %v114 = vshrl.u32 %v113, 7
  %v115 = vsub.s32 0, %v114
  %v116 = vrot.slane %v111, %v115
  %v142 = vunpack.c.l.b16 %v15
  %v143 = vunpack.c.h.b16 %v15
  %v144 = vunpack.c.l.b16 %v16
  %v145 = vunpack.c.h.b16 %v16
  %v146 = vunpack.c.l.b16 %v17
  %v147 = vunpack.c.l.b16 %v18
  %v148 = vunpack.c.h.b16 %v18
  %v149 = vunpack.c.l.b16 %v19
  %v150 = vunpack.c.h.b16 %v19
  %v151 = vunpack.c.l.b16 %v20
  %v152 = vunpack.c.l.b16 %v21
  %v153 = vunpack.c.h.b16 %v21
  %v154 = vunpack.c.l.b16 %v22
  %v155 = vunpack.c.h.b16 %v22
  %v156 = vunpack.c.l.b16 %v23
  %v157 = vunpack.c.l.b16 %v24
  %v158 = vunpack.c.h.b16 %v24
  %v159 = vunpack.c.l.b16 %v25
  %v160 = vunpack.c.h.b16 %v25
  %v161 = vunpack.c.l.b16 %v26
  %v162 = vunpack.c.l.b16 %v27
  %v163 = vunpack.c.h.b16 %v27
  %v164 = vunpack.c.l.b16 %v28
  %v165 = vunpack.c.h.b16 %v28
  %v166 = vunpack.c.l.b16 %v29
  %v167 = vunpack.c.l.b16 %v30
  %v168 = vunpack.c.h.b16 %v30
  %v169 = vunpack.c.l.b16 %v31
  %v170 = vunpack.c.h.b16 %v31
  %v171 = vunpack.c.l.b16 %v32
  %v172 = vunpack.c.l.b16 %v33
  %v173 = vunpack.c.h.b16 %v33
  %v174 = vunpack.c.l.b16 %v34
  %v175 = vunpack.c.h.b16 %v34
  %v176 = vunpack.c.l.b16 %v35
  %v177 = vunpack.c.l.b16 %v36
  %v178 = vunpack.c.h.b16 %v36
  %v179 = vunpack.c.l.b16 %v37
  %v180 = vunpack.c.h.b16 %v37
  %v181 = vunpack.c.l.b16 %v38
  %v182 = vpack.c.b16 %v147, %v142
  %v183 = vpack.c.b16 %v148, %v143
  %v184 = vpack.c.b16 %v149, %v144
  %v185 = vpack.c.b16 %v150, %v145
  %v186 = vpack.c.b16 %v151, %v146
  %v187 = vpack.c.b16 %v157, %v152
  %v188 = vpack.c.b16 %v158, %v153
  %v189 = vpack.c.b16 %v159, %v154
  %v190 = vpack.c.b16 %v160, %v155
  %v191 = vpack.c.b16 %v161, %v156
  %v192 = vpack.c.b16 %v167, %v162
  %v193 = vpack.c.b16 %v168, %v163
  %v194 = vpack.c.b16 %v169, %v164
  %v195 = vpack.c.b16 %v170, %v165
  %v196 = vpack.c.b16 %v171, %v166
  %v197 = vpack.c.b16 %v177, %v172
  %v198 = vpack.c.b16 %v178, %v173
  %v199 = vpack.c.b16 %v179, %v174
  %v200 = vpack.c.b16 %v180, %v175
  %v201 = vpack.c.b16 %v181, %v176
  %v290 = vunpack.c.l.b16 %v39
  %v291 = vunpack.c.l.b16 %v40
  %v292 = vunpack.c.l.b16 %v41
  %v293 = vunpack.c.l.b16 %v42
  %v294 = vunpack.c.l.b16 %v43
  %v295 = vunpack.c.l.b16 %v44
  %v296 = vunpack.c.l.b16 %v45
  %v297 = vunpack.c.l.b16 %v46
  %v298 = vunpack.c.l.b16 %v47
  %v299 = vunpack.c.l.b16 %v48
  %v300 = vunpack.c.l.b16 %v49
  %v301 = vunpack.c.l.b16 %v50
  %v302 = vunpack.c.l.b16 %v51
  %v303 = vunpack.c.l.b16 %v52
  %v304 = vunpack.c.l.b16 %v53
  %v305 = vunpack.c.l.b16 %v54
  %v306 = vunpack.c.l.b16 %v55
  %v307 = vunpack.c.l.b16 %v56
  %v308 = vunpack.c.l.b16 %v57
  %v309 = vunpack.c.l.b16 %v58
  %v310 = vunpack.c.l.b16 %v59
  %v311 = vunpack.c.l.b16 %v60
  %v312 = vunpack.c.l.b16 %v61
  %v313 = vunpack.c.l.b16 %v62
  %v314 = vunpack.c.l.b16 %v63
  %v315 = vunpack.c.l.b16 %v64
  %v316 = vunpack.c.l.b16 %v65
  %v317 = vunpack.c.l.b16 %v66
  %v318 = vunpack.c.l.b16 %v67
  %v319 = vunpack.c.l.b16 %v68
  %v320 = vunpack.c.l.b16 %v69
  %v321 = vunpack.c.l.b16 %v70
  %v322 = vunpack.c.l.b16 %v71
  %v323 = vunpack.c.l.b16 %v72
  %v324 = vunpack.c.l.b16 %v73
  %v325 = vunpack.c.l.b16 %v74
  %v326 = vunpack.c.l.b16 %v75
  %v327 = vunpack.c.l.b16 %v76
  %v328 = vunpack.c.l.b16 %v77
  %v329 = vunpack.c.l.b16 %v78
  %v330 = vunpack.c.l.b16 %v79
  %v331 = vunpack.c.l.b16 %v80
  %v332 = vunpack.c.l.b16 %v81
  %v333 = vunpack.c.l.b16 %v82
  %v334 = vunpack.c.l.b16 %v83
  %v335 = vunpack.c.l.b16 %v84
  %v336 = vunpack.c.l.b16 %v85
  %v337 = vunpack.c.l.b16 %v86
  %v338 = vunpack.c.l.b16 %v87
  %v339 = vunpack.c.l.b16 %v88
  %v340 = vunpack.c.l.b16 %v89
  %v341 = vunpack.c.l.b16 %v90
  %v342 = vunpack.c.l.b16 %v91
  %v343 = vunpack.c.l.b16 %v92
  %v344 = vunpack.c.l.b16 %v93
  %v345 = vunpack.c.l.b16 %v94
  %v346 = vunpack.c.l.b16 %v95
  %v347 = vunpack.c.l.b16 %v96
  %v348 = vunpack.c.l.b16 %v97
  %v349 = vunpack.c.l.b16 %v98
  %v350 = vunpack.c.l.b16 %v99
  %v351 = vunpack.c.l.b16 %v100
  %v352 = vunpack.c.l.b16 %v101
  %v353 = vunpack.c.l.b16 %v102
  %v354 = vunpack.c.l.b16 %v103
  %v355 = vunpack.c.l.b16 %v104
  %v356 = vunpack.c.l.b16 %v105
  %v357 = vunpack.c.l.b16 %v106
  %v358 = vunpack.c.l.b16 %v107
  %v359 = vunpack.c.l.b16 %v108
  %v360 = vunpack.c.l.b16 %v109
  %v361 = vunpack.c.l.b16 %v110
  %v362 = vpack.c.b16 %v291, %v290
  %v363 = vpack.c.b16 %v293, %v292
  %v364 = vpack.c.b16 %v295, %v294
  %v365 = vpack.c.b16 %v297, %v296
  %v366 = vpack.c.b16 %v299, %v298
  %v367 = vpack.c.b16 %v301, %v300
  %v368 = vpack.c.b16 %v303, %v302
  %v369 = vpack.c.b16 %v305, %v304
  %v370 = vpack.c.b16 %v307, %v306
  %v371 = vpack.c.b16 %v309, %v308
  %v372 = vpack.c.b16 %v311, %v310
  %v373 = vpack.c.b16 %v313, %v312
  %v374 = vpack.c.b16 %v315, %v314
  %v375 = vpack.c.b16 %v317, %v316
  %v376 = vpack.c.b16 %v319, %v318
  %v377 = vpack.c.b16 %v321, %v320
  %v378 = vpack.c.b16 %v323, %v322
  %v379 = vpack.c.b16 %v325, %v324
  %v380 = vpack.c.b16 %v327, %v326
  %v381 = vpack.c.b16 %v329, %v328
  %v382 = vpack.c.b16 %v331, %v330
  %v383 = vpack.c.b16 %v333, %v332
  %v384 = vpack.c.b16 %v335, %v334
  %v385 = vpack.c.b16 %v337, %v336
  %v386 = vpack.c.b16 %v339, %v338
  %v387 = vpack.c.b16 %v341, %v340
  %v388 = vpack.c.b16 %v343, %v342
  %v389 = vpack.c.b16 %v345, %v344
  %v390 = vpack.c.b16 %v347, %v346
  %v391 = vpack.c.b16 %v349, %v348
  %v392 = vpack.c.b16 %v351, %v350
  %v393 = vpack.c.b16 %v353, %v352
  %v394 = vpack.c.b16 %v355, %v354
  %v395 = vpack.c.b16 %v357, %v356
  %v396 = vpack.c.b16 %v359, %v358
  %v397 = vpack.c.b16 %v361, %v360
  %vm434 = vcmask 523264
  %v436 = vsel %vm434, %v186, 0
  %v439 = vsel %vm434, %v191, 0
  %v442 = vsel %vm434, %v196, 0
  %v445 = vsel %vm434, %v201, 0
  %447 = vmatprep.subr.bf16.mxu0 0
  %448 = vmatpush1.bf16.msra.mxu0 %v362
  %449 = vmatprep.subr.bf16.mxu0 0
  %450 = vmatpush1.bf16.msra.mxu0 %v363
  %451 = vmatprep.subr.bf16.mxu0 0
  %452 = vmatpush1.bf16.msra.mxu0 %v364
  %453 = vmatprep.subr.bf16.mxu0 0
  %454 = vmatpush1.bf16.msra.mxu0 %v365
  %455 = vmatprep.subr.bf16.mxu0 0
  %456 = vmatpush1.bf16.msra.mxu0 %v366
  %457 = vmatprep.subr.bf16.mxu0 0
  %458 = vmatpush1.bf16.msra.mxu0 %v367
  %459 = vmatprep.subr.bf16.mxu0 0
  %460 = vmatpush1.bf16.msra.mxu0 %v368
  %461 = vmatprep.subr.bf16.mxu0 0
  %462 = vmatpush1.bf16.msra.mxu0 %v369
  %463 = vmatprep.subr.bf16.mxu0 0
  %464 = vmatpush1.bf16.msra.mxu0 %v370
  %465 = vmatprep.subr.bf16.mxu0 0
  %466 = vmatpush1.bf16.msra.mxu0 %v371
  %467 = vmatprep.subr.bf16.mxu0 0
  %468 = vmatpush1.bf16.msra.mxu0 %v372
  %469 = vmatprep.subr.bf16.mxu0 0
  %470 = vmatpush1.bf16.msra.mxu0 %v373
  %471 = vmatprep.subr.bf16.mxu0 0
  %472 = vmatpush1.bf16.msra.mxu0 %v374
  %473 = vmatprep.subr.bf16.mxu0 0
  %474 = vmatpush1.bf16.msra.mxu0 %v375
  %475 = vmatprep.subr.bf16.mxu0 0
  %476 = vmatpush1.bf16.msra.mxu0 %v376
  %477 = vmatprep.subr.bf16.mxu0 0
  %478 = vmatpush1.bf16.msra.mxu0 %v377
  %479 = vmatprep.mubr.bf16.mxu0 %v183
  %480 = vmatmul.mubr.bf16.gmra.mrb[0].mxu0 %v182
  %v481 = vpop.f32.mrb[0].mxu0
  %v482 = vadd.f32 %v116, %v481
  %v483 = vpop.f32.mrb[0].mxu0
  %v484 = vpop.f32.mrb[0].mxu0
  %v485 = vadd.f32 %v116, %v484
  %v486 = vpop.f32.mrb[0].mxu0
  %487 = vmatprep.mubr.bf16.mxu0 %v188
  %488 = vmatmul.mubr.bf16.gmra.mrb[0].mxu0 %v187
  %v489 = vpop.f32.mrb[0].mxu0
  %v490 = vadd.f32 %v116, %v489
  %v491 = vpop.f32.mrb[0].mxu0
  %v492 = vpop.f32.mrb[0].mxu0
  %v493 = vadd.f32 %v116, %v492
  %v494 = vpop.f32.mrb[0].mxu0
  %495 = vmatprep.mubr.bf16.mxu0 %v193
  %496 = vmatmul.mubr.bf16.gmra.mrb[0].mxu0 %v192
  %v497 = vpop.f32.mrb[0].mxu0
  %v498 = vadd.f32 %v116, %v497
  %v499 = vpop.f32.mrb[0].mxu0
  %v500 = vpop.f32.mrb[0].mxu0
  %v501 = vadd.f32 %v116, %v500
  %v502 = vpop.f32.mrb[0].mxu0
  %503 = vmatprep.mubr.bf16.mxu0 %v198
  %504 = vmatmul.mubr.bf16.gmra.mrb[0].mxu0 %v197
  %v505 = vpop.f32.mrb[0].mxu0
  %v506 = vadd.f32 %v116, %v505
  %v507 = vpop.f32.mrb[0].mxu0
  %v508 = vpop.f32.mrb[0].mxu0
  %v509 = vadd.f32 %v116, %v508
  %v510 = vpop.f32.mrb[0].mxu0
  %511 = vdwg.mxu0
  %512 = vmatprep.subr.bf16.mxu0 0
  %513 = vmatpush1.bf16.msra.mxu0 %v378
  %514 = vmatprep.subr.bf16.mxu0 0
  %515 = vmatpush1.bf16.msra.mxu0 %v379
  %516 = vmatprep.subr.bf16.mxu0 0
  %517 = vmatpush1.bf16.msra.mxu0 %v380
  %518 = vmatprep.subr.bf16.mxu0 0
  %519 = vmatpush1.bf16.msra.mxu0 %v381
  %520 = vmatprep.subr.bf16.mxu0 0
  %521 = vmatpush1.bf16.msra.mxu0 %v382
  %522 = vmatprep.subr.bf16.mxu0 0
  %523 = vmatpush1.bf16.msra.mxu0 %v383
  %524 = vmatprep.subr.bf16.mxu0 0
  %525 = vmatpush1.bf16.msra.mxu0 %v384
  %526 = vmatprep.subr.bf16.mxu0 0
  %527 = vmatpush1.bf16.msra.mxu0 %v385
  %528 = vmatprep.subr.bf16.mxu0 0
  %529 = vmatpush1.bf16.msra.mxu0 %v386
  %530 = vmatprep.subr.bf16.mxu0 0
  %531 = vmatpush1.bf16.msra.mxu0 %v387
  %532 = vmatprep.subr.bf16.mxu0 0
  %533 = vmatpush1.bf16.msra.mxu0 %v388
  %534 = vmatprep.subr.bf16.mxu0 0
  %535 = vmatpush1.bf16.msra.mxu0 %v389
  %536 = vmatprep.subr.bf16.mxu0 0
  %537 = vmatpush1.bf16.msra.mxu0 %v390
  %538 = vmatprep.subr.bf16.mxu0 0
  %539 = vmatpush1.bf16.msra.mxu0 %v391
  %540 = vmatprep.subr.bf16.mxu0 0
  %541 = vmatpush1.bf16.msra.mxu0 %v392
  %542 = vmatprep.subr.bf16.mxu0 0
  %543 = vmatpush1.bf16.msra.mxu0 %v393
  %544 = vmatprep.mubr.bf16.mxu0 %v185
  %545 = vmatmul.mubr.bf16.gmra.mrb[0].mxu0 %v184
  %v546 = vpop.f32.mrb[0].mxu0
  %v547 = vadd.f32 %v482, %v546
  %v548 = vpop.f32.mrb[0].mxu0
  %v549 = vpop.f32.mrb[0].mxu0
  %v550 = vadd.f32 %v485, %v549
  %v551 = vpop.f32.mrb[0].mxu0
  %552 = vmatprep.mubr.bf16.mxu0 %v190
  %553 = vmatmul.mubr.bf16.gmra.mrb[0].mxu0 %v189
  %v554 = vpop.f32.mrb[0].mxu0
  %v555 = vadd.f32 %v490, %v554
  %v556 = vpop.f32.mrb[0].mxu0
  %v557 = vpop.f32.mrb[0].mxu0
  %v558 = vadd.f32 %v493, %v557
  %v559 = vpop.f32.mrb[0].mxu0
  %560 = vmatprep.mubr.bf16.mxu0 %v195
  %561 = vmatmul.mubr.bf16.gmra.mrb[0].mxu0 %v194
  %v562 = vpop.f32.mrb[0].mxu0
  %v563 = vadd.f32 %v498, %v562
  %v564 = vpop.f32.mrb[0].mxu0
  %v565 = vpop.f32.mrb[0].mxu0
  %v566 = vadd.f32 %v501, %v565
  %v567 = vpop.f32.mrb[0].mxu0
  %568 = vmatprep.mubr.bf16.mxu0 %v200
  %569 = vmatmul.mubr.bf16.gmra.mrb[0].mxu0 %v199
  %v570 = vpop.f32.mrb[0].mxu0
  %v571 = vadd.f32 %v506, %v570
  %v572 = vpop.f32.mrb[0].mxu0
  %v573 = vpop.f32.mrb[0].mxu0
  %v574 = vadd.f32 %v509, %v573
  %v575 = vpop.f32.mrb[0].mxu0
  %576 = vdwg.mxu0
  %577 = vmatprep.subr.bf16.mxu0 0
  %578 = vmatpush1.bf16.msra.mxu0 %v394
  %579 = vmatprep.subr.bf16.mxu0 0
  %580 = vmatpush1.bf16.msra.mxu0 %v395
  %581 = vmatprep.subr.bf16.mxu0 0
  %582 = vmatpush1.bf16.msra.mxu0 %v396
  %583 = vmatprep.subr.bf16.mxu0 0
  %584 = vmatpush1.bf16.msra.mxu0 %v397
  %585 = vmatprep.subr.bf16.mxu0 0
  %586 = vmatpush1.bf16.msra.mxu0 0
  %587 = vmatprep.subr.bf16.mxu0 0
  %588 = vmatpush1.bf16.msra.mxu0 0
  %589 = vmatprep.subr.bf16.mxu0 0
  %590 = vmatpush1.bf16.msra.mxu0 0
  %591 = vmatprep.subr.bf16.mxu0 0
  %592 = vmatpush1.bf16.msra.mxu0 0
  %593 = vmatprep.subr.bf16.mxu0 0
  %594 = vmatpush1.bf16.msra.mxu0 0
  %595 = vmatprep.subr.bf16.mxu0 0
  %596 = vmatpush1.bf16.msra.mxu0 0
  %597 = vmatprep.subr.bf16.mxu0 0
  %598 = vmatpush1.bf16.msra.mxu0 0
  %599 = vmatprep.subr.bf16.mxu0 0
  %600 = vmatpush1.bf16.msra.mxu0 0
  %601 = vmatprep.subr.bf16.mxu0 0
  %602 = vmatpush1.bf16.msra.mxu0 0
  %603 = vmatprep.subr.bf16.mxu0 0
  %604 = vmatpush1.bf16.msra.mxu0 0
  %605 = vmatprep.subr.bf16.mxu0 0
  %606 = vmatpush1.bf16.msra.mxu0 0
  %607 = vmatprep.subr.bf16.mxu0 0
  %608 = vmatpush1.bf16.msra.mxu0 0
  %609 = vmatprep.mubr.bf16.mxu0 0
  %610 = vmatmul.mubr.bf16.gmra.mrb[0].mxu0 %v436
  %v611 = vpop.f32.mrb[0].mxu0
  %v612 = vadd.f32 %v547, %v611
  %v613 = vpop.f32.mrb[0].mxu0
  %v614 = vpop.f32.mrb[0].mxu0
  %v615 = vadd.f32 %v550, %v614
  %v616 = vpop.f32.mrb[0].mxu0
  %617 = vmatprep.mubr.bf16.mxu0 0
  %618 = vmatmul.mubr.bf16.gmra.mrb[0].mxu0 %v439
  %v619 = vpop.f32.mrb[0].mxu0
  %v620 = vadd.f32 %v555, %v619
  %v621 = vpop.f32.mrb[0].mxu0
  %v622 = vpop.f32.mrb[0].mxu0
  %v623 = vadd.f32 %v558, %v622
  %v624 = vpop.f32.mrb[0].mxu0
  %625 = vmatprep.mubr.bf16.mxu0 0
  %626 = vmatmul.mubr.bf16.gmra.mrb[0].mxu0 %v442
  %v627 = vpop.f32.mrb[0].mxu0
  %v628 = vadd.f32 %v563, %v627
  %v629 = vpop.f32.mrb[0].mxu0
  %v630 = vpop.f32.mrb[0].mxu0
  %v631 = vadd.f32 %v566, %v630
  %v632 = vpop.f32.mrb[0].mxu0
  %633 = vmatprep.mubr.bf16.mxu0 0
  %634 = vmatmul.mubr.bf16.gmra.mrb[0].mxu0 %v445
  %v635 = vpop.f32.mrb[0].mxu0
  %v636 = vadd.f32 %v571, %v635
  %v637 = vpop.f32.mrb[0].mxu0
  %v638 = vpop.f32.mrb[0].mxu0
  %v639 = vadd.f32 %v574, %v638
  %v640 = vpop.f32.mrb[0].mxu0
  %641 = vdwg.mxu0
  %v642 = vmax.f32 %v612, 0.0
  %v643 = vmax.f32 %v615, 0.0
  %v644 = vmax.f32 %v620, 0.0
  %v645 = vmax.f32 %v623, 0.0
  %v646 = vmax.f32 %v628, 0.0
  %v647 = vmax.f32 %v631, 0.0
  %v648 = vmax.f32 %v636, 0.0
  %v649 = vmax.f32 %v639, 0.0
  %650 = vst.msk [vmem:[%s3] sm:$0xff] %vm434, %v642
  %651 = vst.msk [vmem:[%s3 + $0x8] sm:$0xff] %vm434, %v643
  %652 = vst.msk [vmem:[%s3 + $0x10] sm:$0xff] %vm434, %v644
  %653 = vst.msk [vmem:[%s3 + $0x18] sm:$0xff] %vm434, %v645
  %654 = vst.msk [vmem:[%s3 + $0x20] sm:$0xff] %vm434, %v646
  %655 = vst.msk [vmem:[%s3 + $0x28] sm:$0xff] %vm434, %v647
  %656 = vst.msk [vmem:[%s3 + $0x30] sm:$0xff] %vm434, %v648
  %657 = vst.msk [vmem:[%s3 + $0x38] sm:$0xff] %vm434, %v649
  // Predicated region
  $region14: #{cnn_lstm_actor_forward.6} parent=0 // pred_check
    _
  $region15: #{cnn_lstm_actor_forward.6} parent=0 // pred_check_branch
    %659 = sbr.rel (0) target = $region17
  $region16: #{cnn_lstm_actor_forward.6} parent=0 // pred_region
    _
  $region17: #{cnn_lstm_actor_forward.6} parent=0 // pred_fallthru
    _
  // Predicated region
  $region18: #{cnn_lstm_actor_forward.6} parent=0 // pred_check
    _
  $region19: #{cnn_lstm_actor_forward.6} parent=0 // pred_check_branch
    %661 = sbr.rel (0) target = $region21
  $region20: #{cnn_lstm_actor_forward.6} parent=0 // pred_region
    _
  $region21: #{cnn_lstm_actor_forward.6} parent=0 // pred_fallthru
    _

// kernel: cnn_lstm_actor_forward.7
$region0: #{cnn_lstm_actor_forward.7}
  #allocation0 [shape = 'u32[]', space=smem, size = 0x4, offset = 0x4, fixed_abs, tag = 'smem constant byte address 0x4 - core index']
  #allocation1 [shape = 'u32[144,128]{1,0:T(1,128)}', space=vmem, size = 0x12000, scoped, tag = 'internal scratch']
  #allocation2 [shape = 'f32[16,32]{1,0:T(8,128)}', space=vmem, size = 0x2000, scoped, tag = 'scratch operand']
  %s0 = inlined_call_operand.vmem [shape: f32[16,256], index: 0, kind: input, shape index: {}]
  %s1 = inlined_call_operand.vmem [shape: f32[256,128], index: 1, kind: input, shape index: {}]
  %s2 = inlined_call_operand.vmem [shape: f32[32,128], index: 2, kind: input, shape index: {}]
  %s3 = inlined_call_operand.vmem [shape: f32[1,128], index: 3, kind: input, shape index: {}]
  %s4 = inlined_call_operand.vmem [shape: f32[32,64], index: 4, kind: input, shape index: {}]
  %s5 = inlined_call_operand.vmem [shape: f32[1,64], index: 5, kind: input, shape index: {}]
  %s6 = inlined_call_operand.vmem [shape: f32[64,2], index: 6, kind: input, shape index: {}]
  %s7 = inlined_call_operand.vmem [shape: f32[1,2], index: 7, kind: input, shape index: {}]
  %s8 = inlined_call_operand.vmem [shape: f32[16,2], index: 8, kind: output, shape index: {0}]
  %s9 = inlined_call_operand.hbm [shape: f32[2,32], index: 9, kind: output, shape index: {1}]
  %s10 = inlined_call_operand.hbm [shape: f32[2,32], index: 10, kind: output, shape index: {2}]
  %11 = xla_tuple %s8, %s9, %s10
  %s12 = sld [smem:[#allocation0]]
  $region58: #{cnn_lstm_actor_forward.7} parent=0
    _
  %s14 = ssub.s32 1, %s12
  %s15 = scalar_select 0, %s14, %s12
  $region1: #{cnn_lstm_actor_forward.7} parent=0
    #allocation3 [shape = 'u8[1024]{0}', space=vmem, size = 0x400, scoped, tag = 'output window, operand 1, single buffered']
    #allocation4 [shape = 's32[1]{0}', space=sflag, size = 0x4, scoped, tag = 'scoped memory for cnn_lstm_actor_forward.7']
    #allocation5 [shape = 'u8[1024]{0}', space=vmem, size = 0x400, scoped, tag = 'output window, operand 2, single buffered']
    #allocation6 [shape = 's32[1]{0}', space=sflag, size = 0x4, scoped, tag = 'scoped memory for cnn_lstm_actor_forward.7']
    %16 = vsyncpa [#allocation4], 0
    %17 = vsyncpa [#allocation6], 0
    // Predicated region
    $region2: #{cnn_lstm_actor_forward.7} parent=1 // pred_check
      _
    $region3: #{cnn_lstm_actor_forward.7} parent=1 // pred_check_branch
      %19 = sbr.rel (0) target = $region5
    $region4: #{cnn_lstm_actor_forward.7} parent=1 // pred_region
      _
    $region5: #{cnn_lstm_actor_forward.7} parent=1 // pred_fallthru
      _
    // Predicated region
    $region6: #{cnn_lstm_actor_forward.7} parent=1 // pred_check
      _
    $region7: #{cnn_lstm_actor_forward.7} parent=1 // pred_check_branch
      %21 = sbr.rel (0) target = $region9
    $region8: #{cnn_lstm_actor_forward.7} parent=1 // pred_region
      _
    $region9: #{cnn_lstm_actor_forward.7} parent=1 // pred_fallthru
      _
    // Predicated region
    $region10: #{cnn_lstm_actor_forward.7} parent=1 // pred_check
      _
    $region11: #{cnn_lstm_actor_forward.7} parent=1 // pred_check_branch
      %23 = sbr.rel (0) target = $region13
    $region12: #{cnn_lstm_actor_forward.7} parent=1 // pred_region
      _
    $region13: #{cnn_lstm_actor_forward.7} parent=1 // pred_fallthru
      _
    // Predicated region
    $region14: #{cnn_lstm_actor_forward.7} parent=1 // pred_check
      _
    $region15: #{cnn_lstm_actor_forward.7} parent=1 // pred_check_branch
      %25 = sbr.rel (0) target = $region17
    $region16: #{cnn_lstm_actor_forward.7} parent=1 // pred_region
      _
    $region17: #{cnn_lstm_actor_forward.7} parent=1 // pred_fallthru
      _
    // Predicated region
    $region18: #{cnn_lstm_actor_forward.7} parent=1 // pred_check
      _
    $region19: #{cnn_lstm_actor_forward.7} parent=1 // pred_check_branch
      %27 = sbr.rel (0) target = $region21
    $region20: #{cnn_lstm_actor_forward.7} parent=1 // pred_region
      _
    $region21: #{cnn_lstm_actor_forward.7} parent=1 // pred_fallthru
      _
    // Predicated region
    $region22: #{cnn_lstm_actor_forward.7} parent=1 // pred_check
      _
    $region23: #{cnn_lstm_actor_forward.7} parent=1 // pred_check_branch
      %29 = sbr.rel (0) target = $region25
    $region24: #{cnn_lstm_actor_forward.7} parent=1 // pred_region
      _
    $region25: #{cnn_lstm_actor_forward.7} parent=1 // pred_fallthru
      _
    // Predicated region
    $region26: #{cnn_lstm_actor_forward.7} parent=1 // pred_check
      _
    $region27: #{cnn_lstm_actor_forward.7} parent=1 // pred_check_branch
      %31 = sbr.rel (0) target = $region29
    $region28: #{cnn_lstm_actor_forward.7} parent=1 // pred_region
      _
    $region29: #{cnn_lstm_actor_forward.7} parent=1 // pred_fallthru
      _
    // Predicated region
    $region30: #{cnn_lstm_actor_forward.7} parent=1 // pred_check
      _
    $region31: #{cnn_lstm_actor_forward.7} parent=1 // pred_check_branch
      %33 = sbr.rel (0) target = $region33
    $region32: #{cnn_lstm_actor_forward.7} parent=1 // pred_region
      _
    $region33: #{cnn_lstm_actor_forward.7} parent=1 // pred_fallthru
      _
    %v34 = vld [vmem:[%s0] sm:$0xff]
    %v35 = vld [vmem:[%s0 + $0x8] sm:$0xff]
    %v36 = vld [vmem:[%s0 + $0x10] sm:$0xff]
    %v37 = vld [vmem:[%s0 + $0x18] sm:$0xff]
    %v38 = vld [vmem:[%s1] sm:$0xff]
    %v39 = vld [vmem:[%s1 + $0x8] sm:$0xff]
    %v40 = vld [vmem:[%s1 + $0x10] sm:$0xff]
    %v41 = vld [vmem:[%s1 + $0x18] sm:$0xff]
    %v42 = vld [vmem:[%s1 + $0x20] sm:$0xff]
    %v43 = vld [vmem:[%s1 + $0x28] sm:$0xff]
    %v44 = vld [vmem:[%s1 + $0x30] sm:$0xff]
    %v45 = vld [vmem:[%s1 + $0x38] sm:$0xff]
    %v46 = vld [vmem:[%s1 + $0x40] sm:$0xff]
    %v47 = vld [vmem:[%s1 + $0x48] sm:$0xff]
    %v48 = vld [vmem:[%s1 + $0x50] sm:$0xff]
    %v49 = vld [vmem:[%s1 + $0x58] sm:$0xff]
    %v50 = vld [vmem:[%s1 + $0x60] sm:$0xff]
    %v51 = vld [vmem:[%s1 + $0x68] sm:$0xff]
    %v52 = vld [vmem:[%s1 + $0x70] sm:$0xff]
    %v53 = vld [vmem:[%s1 + $0x78] sm:$0xff]
    %v54 = vld [vmem:[%s1 + $0x80] sm:$0xff]
    %v55 = vld [vmem:[%s1 + $0x88] sm:$0xff]
    %v56 = vld [vmem:[%s1 + $0x90] sm:$0xff]
    %v57 = vld [vmem:[%s1 + $0x98] sm:$0xff]
    %v58 = vld [vmem:[%s1 + $0xa0] sm:$0xff]
    %v59 = vld [vmem:[%s1 + $0xa8] sm:$0xff]
    %v60 = vld [vmem:[%s1 + $0xb0] sm:$0xff]
    %v61 = vld [vmem:[%s1 + $0xb8] sm:$0xff]
    %v62 = vld [vmem:[%s1 + $0xc0] sm:$0xff]
    %v63 = vld [vmem:[%s1 + $0xc8] sm:$0xff]
    %v64 = vld [vmem:[%s1 + $0xd0] sm:$0xff]
    %v65 = vld [vmem:[%s1 + $0xd8] sm:$0xff]
    %v66 = vld [vmem:[%s1 + $0xe0] sm:$0xff]
    %v67 = vld [vmem:[%s1 + $0xe8] sm:$0xff]
    %v68 = vld [vmem:[%s1 + $0xf0] sm:$0xff]
    %v69 = vld [vmem:[%s1 + $0xf8] sm:$0xff]
    %v70 = vld [vmem:[%s3] sm:$0x1]
    %v72 = vlaneseq
    %v73 = vshrl.u32 %v72, 7
    %v74 = vsub.s32 0, %v73
    %v75 = vrot.slane %v70, %v74
    %77 = vmatprep.subr.mxu0 0.0
    %78 = vmatpush1.msra.mxu0 %v38
    %79 = vmatprep.subr.mxu0 0.0
    %80 = vmatpush1.msra.mxu0 %v39
    %81 = vmatprep.subr.mxu0 0.0
    %82 = vmatpush1.msra.mxu0 %v40
    %83 = vmatprep.subr.mxu0 0.0
    %84 = vmatpush1.msra.mxu0 %v41
    %85 = vmatprep.subr.mxu0 0.0
    %86 = vmatpush1.msra.mxu0 %v42
    %87 = vmatprep.subr.mxu0 0.0
    %88 = vmatpush1.msra.mxu0 %v43
    %89 = vmatprep.subr.mxu0 0.0
    %90 = vmatpush1.msra.mxu0 %v44
    %91 = vmatprep.subr.mxu0 0.0
    %92 = vmatpush1.msra.mxu0 %v45
    %93 = vmatprep.subr.mxu0 0.0
    %94 = vmatpush1.msra.mxu0 %v46
    %95 = vmatprep.subr.mxu0 0.0
    %96 = vmatpush1.msra.mxu0 %v47
    %97 = vmatprep.subr.mxu0 0.0
    %98 = vmatpush1.msra.mxu0 %v48
    %99 = vmatprep.subr.mxu0 0.0
    %100 = vmatpush1.msra.mxu0 %v49
    %101 = vmatprep.subr.mxu0 0.0
    %102 = vmatpush1.msra.mxu0 %v50
    %103 = vmatprep.subr.mxu0 0.0
    %104 = vmatpush1.msra.mxu0 %v51
    %105 = vmatprep.subr.mxu0 0.0
    %106 = vmatpush1.msra.mxu0 %v52
    %107 = vmatprep.subr.mxu0 0.0
    %108 = vmatpush1.msra.mxu0 %v53
    %109 = vmatprep.subr.mxu0 0.0
    %110 = vmatpush1.msra.mxu0 %v54
    %111 = vmatprep.subr.mxu0 0.0
    %112 = vmatpush1.msra.mxu0 %v55
    %113 = vmatprep.subr.mxu0 0.0
    %114 = vmatpush1.msra.mxu0 %v56
    %115 = vmatprep.subr.mxu0 0.0
    %116 = vmatpush1.msra.mxu0 %v57
    %117 = vmatprep.subr.mxu0 0.0
    %118 = vmatpush1.msra.mxu0 %v58
    %119 = vmatprep.subr.mxu0 0.0
    %120 = vmatpush1.msra.mxu0 %v59
    %121 = vmatprep.subr.mxu0 0.0
    %122 = vmatpush1.msra.mxu0 %v60
    %123 = vmatprep.subr.mxu0 0.0
    %124 = vmatpush1.msra.mxu0 %v61
    %125 = vmatprep.subr.mxu0 0.0
    %126 = vmatpush1.msra.mxu0 %v62
    %127 = vmatprep.subr.mxu0 0.0
    %128 = vmatpush1.msra.mxu0 %v63
    %129 = vmatprep.subr.mxu0 0.0
    %130 = vmatpush1.msra.mxu0 %v64
    %131 = vmatprep.subr.mxu0 0.0
    %132 = vmatpush1.msra.mxu0 %v65
    %133 = vmatprep.subr.mxu0 0.0
    %134 = vmatpush1.msra.mxu0 %v66
    %135 = vmatprep.subr.mxu0 0.0
    %136 = vmatpush1.msra.mxu0 %v67
    %137 = vmatprep.subr.mxu0 0.0
    %138 = vmatpush1.msra.mxu0 %v68
    %139 = vmatprep.subr.mxu0 0.0
    %140 = vmatpush1.msra.mxu0 %v69
    %141 = vmatprep.mubr.f32.mxu0 %v35
    %142 = vmatmul.mubr.f32.gmra.mrb[0].mxu0 %v34
    %v143 = vpop.f32.mrb[0].mxu0
    %v144 = vadd.f32 %v75, %v143
    %v145 = vpop.f32.mrb[0].mxu0
    %146 = vmatprep.mubr.f32.mxu0 %v37
    %147 = vmatmul.mubr.f32.gmra.mrb[0].mxu0 %v36
    %v148 = vpop.f32.mrb[0].mxu0
    %v149 = vadd.f32 %v75, %v148
    %v150 = vpop.f32.mrb[0].mxu0
    %151 = vdwg.mxu0
    %v152 = vld [vmem:[%s2] sm:$0xff]
    %v153 = vld [vmem:[%s2 + $0x8] sm:$0xff]
    %v154 = vld [vmem:[%s2 + $0x10] sm:$0xff]
    %v155 = vld [vmem:[%s2 + $0x18] sm:$0xff]
    %vm156 = vcmask 261120
    %v158 = vsel %vm156, 0.0, 0
    %160 = vmatprep.subr.mxu0 0.0
    %161 = vmatpush1.msra.mxu0 %v152
    %162 = vmatprep.subr.mxu0 0.0
    %163 = vmatpush1.msra.mxu0 %v153
    %164 = vmatprep.subr.mxu0 0.0
    %165 = vmatpush1.msra.mxu0 %v154
    %166 = vmatprep.subr.mxu0 0.0
    %167 = vmatpush1.msra.mxu0 %v155
    %168 = vmatprep.subr.mxu0 0.0
    %169 = vmatpush1.msra.mxu0 0.0
    %170 = vmatprep.subr.mxu0 0.0
    %171 = vmatpush1.msra.mxu0 0.0
    %172 = vmatprep.subr.mxu0 0.0
    %173 = vmatpush1.msra.mxu0 0.0
    %174 = vmatprep.subr.mxu0 0.0
    %175 = vmatpush1.msra.mxu0 0.0
    %176 = vmatprep.subr.mxu0 0.0
    %177 = vmatpush1.msra.mxu0 0.0
    %178 = vmatprep.subr.mxu0 0.0
    %179 = vmatpush1.msra.mxu0 0.0
    %180 = vmatprep.subr.mxu0 0.0
    %181 = vmatpush1.msra.mxu0 0.0
    %182 = vmatprep.subr.mxu0 0.0
    %183 = vmatpush1.msra.mxu0 0.0
    %184 = vmatprep.subr.mxu0 0.0
    %185 = vmatpush1.msra.mxu0 0.0
    %186 = vmatprep.subr.mxu0 0.0
    %187 = vmatpush1.msra.mxu0 0.0
    %188 = vmatprep.subr.mxu0 0.0
    %189 = vmatpush1.msra.mxu0 0.0
    %190 = vmatprep.subr.mxu0 0.0
    %191 = vmatpush1.msra.mxu0 0.0
    %192 = vmatprep.subr.mxu0 0.0
    %193 = vmatpush1.msra.mxu0 0.0
    %194 = vmatprep.subr.mxu0 0.0
    %195 = vmatpush1.msra.mxu0 0.0
    %196 = vmatprep.subr.mxu0 0.0
    %197 = vmatpush1.msra.mxu0 0.0
    %198 = vmatprep.subr.mxu0 0.0
    %199 = vmatpush1.msra.mxu0 0.0
    %200 = vmatprep.subr.mxu0 0.0
    %201 = vmatpush1.msra.mxu0 0.0
    %202 = vmatprep.subr.mxu0 0.0
    %203 = vmatpush1.msra.mxu0 0.0
    %204 = vmatprep.subr.mxu0 0.0
    %205 = vmatpush1.msra.mxu0 0.0
    %206 = vmatprep.subr.mxu0 0.0
    %207 = vmatpush1.msra.mxu0 0.0
    %208 = vmatprep.subr.mxu0 0.0
    %209 = vmatpush1.msra.mxu0 0.0
    %210 = vmatprep.subr.mxu0 0.0
    %211 = vmatpush1.msra.mxu0 0.0
    %212 = vmatprep.subr.mxu0 0.0
    %213 = vmatpush1.msra.mxu0 0.0
    %214 = vmatprep.subr.mxu0 0.0
    %215 = vmatpush1.msra.mxu0 0.0
    %216 = vmatprep.subr.mxu0 0.0
    %217 = vmatpush1.msra.mxu0 0.0
    %218 = vmatprep.subr.mxu0 0.0
    %219 = vmatpush1.msra.mxu0 0.0
    %220 = vmatprep.subr.mxu0 0.0
    %221 = vmatpush1.msra.mxu0 0.0
    %222 = vmatprep.subr.mxu0 0.0
    %223 = vmatpush1.msra.mxu0 0.0
    %224 = vmatprep.mubr.f32.mxu0 0.0
    %225 = vmatmul.mubr.f32.gmra.mrb[0].mxu0 %v158
    %v226 = vpop.f32.mrb[0].mxu0
    %v227 = vadd.f32 0.0, %v226
    %v228 = vpop.f32.mrb[0].mxu0
    %229 = vdwg.mxu0
    %v230 = vadd.f32 %v144, %v227
    %v231 = vxor.u32 %v230, 2147483648
    %v232 = vmul.f32 %v231, 1.442695
    %v233 = vpow.pop %v232
    %v234 = vadd.f32 %v233, 1.0
    %v235 = vrcp.pop %v234
    %v236 = vmul.f32 1.0, %v235
    %v237 = vtanh.pop %v230
    %v238 = vmul.f32 %v236, 0.0
    %240 = vrot.lane.b32.xlu0 %v237, 64
    %v241 = vpop.permute.xlu0 %240
    %v243 = vmul.f32 %v236, %v241
    %245 = vrot.lane.b32.xlu0 %v243, 32
    %v246 = vpop.permute.xlu0 %245
    %v248 = vadd.f32 %v238, %v246
    %v249 = vtanh.pop %v248
    %251 = vrot.lane.b32.xlu0 %v249, 64
    %v252 = vpop.permute.xlu0 %251
    %v254 = vmul.f32 %v236, %v252
    %256 = vrot.lane.b32.xlu0 %v254, 32
    %v257 = vpop.permute.xlu0 %256
    %vm259 = vcmask 254976
    %260 = vst.msk [vmem:[#allocation2] sm:$0x3] %vm259, %v257
    %v261 = vsel %vm156, %v257, 0
    %263 = vmatprep.subr.mxu0 0.0
    %264 = vmatpush1.msra.mxu0 %v152
    %265 = vmatprep.subr.mxu0 0.0
    %266 = vmatpush1.msra.mxu0 %v153
    %267 = vmatprep.subr.mxu0 0.0
    %268 = vmatpush1.msra.mxu0 %v154
    %269 = vmatprep.subr.mxu0 0.0
    %270 = vmatpush1.msra.mxu0 %v155
    %271 = vmatprep.subr.mxu0 0.0
    %272 = vmatpush1.msra.mxu0 0.0
    %273 = vmatprep.subr.mxu0 0.0
    %274 = vmatpush1.msra.mxu0 0.0
    %275 = vmatprep.subr.mxu0 0.0
    %276 = vmatpush1.msra.mxu0 0.0
    %277 = vmatprep.subr.mxu0 0.0
    %278 = vmatpush1.msra.mxu0 0.0
    %279 = vmatprep.subr.mxu0 0.0
    %280 = vmatpush1.msra.mxu0 0.0
    %281 = vmatprep.subr.mxu0 0.0
    %282 = vmatpush1.msra.mxu0 0.0
    %283 = vmatprep.subr.mxu0 0.0
    %284 = vmatpush1.msra.mxu0 0.0
    %285 = vmatprep.subr.mxu0 0.0
    %286 = vmatpush1.msra.mxu0 0.0
    %287 = vmatprep.subr.mxu0 0.0
    %288 = vmatpush1.msra.mxu0 0.0
    %289 = vmatprep.subr.mxu0 0.0
    %290 = vmatpush1.msra.mxu0 0.0
    %291 = vmatprep.subr.mxu0 0.0
    %292 = vmatpush1.msra.mxu0 0.0
    %293 = vmatprep.subr.mxu0 0.0
    %294 = vmatpush1.msra.mxu0 0.0
    %295 = vmatprep.subr.mxu0 0.0
    %296 = vmatpush1.msra.mxu0 0.0
    %297 = vmatprep.subr.mxu0 0.0
    %298 = vmatpush1.msra.mxu0 0.0
    %299 = vmatprep.subr.mxu0 0.0
    %300 = vmatpush1.msra.mxu0 0.0
    %301 = vmatprep.subr.mxu0 0.0
    %302 = vmatpush1.msra.mxu0 0.0
    %303 = vmatprep.subr.mxu0 0.0
    %304 = vmatpush1.msra.mxu0 0.0
    %305 = vmatprep.subr.mxu0 0.0
    %306 = vmatpush1.msra.mxu0 0.0
    %307 = vmatprep.subr.mxu0 0.0
    %308 = vmatpush1.msra.mxu0 0.0
    %309 = vmatprep.subr.mxu0 0.0
    %310 = vmatpush1.msra.mxu0 0.0
    %311 = vmatprep.subr.mxu0 0.0
    %312 = vmatpush1.msra.mxu0 0.0
    %313 = vmatprep.subr.mxu0 0.0
    %314 = vmatpush1.msra.mxu0 0.0
    %315 = vmatprep.subr.mxu0 0.0
    %316 = vmatpush1.msra.mxu0 0.0
    %317 = vmatprep.subr.mxu0 0.0
    %318 = vmatpush1.msra.mxu0 0.0
    %319 = vmatprep.subr.mxu0 0.0
    %320 = vmatpush1.msra.mxu0 0.0
    %321 = vmatprep.subr.mxu0 0.0
    %322 = vmatpush1.msra.mxu0 0.0
    %323 = vmatprep.subr.mxu0 0.0
    %324 = vmatpush1.msra.mxu0 0.0
    %325 = vmatprep.subr.mxu0 0.0
    %326 = vmatpush1.msra.mxu0 0.0
    %327 = vmatprep.mubr.f32.mxu0 0.0
    %328 = vmatmul.mubr.f32.gmra.mrb[0].mxu0 %v261
    %v329 = vpop.f32.mrb[0].mxu0
    %v330 = vadd.f32 0.0, %v329
    %v331 = vpop.f32.mrb[0].mxu0
    %332 = vdwg.mxu0
    %v334 = vrot.slane %v330, 6
    %v336 = vadd.f32 %v144, %v334
    %v337 = vxor.u32 %v336, 2147483648
    %v338 = vmul.f32 %v337, 1.442695
    %v339 = vpow.pop %v338
    %v340 = vadd.f32 %v339, 1.0
    %v341 = vrcp.pop %v340
    %v342 = vmul.f32 1.0, %v341
    %v343 = vtanh.pop %v336
    %v345 = vrot.slane %v248, 6
    %v347 = vmul.f32 %v342, %v345
    %349 = vrot.lane.b32.xlu0 %v343, 64
    %v350 = vpop.permute.xlu0 %349
    %v352 = vmul.f32 %v342, %v350
    %354 = vrot.lane.b32.xlu0 %v352, 32
    %v355 = vpop.permute.xlu0 %354
    %v357 = vadd.f32 %v347, %v355
    %v358 = vtanh.pop %v357
    %360 = vrot.lane.b32.xlu0 %v358, 64
    %v361 = vpop.permute.xlu0 %360
    %v363 = vmul.f32 %v342, %v361
    %365 = vrot.lane.b32.xlu0 %v363, 32
    %v366 = vpop.permute.xlu0 %365
    %vm368 = vcmask 257026
    %369 = vst.msk [vmem:[#allocation2] sm:$0xc] %vm368, %v366
    %v370 = vrot.slane %v363, 2
    %371 = vrot.lane.b32.xlu0 %v370, 32
    %v372 = vpop.permute.xlu0 %371
    %v373 = vsel %vm156, %v372, 0
    %375 = vmatprep.subr.mxu0 0.0
    %376 = vmatpush1.msra.mxu0 %v152
    %377 = vmatprep.subr.mxu0 0.0
    %378 = vmatpush1.msra.mxu0 %v153
    %379 = vmatprep.subr.mxu0 0.0
    %380 = vmatpush1.msra.mxu0 %v154
    %381 = vmatprep.subr.mxu0 0.0
    %382 = vmatpush1.msra.mxu0 %v155
    %383 = vmatprep.subr.mxu0 0.0
    %384 = vmatpush1.msra.mxu0 0.0
    %385 = vmatprep.subr.mxu0 0.0
    %386 = vmatpush1.msra.mxu0 0.0
    %387 = vmatprep.subr.mxu0 0.0
    %388 = vmatpush1.msra.mxu0 0.0
    %389 = vmatprep.subr.mxu0 0.0
    %390 = vmatpush1.msra.mxu0 0.0
    %391 = vmatprep.subr.mxu0 0.0
    %392 = vmatpush1.msra.mxu0 0.0
    %393 = vmatprep.subr.mxu0 0.0
    %394 = vmatpush1.msra.mxu0 0.0
    %395 = vmatprep.subr.mxu0 0.0
    %396 = vmatpush1.msra.mxu0 0.0
    %397 = vmatprep.subr.mxu0 0.0
    %398 = vmatpush1.msra.mxu0 0.0
    %399 = vmatprep.subr.mxu0 0.0
    %400 = vmatpush1.msra.mxu0 0.0
    %401 = vmatprep.subr.mxu0 0.0
    %402 = vmatpush1.msra.mxu0 0.0
    %403 = vmatprep.subr.mxu0 0.0
    %404 = vmatpush1.msra.mxu0 0.0
    %405 = vmatprep.subr.mxu0 0.0
    %406 = vmatpush1.msra.mxu0 0.0
    %407 = vmatprep.subr.mxu0 0.0
    %408 = vmatpush1.msra.mxu0 0.0
    %409 = vmatprep.subr.mxu0 0.0
    %410 = vmatpush1.msra.mxu0 0.0
    %411 = vmatprep.subr.mxu0 0.0
    %412 = vmatpush1.msra.mxu0 0.0
    %413 = vmatprep.subr.mxu0 0.0
    %414 = vmatpush1.msra.mxu0 0.0
    %415 = vmatprep.subr.mxu0 0.0
    %416 = vmatpush1.msra.mxu0 0.0
    %417 = vmatprep.subr.mxu0 0.0
    %418 = vmatpush1.msra.mxu0 0.0
    %419 = vmatprep.subr.mxu0 0.0
    %420 = vmatpush1.msra.mxu0 0.0
    %421 = vmatprep.subr.mxu0 0.0
    %422 = vmatpush1.msra.mxu0 0.0
    %423 = vmatprep.subr.mxu0 0.0
    %424 = vmatpush1.msra.mxu0 0.0
    %425 = vmatprep.subr.mxu0 0.0
    %426 = vmatpush1.msra.mxu0 0.0
    %427 = vmatprep.subr.mxu0 0.0
    %428 = vmatpush1.msra.mxu0 0.0
    %429 = vmatprep.subr.mxu0 0.0
    %430 = vmatpush1.msra.mxu0 0.0
    %431 = vmatprep.subr.mxu0 0.0
    %432 = vmatpush1.msra.mxu0 0.0
    %433 = vmatprep.subr.mxu0 0.0
    %434 = vmatpush1.msra.mxu0 0.0
    %435 = vmatprep.subr.mxu0 0.0
    %436 = vmatpush1.msra.mxu0 0.0
    %437 = vmatprep.subr.mxu0 0.0
    %438 = vmatpush1.msra.mxu0 0.0
    %439 = vmatprep.mubr.f32.mxu0 0.0
    %440 = vmatmul.mubr.f32.gmra.mrb[0].mxu0 %v373
    %v441 = vpop.f32.mrb[0].mxu0
    %v442 = vadd.f32 0.0, %v441
    %v443 = vpop.f32.mrb[0].mxu0
    %444 = vdwg.mxu0
    %v446 = vrot.slane %v442, 4
    %v448 = vadd.f32 %v144, %v446
    %v449 = vxor.u32 %v448, 2147483648
    %v450 = vmul.f32 %v449, 1.442695
    %v451 = vpow.pop %v450
    %v452 = vadd.f32 %v451, 1.0
    %v453 = vrcp.pop %v452
    %v454 = vmul.f32 1.0, %v453
    %v455 = vtanh.pop %v448
    %v457 = vrot.slane %v357, 6
    %v459 = vmul.f32 %v454, %v457
    %461 = vrot.lane.b32.xlu0 %v455, 64
    %v462 = vpop.permute.xlu0 %461
    %v464 = vmul.f32 %v454, %v462
    %466 = vrot.lane.b32.xlu0 %v464, 32
    %v467 = vpop.permute.xlu0 %466
    %v469 = vadd.f32 %v459, %v467
    %v470 = vtanh.pop %v469
    %472 = vrot.lane.b32.xlu0 %v470, 64
    %v473 = vpop.permute.xlu0 %472
    %v475 = vmul.f32 %v454, %v473
    %477 = vrot.lane.b32.xlu0 %v475, 32
    %v478 = vpop.permute.xlu0 %477
    %vm480 = vcmask 259076
    %481 = vst.msk [vmem:[#allocation2] sm:$0x30] %vm480, %v478
    %v482 = vrot.slane %v475, 4
    %483 = vrot.lane.b32.xlu0 %v482, 32
    %v484 = vpop.permute.xlu0 %483
    %v485 = vsel %vm156, %v484, 0
    %487 = vmatprep.subr.mxu0 0.0
    %488 = vmatpush1.msra.mxu0 %v152
    %489 = vmatprep.subr.mxu0 0.0
    %490 = vmatpush1.msra.mxu0 %v153
    %491 = vmatprep.subr.mxu0 0.0
    %492 = vmatpush1.msra.mxu0 %v154
    %493 = vmatprep.subr.mxu0 0.0
    %494 = vmatpush1.msra.mxu0 %v155
    %495 = vmatprep.subr.mxu0 0.0
    %496 = vmatpush1.msra.mxu0 0.0
    %497 = vmatprep.subr.mxu0 0.0
    %498 = vmatpush1.msra.mxu0 0.0
    %499 = vmatprep.subr.mxu0 0.0
    %500 = vmatpush1.msra.mxu0 0.0
    %501 = vmatprep.subr.mxu0 0.0
    %502 = vmatpush1.msra.mxu0 0.0
    %503 = vmatprep.subr.mxu0 0.0
    %504 = vmatpush1.msra.mxu0 0.0
    %505 = vmatprep.subr.mxu0 0.0
    %506 = vmatpush1.msra.mxu0 0.0
    %507 = vmatprep.subr.mxu0 0.0
    %508 = vmatpush1.msra.mxu0 0.0
    %509 = vmatprep.subr.mxu0 0.0
    %510 = vmatpush1.msra.mxu0 0.0
    %511 = vmatprep.subr.mxu0 0.0
    %512 = vmatpush1.msra.mxu0 0.0
    %513 = vmatprep.subr.mxu0 0.0
    %514 = vmatpush1.msra.mxu0 0.0
    %515 = vmatprep.subr.mxu0 0.0
    %516 = vmatpush1.msra.mxu0 0.0
    %517 = vmatprep.subr.mxu0 0.0
    %518 = vmatpush1.msra.mxu0 0.0
    %519 = vmatprep.subr.mxu0 0.0
    %520 = vmatpush1.msra.mxu0 0.0
    %521 = vmatprep.subr.mxu0 0.0
    %522 = vmatpush1.msra.mxu0 0.0
    %523 = vmatprep.subr.mxu0 0.0
    %524 = vmatpush1.msra.mxu0 0.0
    %525 = vmatprep.subr.mxu0 0.0
    %526 = vmatpush1.msra.mxu0 0.0
    %527 = vmatprep.subr.mxu0 0.0
    %528 = vmatpush1.msra.mxu0 0.0
    %529 = vmatprep.subr.mxu0 0.0
    %530 = vmatpush1.msra.mxu0 0.0
    %531 = vmatprep.subr.mxu0 0.0
    %532 = vmatpush1.msra.mxu0 0.0
    %533 = vmatprep.subr.mxu0 0.0
    %534 = vmatpush1.msra.mxu0 0.0
    %535 = vmatprep.subr.mxu0 0.0
    %536 = vmatpush1.msra.mxu0 0.0
    %537 = vmatprep.subr.mxu0 0.0
    %538 = vmatpush1.msra.mxu0 0.0
    %539 = vmatprep.subr.mxu0 0.0
    %540 = vmatpush1.msra.mxu0 0.0
    %541 = vmatprep.subr.mxu0 0.0
    %542 = vmatpush1.msra.mxu0 0.0
    %543 = vmatprep.subr.mxu0 0.0
    %544 = vmatpush1.msra.mxu0 0.0
    %545 = vmatprep.subr.mxu0 0.0
    %546 = vmatpush1.msra.mxu0 0.0
    %547 = vmatprep.subr.mxu0 0.0
    %548 = vmatpush1.msra.mxu0 0.0
    %549 = vmatprep.subr.mxu0 0.0
    %550 = vmatpush1.msra.mxu0 0.0
    %551 = vmatprep.mubr.f32.mxu0 0.0
    %552 = vmatmul.mubr.f32.gmra.mrb[0].mxu0 %v485
    %v553 = vpop.f32.mrb[0].mxu0
    %v554 = vadd.f32 0.0, %v553
    %v555 = vpop.f32.mrb[0].mxu0
    %556 = vdwg.mxu0
    %v558 = vrot.slane %v554, 2
    %v560 = vadd.f32 %v144, %v558
    %v561 = vxor.u32 %v560, 2147483648
    %v562 = vmul.f32 %v561, 1.442695
    %v563 = vpow.pop %v562
    %v564 = vadd.f32 %v563, 1.0
    %v565 = vrcp.pop %v564
    %v566 = vmul.f32 1.0, %v565
    %v567 = vtanh.pop %v560
    %v569 = vrot.slane %v469, 6
    %v571 = vmul.f32 %v566, %v569
    %573 = vrot.lane.b32.xlu0 %v567, 64
    %v574 = vpop.permute.xlu0 %573
    %v576 = vmul.f32 %v566, %v574
    %578 = vrot.lane.b32.xlu0 %v576, 32
    %v579 = vpop.permute.xlu0 %578
    %v581 = vadd.f32 %v571, %v579
    %v582 = vtanh.pop %v581
    %584 = vrot.lane.b32.xlu0 %v582, 64
    %v585 = vpop.permute.xlu0 %584
    %v587 = vmul.f32 %v566, %v585
    %589 = vrot.lane.b32.xlu0 %v587, 32
    %v590 = vpop.permute.xlu0 %589
    %vm592 = vcmask 261126
    %593 = vst.msk [vmem:[#allocation2] sm:$0xc0] %vm592, %v590
    %v594 = vrot.slane %v587, 6
    %595 = vrot.lane.b32.xlu0 %v594, 32
    %v596 = vpop.permute.xlu0 %595
    %v597 = vsel %vm156, %v596, 0
    %599 = vmatprep.subr.mxu0 0.0
    %600 = vmatpush1.msra.mxu0 %v152
    %601 = vmatprep.subr.mxu0 0.0
    %602 = vmatpush1.msra.mxu0 %v153
    %603 = vmatprep.subr.mxu0 0.0
    %604 = vmatpush1.msra.mxu0 %v154
    %605 = vmatprep.subr.mxu0 0.0
    %606 = vmatpush1.msra.mxu0 %v155
    %607 = vmatprep.subr.mxu0 0.0
    %608 = vmatpush1.msra.mxu0 0.0
    %609 = vmatprep.subr.mxu0 0.0
    %610 = vmatpush1.msra.mxu0 0.0
    %611 = vmatprep.subr.mxu0 0.0
    %612 = vmatpush1.msra.mxu0 0.0
    %613 = vmatprep.subr.mxu0 0.0
    %614 = vmatpush1.msra.mxu0 0.0
    %615 = vmatprep.subr.mxu0 0.0
    %616 = vmatpush1.msra.mxu0 0.0
    %617 = vmatprep.subr.mxu0 0.0
    %618 = vmatpush1.msra.mxu0 0.0
    %619 = vmatprep.subr.mxu0 0.0
    %620 = vmatpush1.msra.mxu0 0.0
    %621 = vmatprep.subr.mxu0 0.0
    %622 = vmatpush1.msra.mxu0 0.0
    %623 = vmatprep.subr.mxu0 0.0
    %624 = vmatpush1.msra.mxu0 0.0
    %625 = vmatprep.subr.mxu0 0.0
    %626 = vmatpush1.msra.mxu0 0.0
    %627 = vmatprep.subr.mxu0 0.0
    %628 = vmatpush1.msra.mxu0 0.0
    %629 = vmatprep.subr.mxu0 0.0
    %630 = vmatpush1.msra.mxu0 0.0
    %631 = vmatprep.subr.mxu0 0.0
    %632 = vmatpush1.msra.mxu0 0.0
    %633 = vmatprep.subr.mxu0 0.0
    %634 = vmatpush1.msra.mxu0 0.0
    %635 = vmatprep.subr.mxu0 0.0
    %636 = vmatpush1.msra.mxu0 0.0
    %637 = vmatprep.subr.mxu0 0.0
    %638 = vmatpush1.msra.mxu0 0.0
    %639 = vmatprep.subr.mxu0 0.0
    %640 = vmatpush1.msra.mxu0 0.0
    %641 = vmatprep.subr.mxu0 0.0
    %642 = vmatpush1.msra.mxu0 0.0
    %643 = vmatprep.subr.mxu0 0.0
    %644 = vmatpush1.msra.mxu0 0.0
    %645 = vmatprep.subr.mxu0 0.0
    %646 = vmatpush1.msra.mxu0 0.0
    %647 = vmatprep.subr.mxu0 0.0
    %648 = vmatpush1.msra.mxu0 0.0
    %649 = vmatprep.subr.mxu0 0.0
    %650 = vmatpush1.msra.mxu0 0.0
    %651 = vmatprep.subr.mxu0 0.0
    %652 = vmatpush1.msra.mxu0 0.0
    %653 = vmatprep.subr.mxu0 0.0
    %654 = vmatpush1.msra.mxu0 0.0
    %655 = vmatprep.subr.mxu0 0.0
    %656 = vmatpush1.msra.mxu0 0.0
    %657 = vmatprep.subr.mxu0 0.0
    %658 = vmatpush1.msra.mxu0 0.0
    %659 = vmatprep.subr.mxu0 0.0
    %660 = vmatpush1.msra.mxu0 0.0
    %661 = vmatprep.subr.mxu0 0.0
    %662 = vmatpush1.msra.mxu0 0.0
    %663 = vmatprep.mubr.f32.mxu0 0.0
    %664 = vmatmul.mubr.f32.gmra.mrb[0].mxu0 %v597
    %v665 = vpop.f32.mrb[0].mxu0
    %v666 = vadd.f32 0.0, %v665
    %v667 = vpop.f32.mrb[0].mxu0
    %668 = vdwg.mxu0
    %v669 = vadd.f32 %v149, %v666
    %v670 = vxor.u32 %v669, 2147483648
    %v671 = vmul.f32 %v670, 1.442695
    %v672 = vpow.pop %v671
    %v673 = vadd.f32 %v672, 1.0
    %v674 = vrcp.pop %v673
    %v675 = vmul.f32 1.0, %v674
    %v676 = vtanh.pop %v669
    %v678 = vrot.slane %v581, 6
    %v680 = vmul.f32 %v675, %v678
    %682 = vrot.lane.b32.xlu0 %v676, 64
    %v683 = vpop.permute.xlu0 %682
    %v685 = vmul.f32 %v675, %v683
    %687 = vrot.lane.b32.xlu0 %v685, 32
    %v688 = vpop.permute.xlu0 %687
    %v690 = vadd.f32 %v680, %v688
    %v691 = vtanh.pop %v690
    %693 = vrot.lane.b32.xlu0 %v691, 64
    %v694 = vpop.permute.xlu0 %693
    %v696 = vmul.f32 %v675, %v694
    %698 = vrot.lane.b32.xlu0 %v696, 32
    %v699 = vpop.permute.xlu0 %698
    %701 = vst.msk [vmem:[#allocation2 + $0x8] sm:$0x3] %vm259, %v699
    %v702 = vsel %vm156, %v699, 0
    %704 = vmatprep.subr.mxu0 0.0
    %705 = vmatpush1.msra.mxu0 %v152
    %706 = vmatprep.subr.mxu0 0.0
    %707 = vmatpush1.msra.mxu0 %v153
    %708 = vmatprep.subr.mxu0 0.0
    %709 = vmatpush1.msra.mxu0 %v154
    %710 = vmatprep.subr.mxu0 0.0
    %711 = vmatpush1.msra.mxu0 %v155
    %712 = vmatprep.subr.mxu0 0.0
    %713 = vmatpush1.msra.mxu0 0.0
    %714 = vmatprep.subr.mxu0 0.0
    %715 = vmatpush1.msra.mxu0 0.0
    %716 = vmatprep.subr.mxu0 0.0
    %717 = vmatpush1.msra.mxu0 0.0
    %718 = vmatprep.subr.mxu0 0.0
    %719 = vmatpush1.msra.mxu0 0.0
    %720 = vmatprep.subr.mxu0 0.0
    %721 = vmatpush1.msra.mxu0 0.0
    %722 = vmatprep.subr.mxu0 0.0
    %723 = vmatpush1.msra.mxu0 0.0
    %724 = vmatprep.subr.mxu0 0.0
    %725 = vmatpush1.msra.mxu0 0.0
    %726 = vmatprep.subr.mxu0 0.0
    %727 = vmatpush1.msra.mxu0 0.0
    %728 = vmatprep.subr.mxu0 0.0
    %729 = vmatpush1.msra.mxu0 0.0
    %730 = vmatprep.subr.mxu0 0.0
    %731 = vmatpush1.msra.mxu0 0.0
    %732 = vmatprep.subr.mxu0 0.0
    %733 = vmatpush1.msra.mxu0 0.0
    %734 = vmatprep.subr.mxu0 0.0
    %735 = vmatpush1.msra.mxu0 0.0
    %736 = vmatprep.subr.mxu0 0.0
    %737 = vmatpush1.msra.mxu0 0.0
    %738 = vmatprep.subr.mxu0 0.0
    %739 = vmatpush1.msra.mxu0 0.0
    %740 = vmatprep.subr.mxu0 0.0
    %741 = vmatpush1.msra.mxu0 0.0
    %742 = vmatprep.subr.mxu0 0.0
    %743 = vmatpush1.msra.mxu0 0.0
    %744 = vmatprep.subr.mxu0 0.0
    %745 = vmatpush1.msra.mxu0 0.0
    %746 = vmatprep.subr.mxu0 0.0
    %747 = vmatpush1.msra.mxu0 0.0
    %748 = vmatprep.subr.mxu0 0.0
    %749 = vmatpush1.msra.mxu0 0.0
    %750 = vmatprep.subr.mxu0 0.0
    %751 = vmatpush1.msra.mxu0 0.0
    %752 = vmatprep.subr.mxu0 0.0
    %753 = vmatpush1.msra.mxu0 0.0
    %754 = vmatprep.subr.mxu0 0.0
    %755 = vmatpush1.msra.mxu0 0.0
    %756 = vmatprep.subr.mxu0 0.0
    %757 = vmatpush1.msra.mxu0 0.0
    %758 = vmatprep.subr.mxu0 0.0
    %759 = vmatpush1.msra.mxu0 0.0
    %760 = vmatprep.subr.mxu0 0.0
    %761 = vmatpush1.msra.mxu0 0.0
    %762 = vmatprep.subr.mxu0 0.0
    %763 = vmatpush1.msra.mxu0 0.0
    %764 = vmatprep.subr.mxu0 0.0
    %765 = vmatpush1.msra.mxu0 0.0
    %766 = vmatprep.subr.mxu0 0.0
    %767 = vmatpush1.msra.mxu0 0.0
    %768 = vmatprep.mubr.f32.mxu0 0.0
    %769 = vmatmul.mubr.f32.gmra.mrb[0].mxu0 %v702
    %v770 = vpop.f32.mrb[0].mxu0
    %v771 = vadd.f32 0.0, %v770
    %v772 = vpop.f32.mrb[0].mxu0
    %773 = vdwg.mxu0
    %v775 = vrot.slane %v771, 6
    %v777 = vadd.f32 %v149, %v775
    %v778 = vxor.u32 %v777, 2147483648
    %v779 = vmul.f32 %v778, 1.442695
    %v780 = vpow.pop %v779
    %v781 = vadd.f32 %v780, 1.0
    %v782 = vrcp.pop %v781
    %v783 = vmul.f32 1.0, %v782
    %v784 = vtanh.pop %v777
    %v786 = vrot.slane %v690, 6
    %v788 = vmul.f32 %v783, %v786
    %790 = vrot.lane.b32.xlu0 %v784, 64
    %v791 = vpop.permute.xlu0 %790
    %v793 = vmul.f32 %v783, %v791
    %795 = vrot.lane.b32.xlu0 %v793, 32
    %v796 = vpop.permute.xlu0 %795
    %v798 = vadd.f32 %v788, %v796
    %v799 = vtanh.pop %v798
    %801 = vrot.lane.b32.xlu0 %v799, 64
    %v802 = vpop.permute.xlu0 %801
    %v804 = vmul.f32 %v783, %v802
    %806 = vrot.lane.b32.xlu0 %v804, 32
    %v807 = vpop.permute.xlu0 %806
    %809 = vst.msk [vmem:[#allocation2 + $0x8] sm:$0xc] %vm368, %v807
    %v810 = vrot.slane %v804, 2
    %811 = vrot.lane.b32.xlu0 %v810, 32
    %v812 = vpop.permute.xlu0 %811
    %v813 = vsel %vm156, %v812, 0
    %815 = vmatprep.subr.mxu0 0.0
    %816 = vmatpush1.msra.mxu0 %v152
    %817 = vmatprep.subr.mxu0 0.0
    %818 = vmatpush1.msra.mxu0 %v153
    %819 = vmatprep.subr.mxu0 0.0
    %820 = vmatpush1.msra.mxu0 %v154
    %821 = vmatprep.subr.mxu0 0.0
    %822 = vmatpush1.msra.mxu0 %v155
    %823 = vmatprep.subr.mxu0 0.0
    %824 = vmatpush1.msra.mxu0 0.0
    %825 = vmatprep.subr.mxu0 0.0
    %826 = vmatpush1.msra.mxu0 0.0
    %827 = vmatprep.subr.mxu0 0.0
    %828 = vmatpush1.msra.mxu0 0.0
    %829 = vmatprep.subr.mxu0 0.0
    %830 = vmatpush1.msra.mxu0 0.0
    %831 = vmatprep.subr.mxu0 0.0
    %832 = vmatpush1.msra.mxu0 0.0
    %833 = vmatprep.subr.mxu0 0.0
    %834 = vmatpush1.msra.mxu0 0.0
    %835 = vmatprep.subr.mxu0 0.0
    %836 = vmatpush1.msra.mxu0 0.0
    %837 = vmatprep.subr.mxu0 0.0
    %838 = vmatpush1.msra.mxu0 0.0
    %839 = vmatprep.subr.mxu0 0.0
    %840 = vmatpush1.msra.mxu0 0.0
    %841 = vmatprep.subr.mxu0 0.0
    %842 = vmatpush1.msra.mxu0 0.0
    %843 = vmatprep.subr.mxu0 0.0
    %844 = vmatpush1.msra.mxu0 0.0
    %845 = vmatprep.subr.mxu0 0.0
    %846 = vmatpush1.msra.mxu0 0.0
    %847 = vmatprep.subr.mxu0 0.0
    %848 = vmatpush1.msra.mxu0 0.0
    %849 = vmatprep.subr.mxu0 0.0
    %850 = vmatpush1.msra.mxu0 0.0
    %851 = vmatprep.subr.mxu0 0.0
    %852 = vmatpush1.msra.mxu0 0.0
    %853 = vmatprep.subr.mxu0 0.0
    %854 = vmatpush1.msra.mxu0 0.0
    %855 = vmatprep.subr.mxu0 0.0
    %856 = vmatpush1.msra.mxu0 0.0
    %857 = vmatprep.subr.mxu0 0.0
    %858 = vmatpush1.msra.mxu0 0.0
    %859 = vmatprep.subr.mxu0 0.0
    %860 = vmatpush1.msra.mxu0 0.0
    %861 = vmatprep.subr.mxu0 0.0
    %862 = vmatpush1.msra.mxu0 0.0
    %863 = vmatprep.subr.mxu0 0.0
    %864 = vmatpush1.msra.mxu0 0.0
    %865 = vmatprep.subr.mxu0 0.0
    %866 = vmatpush1.msra.mxu0 0.0
    %867 = vmatprep.subr.mxu0 0.0
    %868 = vmatpush1.msra.mxu0 0.0
    %869 = vmatprep.subr.mxu0 0.0
    %870 = vmatpush1.msra.mxu0 0.0
    %871 = vmatprep.subr.mxu0 0.0
    %872 = vmatpush1.msra.mxu0 0.0
    %873 = vmatprep.subr.mxu0 0.0
    %874 = vmatpush1.msra.mxu0 0.0
    %875 = vmatprep.subr.mxu0 0.0
    %876 = vmatpush1.msra.mxu0 0.0
    %877 = vmatprep.subr.mxu0 0.0
    %878 = vmatpush1.msra.mxu0 0.0
    %879 = vmatprep.mubr.f32.mxu0 0.0
    %880 = vmatmul.mubr.f32.gmra.mrb[0].mxu0 %v813
    %v881 = vpop.f32.mrb[0].mxu0
    %v882 = vadd.f32 0.0, %v881
    %v883 = vpop.f32.mrb[0].mxu0
    %884 = vdwg.mxu0
    %v886 = vrot.slane %v882, 4
    %v888 = vadd.f32 %v149, %v886
    %v889 = vxor.u32 %v888, 2147483648
    %v890 = vmul.f32 %v889, 1.442695
    %v891 = vpow.pop %v890
    %v892 = vadd.f32 %v891, 1.0
    %v893 = vrcp.pop %v892
    %v894 = vmul.f32 1.0, %v893
    %v895 = vtanh.pop %v888
    %v897 = vrot.slane %v798, 6
    %v899 = vmul.f32 %v894, %v897
    %901 = vrot.lane.b32.xlu0 %v895, 64
    %v902 = vpop.permute.xlu0 %901
    %v904 = vmul.f32 %v894, %v902
    %906 = vrot.lane.b32.xlu0 %v904, 32
    %v907 = vpop.permute.xlu0 %906
    %v909 = vadd.f32 %v899, %v907
    %v910 = vtanh.pop %v909
    %912 = vrot.lane.b32.xlu0 %v910, 64
    %v913 = vpop.permute.xlu0 %912
    %v915 = vmul.f32 %v894, %v913
    %917 = vrot.lane.b32.xlu0 %v915, 32
    %v918 = vpop.permute.xlu0 %917
    %920 = vst.msk [vmem:[#allocation2 + $0x8] sm:$0x30] %vm480, %v918
    %v921 = vrot.slane %v915, 4
    %922 = vrot.lane.b32.xlu0 %v921, 32
    %v923 = vpop.permute.xlu0 %922
    %v924 = vsel %vm156, %v923, 0
    %926 = vmatprep.subr.mxu0 0.0
    %927 = vmatpush1.msra.mxu0 %v152
    %928 = vmatprep.subr.mxu0 0.0
    %929 = vmatpush1.msra.mxu0 %v153
    %930 = vmatprep.subr.mxu0 0.0
    %931 = vmatpush1.msra.mxu0 %v154
    %932 = vmatprep.subr.mxu0 0.0
    %933 = vmatpush1.msra.mxu0 %v155
    %934 = vmatprep.subr.mxu0 0.0
    %935 = vmatpush1.msra.mxu0 0.0
    %936 = vmatprep.subr.mxu0 0.0
    %937 = vmatpush1.msra.mxu0 0.0
    %938 = vmatprep.subr.mxu0 0.0
    %939 = vmatpush1.msra.mxu0 0.0
    %940 = vmatprep.subr.mxu0 0.0
    %941 = vmatpush1.msra.mxu0 0.0
    %942 = vmatprep.subr.mxu0 0.0
    %943 = vmatpush1.msra.mxu0 0.0
    %944 = vmatprep.subr.mxu0 0.0
    %945 = vmatpush1.msra.mxu0 0.0
    %946 = vmatprep.subr.mxu0 0.0
    %947 = vmatpush1.msra.mxu0 0.0
    %948 = vmatprep.subr.mxu0 0.0
    %949 = vmatpush1.msra.mxu0 0.0
    %950 = vmatprep.subr.mxu0 0.0
    %951 = vmatpush1.msra.mxu0 0.0
    %952 = vmatprep.subr.mxu0 0.0
    %953 = vmatpush1.msra.mxu0 0.0
    %954 = vmatprep.subr.mxu0 0.0
    %955 = vmatpush1.msra.mxu0 0.0
    %956 = vmatprep.subr.mxu0 0.0
    %957 = vmatpush1.msra.mxu0 0.0
    %958 = vmatprep.subr.mxu0 0.0
    %959 = vmatpush1.msra.mxu0 0.0
    %960 = vmatprep.subr.mxu0 0.0
    %961 = vmatpush1.msra.mxu0 0.0
    %962 = vmatprep.subr.mxu0 0.0
    %963 = vmatpush1.msra.mxu0 0.0
    %964 = vmatprep.subr.mxu0 0.0
    %965 = vmatpush1.msra.mxu0 0.0
    %966 = vmatprep.subr.mxu0 0.0
    %967 = vmatpush1.msra.mxu0 0.0
    %968 = vmatprep.subr.mxu0 0.0
    %969 = vmatpush1.msra.mxu0 0.0
    %970 = vmatprep.subr.mxu0 0.0
    %971 = vmatpush1.msra.mxu0 0.0
    %972 = vmatprep.subr.mxu0 0.0
    %973 = vmatpush1.msra.mxu0 0.0
    %974 = vmatprep.subr.mxu0 0.0
    %975 = vmatpush1.msra.mxu0 0.0
    %976 = vmatprep.subr.mxu0 0.0
    %977 = vmatpush1.msra.mxu0 0.0
    %978 = vmatprep.subr.mxu0 0.0
    %979 = vmatpush1.msra.mxu0 0.0
    %980 = vmatprep.subr.mxu0 0.0
    %981 = vmatpush1.msra.mxu0 0.0
    %982 = vmatprep.subr.mxu0 0.0
    %983 = vmatpush1.msra.mxu0 0.0
    %984 = vmatprep.subr.mxu0 0.0
    %985 = vmatpush1.msra.mxu0 0.0
    %986 = vmatprep.subr.mxu0 0.0
    %987 = vmatpush1.msra.mxu0 0.0
    %988 = vmatprep.subr.mxu0 0.0
    %989 = vmatpush1.msra.mxu0 0.0
    %990 = vmatprep.mubr.f32.mxu0 0.0
    %991 = vmatmul.mubr.f32.gmra.mrb[0].mxu0 %v924
    %v992 = vpop.f32.mrb[0].mxu0
    %v993 = vadd.f32 0.0, %v992
    %v994 = vpop.f32.mrb[0].mxu0
    %995 = vdwg.mxu0
    %v997 = vrot.slane %v993, 2
    %v999 = vadd.f32 %v149, %v997
    %v1000 = vxor.u32 %v999, 2147483648
    %v1001 = vmul.f32 %v1000, 1.442695
    %v1002 = vpow.pop %v1001
    %v1003 = vadd.f32 %v1002, 1.0
    %v1004 = vrcp.pop %v1003
    %v1005 = vmul.f32 1.0, %v1004
    %v1006 = vtanh.pop %v999
    %v1008 = vrot.slane %v909, 6
    %v1010 = vmul.f32 %v1005, %v1008
    %1012 = vrot.lane.b32.xlu0 %v1006, 64
    %v1013 = vpop.permute.xlu0 %1012
    %v1015 = vmul.f32 %v1005, %v1013
    %1017 = vrot.lane.b32.xlu0 %v1015, 32
    %v1018 = vpop.permute.xlu0 %1017
    %v1020 = vadd.f32 %v1010, %v1018
    %v1021 = vtanh.pop %v1020
    %1023 = vrot.lane.b32.xlu0 %v1021, 64
    %v1024 = vpop.permute.xlu0 %1023
    %v1026 = vmul.f32 %v1005, %v1024
    %1028 = vrot.lane.b32.xlu0 %v1026, 32
    %v1029 = vpop.permute.xlu0 %1028
    %1031 = vst.msk [vmem:[#allocation2 + $0x8] sm:$0xc0] %vm592, %v1029
    %1032 = vst.msk [vmem:[#allocation3 - $0x6] sm:$0xc0] %vm592, %v1029
    %1034 = vrot.lane.b32.xlu0 %v1020, 96
    %v1035 = vpop.permute.xlu0 %1034
    %1037 = vst.msk [vmem:[#allocation5 - $0x6] sm:$0xc0] %vm592, %v1035
    %v1038 = vld [vmem:[#allocation2] sm:$0xff]
    %v1039 = vld [vmem:[#allocation2 + $0x8] sm:$0xff]
    %v1040 = vld [vmem:[%s4] sm:$0xff]
    %v1041 = vld [vmem:[%s4 + $0x8] sm:$0xff]
    %v1042 = vld [vmem:[%s4 + $0x10] sm:$0xff]
    %v1043 = vld [vmem:[%s4 + $0x18] sm:$0xff]
    %v1044 = vld [vmem:[%s5] sm:$0x1]
    %v1046 = vlaneseq
    %v1047 = vshrl.u32 %v1046, 7
    %v1048 = vsub.s32 0, %v1047
    %v1049 = vrot.slane %v1044, %v1048
    %v1052 = vsel %vm156, %v1038, 0
    %v1055 = vsel %vm156, %v1039, 0
    %1057 = vmatprep.subr.mxu0 0.0
    %1058 = vmatpush1.msra.mxu0 %v1040
    %1059 = vmatprep.subr.mxu0 0.0
    %1060 = vmatpush1.msra.mxu0 %v1041
    %1061 = vmatprep.subr.mxu0 0.0
    %1062 = vmatpush1.msra.mxu0 %v1042
    %1063 = vmatprep.subr.mxu0 0.0
    %1064 = vmatpush1.msra.mxu0 %v1043
    %1065 = vmatprep.subr.mxu0 0.0
    %1066 = vmatpush1.msra.mxu0 0.0
    %1067 = vmatprep.subr.mxu0 0.0
    %1068 = vmatpush1.msra.mxu0 0.0
    %1069 = vmatprep.subr.mxu0 0.0
    %1070 = vmatpush1.msra.mxu0 0.0
    %1071 = vmatprep.subr.mxu0 0.0
    %1072 = vmatpush1.msra.mxu0 0.0
    %1073 = vmatprep.subr.mxu0 0.0
    %1074 = vmatpush1.msra.mxu0 0.0
    %1075 = vmatprep.subr.mxu0 0.0
    %1076 = vmatpush1.msra.mxu0 0.0
    %1077 = vmatprep.subr.mxu0 0.0
    %1078 = vmatpush1.msra.mxu0 0.0
    %1079 = vmatprep.subr.mxu0 0.0
    %1080 = vmatpush1.msra.mxu0 0.0
    %1081 = vmatprep.subr.mxu0 0.0
    %1082 = vmatpush1.msra.mxu0 0.0
    %1083 = vmatprep.subr.mxu0 0.0
    %1084 = vmatpush1.msra.mxu0 0.0
    %1085 = vmatprep.subr.mxu0 0.0
    %1086 = vmatpush1.msra.mxu0 0.0
    %1087 = vmatprep.subr.mxu0 0.0
    %1088 = vmatpush1.msra.mxu0 0.0
    %1089 = vmatprep.subr.mxu0 0.0
    %1090 = vmatpush1.msra.mxu0 0.0
    %1091 = vmatprep.subr.mxu0 0.0
    %1092 = vmatpush1.msra.mxu0 0.0
    %1093 = vmatprep.subr.mxu0 0.0
    %1094 = vmatpush1.msra.mxu0 0.0
    %1095 = vmatprep.subr.mxu0 0.0
    %1096 = vmatpush1.msra.mxu0 0.0
    %1097 = vmatprep.subr.mxu0 0.0
    %1098 = vmatpush1.msra.mxu0 0.0
    %1099 = vmatprep.subr.mxu0 0.0
    %1100 = vmatpush1.msra.mxu0 0.0
    %1101 = vmatprep.subr.mxu0 0.0
    %1102 = vmatpush1.msra.mxu0 0.0
    %1103 = vmatprep.subr.mxu0 0.0
    %1104 = vmatpush1.msra.mxu0 0.0
    %1105 = vmatprep.subr.mxu0 0.0
    %1106 = vmatpush1.msra.mxu0 0.0
    %1107 = vmatprep.subr.mxu0 0.0
    %1108 = vmatpush1.msra.mxu0 0.0
    %1109 = vmatprep.subr.mxu0 0.0
    %1110 = vmatpush1.msra.mxu0 0.0
    %1111 = vmatprep.subr.mxu0 0.0
    %1112 = vmatpush1.msra.mxu0 0.0
    %1113 = vmatprep.subr.mxu0 0.0
    %1114 = vmatpush1.msra.mxu0 0.0
    %1115 = vmatprep.subr.mxu0 0.0
    %1116 = vmatpush1.msra.mxu0 0.0
    %1117 = vmatprep.subr.mxu0 0.0
    %1118 = vmatpush1.msra.mxu0 0.0
    %1119 = vmatprep.subr.mxu0 0.0
    %1120 = vmatpush1.msra.mxu0 0.0
    %1121 = vmatprep.mubr.f32.mxu0 0.0
    %1122 = vmatmul.mubr.f32.gmra.mrb[0].mxu0 %v1052
    %v1123 = vpop.f32.mrb[0].mxu0
    %v1124 = vadd.f32 %v1049, %v1123
    %v1125 = vpop.f32.mrb[0].mxu0
    %1126 = vmatprep.mubr.f32.mxu0 0.0
    %1127 = vmatmul.mubr.f32.gmra.mrb[0].mxu0 %v1055
    %v1128 = vpop.f32.mrb[0].mxu0
    %v1129 = vadd.f32 %v1049, %v1128
    %v1130 = vpop.f32.mrb[0].mxu0
    %1131 = vdwg.mxu0
    %v1132 = vmax.f32 %v1124, 0.0
    %v1133 = vmax.f32 %v1129, 0.0
    %v1134 = vld [vmem:[%s6] sm:$0xff]
    %v1135 = vld [vmem:[%s6 + $0x8] sm:$0xff]
    %v1136 = vld [vmem:[%s6 + $0x10] sm:$0xff]
    %v1137 = vld [vmem:[%s6 + $0x18] sm:$0xff]
    %v1138 = vld [vmem:[%s6 + $0x20] sm:$0xff]
    %v1139 = vld [vmem:[%s6 + $0x28] sm:$0xff]
    %v1140 = vld [vmem:[%s6 + $0x30] sm:$0xff]
    %v1141 = vld [vmem:[%s6 + $0x38] sm:$0xff]
    %v1142 = vld [vmem:[%s7] sm:$0x1]
    %v1144 = vlaneseq
    %v1145 = vshrl.u32 %v1144, 7
    %v1146 = vsub.s32 0, %v1145
    %v1147 = vrot.slane %v1142, %v1146
    %vm1149 = vcmask 523264
    %v1151 = vsel %vm1149, %v1132, 0
    %v1154 = vsel %vm1149, %v1133, 0
    %1156 = vmatprep.subr.mxu0 0.0
    %1157 = vmatpush1.msra.mxu0 %v1134
    %1158 = vmatprep.subr.mxu0 0.0
    %1159 = vmatpush1.msra.mxu0 %v1135
    %1160 = vmatprep.subr.mxu0 0.0
    %1161 = vmatpush1.msra.mxu0 %v1136
    %1162 = vmatprep.subr.mxu0 0.0
    %1163 = vmatpush1.msra.mxu0 %v1137
    %1164 = vmatprep.subr.mxu0 0.0
    %1165 = vmatpush1.msra.mxu0 %v1138
    %1166 = vmatprep.subr.mxu0 0.0
    %1167 = vmatpush1.msra.mxu0 %v1139
    %1168 = vmatprep.subr.mxu0 0.0
    %1169 = vmatpush1.msra.mxu0 %v1140
    %1170 = vmatprep.subr.mxu0 0.0
    %1171 = vmatpush1.msra.mxu0 %v1141
    %1172 = vmatprep.subr.mxu0 0.0
    %1173 = vmatpush1.msra.mxu0 0.0
    %1174 = vmatprep.subr.mxu0 0.0
    %1175 = vmatpush1.msra.mxu0 0.0
    %1176 = vmatprep.subr.mxu0 0.0
    %1177 = vmatpush1.msra.mxu0 0.0
    %1178 = vmatprep.subr.mxu0 0.0
    %1179 = vmatpush1.msra.mxu0 0.0
    %1180 = vmatprep.subr.mxu0 0.0
    %1181 = vmatpush1.msra.mxu0 0.0
    %1182 = vmatprep.subr.mxu0 0.0
    %1183 = vmatpush1.msra.mxu0 0.0
    %1184 = vmatprep.subr.mxu0 0.0
    %1185 = vmatpush1.msra.mxu0 0.0
    %1186 = vmatprep.subr.mxu0 0.0
    %1187 = vmatpush1.msra.mxu0 0.0
    %1188 = vmatprep.subr.mxu0 0.0
    %1189 = vmatpush1.msra.mxu0 0.0
    %1190 = vmatprep.subr.mxu0 0.0
    %1191 = vmatpush1.msra.mxu0 0.0
    %1192 = vmatprep.subr.mxu0 0.0
    %1193 = vmatpush1.msra.mxu0 0.0
    %1194 = vmatprep.subr.mxu0 0.0
    %1195 = vmatpush1.msra.mxu0 0.0
    %1196 = vmatprep.subr.mxu0 0.0
    %1197 = vmatpush1.msra.mxu0 0.0
    %1198 = vmatprep.subr.mxu0 0.0
    %1199 = vmatpush1.msra.mxu0 0.0
    %1200 = vmatprep.subr.mxu0 0.0
    %1201 = vmatpush1.msra.mxu0 0.0
    %1202 = vmatprep.subr.mxu0 0.0
    %1203 = vmatpush1.msra.mxu0 0.0
    %1204 = vmatprep.subr.mxu0 0.0
    %1205 = vmatpush1.msra.mxu0 0.0
    %1206 = vmatprep.subr.mxu0 0.0
    %1207 = vmatpush1.msra.mxu0 0.0
    %1208 = vmatprep.subr.mxu0 0.0
    %1209 = vmatpush1.msra.mxu0 0.0
    %1210 = vmatprep.subr.mxu0 0.0
    %1211 = vmatpush1.msra.mxu0 0.0
    %1212 = vmatprep.subr.mxu0 0.0
    %1213 = vmatpush1.msra.mxu0 0.0
    %1214 = vmatprep.subr.mxu0 0.0
    %1215 = vmatpush1.msra.mxu0 0.0
    %1216 = vmatprep.subr.mxu0 0.0
    %1217 = vmatpush1.msra.mxu0 0.0
    %1218 = vmatprep.subr.mxu0 0.0
    %1219 = vmatpush1.msra.mxu0 0.0
    %1220 = vmatprep.mubr.f32.mxu0 0.0
    %1221 = vmatmul.mubr.f32.gmra.mrb[0].mxu0 %v1151
    %v1222 = vpop.f32.mrb[0].mxu0
    %v1223 = vadd.f32 %v1147, %v1222
    %v1224 = vpop.f32.mrb[0].mxu0
    %1225 = vmatprep.mubr.f32.mxu0 0.0
    %1226 = vmatmul.mubr.f32.gmra.mrb[0].mxu0 %v1154
    %v1227 = vpop.f32.mrb[0].mxu0
    %v1228 = vadd.f32 %v1147, %v1227
    %v1229 = vpop.f32.mrb[0].mxu0
    %1230 = vdwg.mxu0
    %vm1231 = vcmask 15360
    %1232 = vst.msk [vmem:[%s8] sm:$0xff] %vm1231, %v1223
    %1233 = vst.msk [vmem:[%s8 + $0x8] sm:$0xff] %vm1231, %v1228
    // Predicated region
    $region34: #{cnn_lstm_actor_forward.7} parent=1 // pred_check
      _
    $region35: #{cnn_lstm_actor_forward.7} parent=1 // pred_check_branch
      %1235 = sbr.rel (0) target = $region37
    $region36: #{cnn_lstm_actor_forward.7} parent=1 // pred_region
      _
    $region37: #{cnn_lstm_actor_forward.7} parent=1 // pred_fallthru
      _
    // Predicated region
    $region38: #{cnn_lstm_actor_forward.7} parent=1 // pred_check
      _
    $region39: #{cnn_lstm_actor_forward.7} parent=1 // pred_check_branch
      %1237 = sbr.rel (0) target = $region41
    $region40: #{cnn_lstm_actor_forward.7} parent=1 // pred_region
      %s1239 = ssub.s32 32, 32
      %1240 = vsyncadd [#allocation4], %s1239
      %s1242 = sshll.u32 [#allocation3], 4
      %s1243 = int_to_ptr.vmem [resolvable:$true] %s1242
      %1245 = dma.vmem_to_hbm [thread:$0]  %s1243, 32, %s9, [#allocation4]
    $region41: #{cnn_lstm_actor_forward.7} parent=1 // pred_fallthru
      _
    // Predicated region
    $region42: #{cnn_lstm_actor_forward.7} parent=1 // pred_check
      _
    $region43: #{cnn_lstm_actor_forward.7} parent=1 // pred_check_branch
      %1247 = sbr.rel (0) target = $region45
    $region44: #{cnn_lstm_actor_forward.7} parent=1 // pred_region
      %s1249 = ssub.s32 32, 32
      %1250 = vsyncadd [#allocation6], %s1249
      %s1252 = sshll.u32 [#allocation5], 4
      %s1253 = int_to_ptr.vmem [resolvable:$true] %s1252
      %1255 = dma.vmem_to_hbm [thread:$0]  %s1253, 32, %s10, [#allocation6]
    $region45: #{cnn_lstm_actor_forward.7} parent=1 // pred_fallthru
      _
    // Predicated region
    $region46: #{cnn_lstm_actor_forward.7} parent=1 // pred_check
      _
    $region47: #{cnn_lstm_actor_forward.7} parent=1 // pred_check_branch
      %1257 = sbr.rel (0) target = $region49
    $region48: #{cnn_lstm_actor_forward.7} parent=1 // pred_region
      _
    $region49: #{cnn_lstm_actor_forward.7} parent=1 // pred_fallthru
      _
    // Predicated region
    $region50: #{cnn_lstm_actor_forward.7} parent=1 // pred_check
      _
    $region51: #{cnn_lstm_actor_forward.7} parent=1 // pred_check_branch
      %1259 = sbr.rel (0) target = $region53
    $region52: #{cnn_lstm_actor_forward.7} parent=1 // pred_region
      %1260 = dma.done [#allocation4], 32
    $region53: #{cnn_lstm_actor_forward.7} parent=1 // pred_fallthru
      _
    // Predicated region
    $region54: #{cnn_lstm_actor_forward.7} parent=1 // pred_check
      _
    $region55: #{cnn_lstm_actor_forward.7} parent=1 // pred_check_branch
      %1262 = sbr.rel (0) target = $region57
    $region56: #{cnn_lstm_actor_forward.7} parent=1 // pred_region
      %1263 = dma.done [#allocation6], 32
    $region57: #{cnn_lstm_actor_forward.7} parent=1 // pred_fallthru
      _
    %1264 = vsyncpa [#allocation4], 1
    %1265 = vsyncpa [#allocation6], 1

</llo_original>
